<compile_context>
chip_gen: v6e
topology: v6e:2x2x1
jax: 0.10.0
libtpu: 0.0.40
codegen_flags: <defaults>
</compile_context>

<pallas_src>
import random

import jax
import jax.numpy as jnp
from jax import lax
from jax.experimental import pallas as pl
from jax.experimental.pallas import tpu as pltpu

HID = 32           # hidden size
EMB = 32           # embedding size
SRC_VOCAB = 16
TRG_VOCAB = 16     # decoder.output_dim
VPAD = 128         # lane-dense padded vocab for the output projection
GATE = 4 * HID     # 128


# ----------------------------------------------------------------------------
# Fused Pallas kernel: encoder recurrence + full decoder loop + output projection
# ----------------------------------------------------------------------------
def _seq2seq_kernel(tf_ref,          # SMEM (TL,) int32 teacher-forcing mask
                    src_x_ref,       # VMEM (T,  B, 4H)  emb[src]@W_ih + b (encoder)
                    trg_x_ref,       # VMEM (TL, B, 4H)  emb[trg]@W_ih + b (decoder, forced)
                    enc_whh_ref,     # VMEM (H, 4H)
                    dec_w_ref,       # VMEM (H, 4H+VPAD)  [W_hh | W_out_pad]
                    bout_ref,        # VMEM (1, VPAD)     output bias (pad lanes -1e9)
                    gen_gate_ref,    # VMEM (VPAD, 4H)    dec_embed@W_ih + b, padded rows 0
                    logits_ref):     # VMEM (TL, B, VPAD) output slab
    T, B, G = src_x_ref.shape
    TL = trg_x_ref.shape[0]
    H = HID
    VP = logits_ref.shape[2]

    # Hoisted weight loads / broadcasts (JAX does not CSE broadcast_in_dim in loops).
    enc_whh = enc_whh_ref[...]                                     # (H, 4H)
    dec_w = dec_w_ref[...]                                         # (H, 4H+VP)
    bout = jnp.broadcast_to(bout_ref[...], (B, VP))                # (B, VP)
    gen_gate = gen_gate_ref[...]                                   # (VP, 4H)
    col = lax.broadcasted_iota(jnp.int32, (B, VP), 1)

    def cell_update(gates, c):
        # Full-vreg activations: one sigmoid + one tanh on the whole (B,4H) tile.
        sig = jax.nn.sigmoid(gates)
        th = jnp.tanh(gates)
        i = sig[:, 0:H]
        f = sig[:, H:2 * H]
        g = th[:, 2 * H:3 * H]
        o = sig[:, 3 * H:4 * H]
        c_new = f * c + i * g
        h_new = o * jnp.tanh(c_new)
        return h_new, c_new

    # ---- encoder recurrence (enc_outputs are never consumed -> not computed) ----
    # x@W_ih + b precomputed off the chain; per step only h @ W_hh remains.
    h = jnp.zeros((B, H), jnp.float32)
    c = jnp.zeros((B, H), jnp.float32)
    for t in range(T):
        gates = src_x_ref[t] + jnp.dot(h, enc_whh, preferred_element_type=jnp.float32)
        h, c = cell_update(gates, c)
    cell = c                                   # encoder cell, reused every decoder step

    # ---- decoder loop (encoder cell reused; decoder c_new discarded, as in reference) ----
    # hw = h @ [W_hh | W_out]: [:, :G] feeds the next step's gates, [:, G:] are the logits.
    logits_ref[0] = jnp.zeros((B, VP), jnp.float32)          # outputs[0] stays zero
    hw = jnp.dot(h, dec_w, preferred_element_type=jnp.float32)   # from encoder hidden
    x_gate = trg_x_ref[0]                                         # input = trg[0]
    for i in range(1, TL):
        gates = x_gate + hw[:, 0:G]
        h_new, _c_drop = cell_update(gates, cell)
        hw = jnp.dot(h_new, dec_w, preferred_element_type=jnp.float32)   # (B, G+VP)
        logits = hw[:, G:G + VP] + bout                                   # (B, VP)
        logits_ref[i] = logits

        if i + 1 < TL:                         # last step's next-input is never used
            trg_next = trg_x_ref[i]            # cheap vld; keeps cond branches pure

            def _generated(logits=logits):
                # argmax as first-occurrence one-hot (pad lanes carry -1e9 -> never win),
                # then one-hot @ (dec_embed@W_ih + b) replaces a dynamic gather.
                mx = jnp.max(logits, axis=1, keepdims=True)
                first = jnp.min(jnp.where(logits == mx, col, VP), axis=1, keepdims=True)
                onehot = (col == first).astype(jnp.float32)                 # (B, VP)
                return jnp.dot(onehot, gen_gate, preferred_element_type=jnp.float32)

            # Teacher-forced steps skip the two XLU reductions + one-hot matmul entirely.
            x_gate = lax.cond(tf_ref[i] != 0,
                              lambda trg_next=trg_next: trg_next,
                              _generated)


_VMEM = pl.BlockSpec(memory_space=pltpu.MemorySpace.VMEM)
_SMEM = pl.BlockSpec(memory_space=pltpu.MemorySpace.SMEM)


# ----------------------------------------------------------------------------
# One-time parameter preparation (fold embeddings with W_ih + bias, fuse weights, pad)
# ----------------------------------------------------------------------------
def prepare_params(params):
    enc_tok_gate = params["enc_embed"] @ params["enc_wih"] + params["enc_b"]   # (SV, 4H)
    dec_tok_gate = params["dec_embed"] @ params["dec_wih"] + params["dec_b"]   # (TV, 4H)

    # Lane-dense output projection fused with W_hh: (H, 4H+VPAD) = (32, 256).
    wout_pad = jnp.zeros((HID, VPAD), jnp.float32).at[:, :TRG_VOCAB].set(params["wout"])
    dec_w_comb = jnp.concatenate([params["dec_whh"], wout_pad], axis=1)

    # Pad lanes get a -1e9 bias so the in-kernel argmax never selects them.
    bout_pad = jnp.full((1, VPAD), -1e9, jnp.float32).at[:, :TRG_VOCAB].set(params["bout"])

    # Generated-token gate table: onehot @ gen_gate == emb[top1]@W_ih + b (onehot has one 1).
    gen_gate = jnp.zeros((VPAD, GATE), jnp.float32).at[:TRG_VOCAB].set(dec_tok_gate)

    return {
        "enc_tok_gate": enc_tok_gate,
        "dec_tok_gate": dec_tok_gate,
        "enc_whh": params["enc_whh"],
        "dec_w_comb": dec_w_comb,
        "bout_pad": bout_pad,
        "gen_gate": gen_gate,
    }


# ----------------------------------------------------------------------------
# Per-call wrapper (jitted): two tiny gathers + the single fused pallas_call
# ----------------------------------------------------------------------------
@jax.jit
def _seq2seq_apply(src, trg, tf_mask, prep):
    T, batch = src.shape
    TL = trg.shape[0]

    # Pad batch to a full 8-row sublane tile (padded rows use token 0, sliced off below).
    b_pad = ((batch + 7) // 8) * 8
    if b_pad != batch:
        src = jnp.concatenate([src, jnp.zeros((T, b_pad - batch), src.dtype)], axis=1)
        trg = jnp.concatenate([trg, jnp.zeros((TL, b_pad - batch), trg.dtype)], axis=1)

    # Precomputed x-side gate contributions: x@W_ih + b via a single gather each.
    src_x = jnp.take(prep["enc_tok_gate"], src, axis=0)   # (T,  B_pad, 4H)
    trg_x = jnp.take(prep["dec_tok_gate"], trg, axis=0)   # (TL, B_pad, 4H)

    logits = pl.pallas_call(
        _seq2seq_kernel,
        out_shape=jax.ShapeDtypeStruct((TL, b_pad, VPAD), jnp.float32),
        in_specs=[_SMEM] + [_VMEM] * 6,
        out_specs=_VMEM,
    )(tf_mask, src_x, trg_x, prep["enc_whh"], prep["dec_w_comb"],
      prep["bout_pad"], prep["gen_gate"])

    # Slice away batch/vocab padding.
    return logits[:, :batch, :TRG_VOCAB]


def seq2seq_forward(src, trg, prep, teacher_forcing_ratio=0.5, seed=0):
    """src/trg: int32 (len, batch); prep: output of prepare_params(params)."""
    # Deterministic host-side stand-in for torch's per-iteration random.random();
    # same draw order as the reference loop (one draw per step i = 1..trg_len-1).
    random.seed(seed)
    trg_len = trg.shape[0]
    tf_list = [0] + [1 if random.random() < teacher_forcing_ratio else 0
                     for _ in range(1, trg_len)]
    tf_mask = jnp.asarray(tf_list, dtype=jnp.int32)
    return _seq2seq_apply(src, trg, tf_mask, prep)


# ----------------------------------------------------------------------------
# Deterministic parameter init
# ----------------------------------------------------------------------------
def init_params(key):
    ks = jax.random.split(key, 10)
    s = 0.1
    return {
        "enc_embed": jax.random.normal(ks[0], (SRC_VOCAB, EMB), jnp.float32) * s,
        "enc_wih":   jax.random.normal(ks[1], (EMB, 4 * HID), jnp.float32) * s,
        "enc_whh":   jax.random.normal(ks[2], (HID, 4 * HID), jnp.float32) * s,
        "enc_b":     jax.random.normal(ks[3], (1, 4 * HID), jnp.float32) * s,
        "dec_embed": jax.random.normal(ks[4], (TRG_VOCAB, EMB), jnp.float32) * s,
        "dec_wih":   jax.random.normal(ks[5], (EMB, 4 * HID), jnp.float32) * s,
        "dec_whh":   jax.random.normal(ks[6], (HID, 4 * HID), jnp.float32) * s,
        "dec_b":     jax.random.normal(ks[7], (1, 4 * HID), jnp.float32) * s,
        "wout":      jax.random.normal(ks[8], (HID, TRG_VOCAB), jnp.float32) * s,
        "bout":      jax.random.normal(ks[9], (1, TRG_VOCAB), jnp.float32) * s,
    }


if __name__ == "__main__":
    key = jax.random.PRNGKey(0)
    k_src, k_trg, k_params = jax.random.split(key, 3)

    src_len, trg_len, batch = 8, 8, 2
    src = jax.random.randint(k_src, (src_len, batch), 0, SRC_VOCAB, dtype=jnp.int32)
    trg = jax.random.randint(k_trg, (trg_len, batch), 0, TRG_VOCAB, dtype=jnp.int32)
    params = init_params(k_params)
    prep = prepare_params(params)          # one-time weight prep (cached across calls)

    outputs = seq2seq_forward(src, trg, prep, teacher_forcing_ratio=0.5, seed=0)
    outputs = jax.block_until_ready(outputs)
    assert outputs.shape == (trg_len, batch, TRG_VOCAB)
    assert bool(jnp.all(outputs[0] == 0.0))   # step 0 stays zero, like the reference
    print("KERNEL_OK")
</pallas_src>

<mosaic_0001>
module attributes {stable_mosaic.version = 11 : i64} {
  func.func @_seq2seq_kernel(%arg0: memref<8xi32, #tpu.memory_space<smem>>, %arg1: memref<8x8x128xf32, #tpu.memory_space<vmem>>, %arg2: memref<8x8x128xf32, #tpu.memory_space<vmem>>, %arg3: memref<32x128xf32, #tpu.memory_space<vmem>>, %arg4: memref<32x256xf32, #tpu.memory_space<vmem>>, %arg5: memref<1x128xf32, #tpu.memory_space<vmem>>, %arg6: memref<128x128xf32, #tpu.memory_space<vmem>>, %arg7: memref<8x8x128xf32, #tpu.memory_space<vmem>>) attributes {dimension_semantics = [], scalar_prefetch = 0 : i64, scratch_operands = 0 : i64, tpu.core_type = #tpu.core_type<tc>} {
    %c0 = arith.constant 0 : index
    %c0_0 = arith.constant 0 : index
    %0 = vector.load %arg3[%c0, %c0_0] : memref<32x128xf32, #tpu.memory_space<vmem>>, vector<32x128xf32>
    %c0_1 = arith.constant 0 : index
    %c0_2 = arith.constant 0 : index
    %1 = vector.load %arg4[%c0_1, %c0_2] : memref<32x256xf32, #tpu.memory_space<vmem>>, vector<32x256xf32>
    %c0_3 = arith.constant 0 : index
    %c0_4 = arith.constant 0 : index
    %2 = vector.load %arg5[%c0_3, %c0_4] : memref<1x128xf32, #tpu.memory_space<vmem>>, vector<1x128xf32>
    %3 = vector.shape_cast %2 : vector<1x128xf32> to vector<1x128xf32>
    %4 = vector.broadcast %3 : vector<1x128xf32> to vector<8x128xf32>
    %c0_5 = arith.constant 0 : index
    %c0_6 = arith.constant 0 : index
    %5 = vector.load %arg6[%c0_5, %c0_6] : memref<128x128xf32, #tpu.memory_space<vmem>>, vector<128x128xf32>
    %6 = tpu.iota {dimensions = array<i32: 1>} : vector<8x128xi32>
    %cst = arith.constant 0.000000e+00 : f32
    %7 = vector.broadcast %cst : f32 to vector<8x32xf32>
    %cst_7 = arith.constant 0.000000e+00 : f32
    %8 = vector.broadcast %cst_7 : f32 to vector<8x32xf32>
    %c0_8 = arith.constant 0 : index
    %c0_9 = arith.constant 0 : index
    %c0_10 = arith.constant 0 : index
    %9 = vector.load %arg1[%c0_8, %c0_9, %c0_10] : memref<8x8x128xf32, #tpu.memory_space<vmem>>, vector<1x8x128xf32>
    %10 = vector.shape_cast %9 : vector<1x8x128xf32> to vector<8x128xf32>
    %cst_11 = arith.constant dense<0.000000e+00> : vector<8x128xf32>
    %11 = tpu.matmul %7, %0, %cst_11 {dimension_numbers = #tpu.dot_dimension_numbers<[1], [0], [0], [1], [0, 0, 1, 1], [], []>} : vector<8x32xf32>, vector<32x128xf32>, vector<8x128xf32> -> vector<8x128xf32>
    %12 = arith.addf %10, %11 : vector<8x128xf32>
    %13 = arith.negf %12 : vector<8x128xf32>
    %14 = math.exp %13 : vector<8x128xf32>
    %cst_12 = arith.constant 1.000000e+00 : f32
    %15 = vector.broadcast %cst_12 : f32 to vector<8x128xf32>
    %16 = arith.addf %15, %14 : vector<8x128xf32>
    %17 = arith.divf %15, %16 : vector<8x128xf32>
    %18 = math.tanh %12 : vector<8x128xf32>
    %19 = vector.extract_strided_slice %17 {offsets = [0, 0], sizes = [8, 32], strides = [1, 1]} : vector<8x128xf32> to vector<8x32xf32>
    %20 = vector.extract_strided_slice %17 {offsets = [0, 32], sizes = [8, 32], strides = [1, 1]} : vector<8x128xf32> to vector<8x32xf32>
    %21 = vector.extract_strided_slice %18 {offsets = [0, 64], sizes = [8, 32], strides = [1, 1]} : vector<8x128xf32> to vector<8x32xf32>
    %22 = vector.extract_strided_slice %17 {offsets = [0, 96], sizes = [8, 32], strides = [1, 1]} : vector<8x128xf32> to vector<8x32xf32>
    %23 = arith.mulf %20, %8 : vector<8x32xf32>
    %24 = arith.mulf %19, %21 : vector<8x32xf32>
    %25 = arith.addf %23, %24 : vector<8x32xf32>
    %26 = math.tanh %25 : vector<8x32xf32>
    %27 = arith.mulf %22, %26 : vector<8x32xf32>
    %c1 = arith.constant 1 : index
    %c0_13 = arith.constant 0 : index
    %c0_14 = arith.constant 0 : index
    %28 = vector.load %arg1[%c1, %c0_13, %c0_14] : memref<8x8x128xf32, #tpu.memory_space<vmem>>, vector<1x8x128xf32>
    %29 = vector.shape_cast %28 : vector<1x8x128xf32> to vector<8x128xf32>
    %cst_15 = arith.constant dense<0.000000e+00> : vector<8x128xf32>
    %30 = tpu.matmul %27, %0, %cst_15 {dimension_numbers = #tpu.dot_dimension_numbers<[1], [0], [0], [1], [0, 0, 1, 1], [], []>} : vector<8x32xf32>, vector<32x128xf32>, vector<8x128xf32> -> vector<8x128xf32>
    %31 = arith.addf %29, %30 : vector<8x128xf32>
    %32 = arith.negf %31 : vector<8x128xf32>
    %33 = math.exp %32 : vector<8x128xf32>
    %cst_16 = arith.constant 1.000000e+00 : f32
    %34 = vector.broadcast %cst_16 : f32 to vector<8x128xf32>
    %35 = arith.addf %34, %33 : vector<8x128xf32>
    %36 = arith.divf %34, %35 : vector<8x128xf32>
    %37 = math.tanh %31 : vector<8x128xf32>
    %38 = vector.extract_strided_slice %36 {offsets = [0, 0], sizes = [8, 32], strides = [1, 1]} : vector<8x128xf32> to vector<8x32xf32>
    %39 = vector.extract_strided_slice %36 {offsets = [0, 32], sizes = [8, 32], strides = [1, 1]} : vector<8x128xf32> to vector<8x32xf32>
    %40 = vector.extract_strided_slice %37 {offsets = [0, 64], sizes = [8, 32], strides = [1, 1]} : vector<8x128xf32> to vector<8x32xf32>
    %41 = vector.extract_strided_slice %36 {offsets = [0, 96], sizes = [8, 32], strides = [1, 1]} : vector<8x128xf32> to vector<8x32xf32>
    %42 = arith.mulf %39, %25 : vector<8x32xf32>
    %43 = arith.mulf %38, %40 : vector<8x32xf32>
    %44 = arith.addf %42, %43 : vector<8x32xf32>
    %45 = math.tanh %44 : vector<8x32xf32>
    %46 = arith.mulf %41, %45 : vector<8x32xf32>
    %c2 = arith.constant 2 : index
    %c0_17 = arith.constant 0 : index
    %c0_18 = arith.constant 0 : index
    %47 = vector.load %arg1[%c2, %c0_17, %c0_18] : memref<8x8x128xf32, #tpu.memory_space<vmem>>, vector<1x8x128xf32>
    %48 = vector.shape_cast %47 : vector<1x8x128xf32> to vector<8x128xf32>
    %cst_19 = arith.constant dense<0.000000e+00> : vector<8x128xf32>
    %49 = tpu.matmul %46, %0, %cst_19 {dimension_numbers = #tpu.dot_dimension_numbers<[1], [0], [0], [1], [0, 0, 1, 1], [], []>} : vector<8x32xf32>, vector<32x128xf32>, vector<8x128xf32> -> vector<8x128xf32>
    %50 = arith.addf %48, %49 : vector<8x128xf32>
    %51 = arith.negf %50 : vector<8x128xf32>
    %52 = math.exp %51 : vector<8x128xf32>
    %cst_20 = arith.constant 1.000000e+00 : f32
    %53 = vector.broadcast %cst_20 : f32 to vector<8x128xf32>
    %54 = arith.addf %53, %52 : vector<8x128xf32>
    %55 = arith.divf %53, %54 : vector<8x128xf32>
    %56 = math.tanh %50 : vector<8x128xf32>
    %57 = vector.extract_strided_slice %55 {offsets = [0, 0], sizes = [8, 32], strides = [1, 1]} : vector<8x128xf32> to vector<8x32xf32>
    %58 = vector.extract_strided_slice %55 {offsets = [0, 32], sizes = [8, 32], strides = [1, 1]} : vector<8x128xf32> to vector<8x32xf32>
    %59 = vector.extract_strided_slice %56 {offsets = [0, 64], sizes = [8, 32], strides = [1, 1]} : vector<8x128xf32> to vector<8x32xf32>
    %60 = vector.extract_strided_slice %55 {offsets = [0, 96], sizes = [8, 32], strides = [1, 1]} : vector<8x128xf32> to vector<8x32xf32>
    %61 = arith.mulf %58, %44 : vector<8x32xf32>
    %62 = arith.mulf %57, %59 : vector<8x32xf32>
    %63 = arith.addf %61, %62 : vector<8x32xf32>
    %64 = math.tanh %63 : vector<8x32xf32>
    %65 = arith.mulf %60, %64 : vector<8x32xf32>
    %c3 = arith.constant 3 : index
    %c0_21 = arith.constant 0 : index
    %c0_22 = arith.constant 0 : index
    %66 = vector.load %arg1[%c3, %c0_21, %c0_22] : memref<8x8x128xf32, #tpu.memory_space<vmem>>, vector<1x8x128xf32>
    %67 = vector.shape_cast %66 : vector<1x8x128xf32> to vector<8x128xf32>
    %cst_23 = arith.constant dense<0.000000e+00> : vector<8x128xf32>
    %68 = tpu.matmul %65, %0, %cst_23 {dimension_numbers = #tpu.dot_dimension_numbers<[1], [0], [0], [1], [0, 0, 1, 1], [], []>} : vector<8x32xf32>, vector<32x128xf32>, vector<8x128xf32> -> vector<8x128xf32>
    %69 = arith.addf %67, %68 : vector<8x128xf32>
    %70 = arith.negf %69 : vector<8x128xf32>
    %71 = math.exp %70 : vector<8x128xf32>
    %cst_24 = arith.constant 1.000000e+00 : f32
    %72 = vector.broadcast %cst_24 : f32 to vector<8x128xf32>
    %73 = arith.addf %72, %71 : vector<8x128xf32>
    %74 = arith.divf %72, %73 : vector<8x128xf32>
    %75 = math.tanh %69 : vector<8x128xf32>
    %76 = vector.extract_strided_slice %74 {offsets = [0, 0], sizes = [8, 32], strides = [1, 1]} : vector<8x128xf32> to vector<8x32xf32>
    %77 = vector.extract_strided_slice %74 {offsets = [0, 32], sizes = [8, 32], strides = [1, 1]} : vector<8x128xf32> to vector<8x32xf32>
    %78 = vector.extract_strided_slice %75 {offsets = [0, 64], sizes = [8, 32], strides = [1, 1]} : vector<8x128xf32> to vector<8x32xf32>
    %79 = vector.extract_strided_slice %74 {offsets = [0, 96], sizes = [8, 32], strides = [1, 1]} : vector<8x128xf32> to vector<8x32xf32>
    %80 = arith.mulf %77, %63 : vector<8x32xf32>
    %81 = arith.mulf %76, %78 : vector<8x32xf32>
    %82 = arith.addf %80, %81 : vector<8x32xf32>
    %83 = math.tanh %82 : vector<8x32xf32>
    %84 = arith.mulf %79, %83 : vector<8x32xf32>
    %c4 = arith.constant 4 : index
    %c0_25 = arith.constant 0 : index
    %c0_26 = arith.constant 0 : index
    %85 = vector.load %arg1[%c4, %c0_25, %c0_26] : memref<8x8x128xf32, #tpu.memory_space<vmem>>, vector<1x8x128xf32>
    %86 = vector.shape_cast %85 : vector<1x8x128xf32> to vector<8x128xf32>
    %cst_27 = arith.constant dense<0.000000e+00> : vector<8x128xf32>
    %87 = tpu.matmul %84, %0, %cst_27 {dimension_numbers = #tpu.dot_dimension_numbers<[1], [0], [0], [1], [0, 0, 1, 1], [], []>} : vector<8x32xf32>, vector<32x128xf32>, vector<8x128xf32> -> vector<8x128xf32>
    %88 = arith.addf %86, %87 : vector<8x128xf32>
    %89 = arith.negf %88 : vector<8x128xf32>
    %90 = math.exp %89 : vector<8x128xf32>
    %cst_28 = arith.constant 1.000000e+00 : f32
    %91 = vector.broadcast %cst_28 : f32 to vector<8x128xf32>
    %92 = arith.addf %91, %90 : vector<8x128xf32>
    %93 = arith.divf %91, %92 : vector<8x128xf32>
    %94 = math.tanh %88 : vector<8x128xf32>
    %95 = vector.extract_strided_slice %93 {offsets = [0, 0], sizes = [8, 32], strides = [1, 1]} : vector<8x128xf32> to vector<8x32xf32>
    %96 = vector.extract_strided_slice %93 {offsets = [0, 32], sizes = [8, 32], strides = [1, 1]} : vector<8x128xf32> to vector<8x32xf32>
    %97 = vector.extract_strided_slice %94 {offsets = [0, 64], sizes = [8, 32], strides = [1, 1]} : vector<8x128xf32> to vector<8x32xf32>
    %98 = vector.extract_strided_slice %93 {offsets = [0, 96], sizes = [8, 32], strides = [1, 1]} : vector<8x128xf32> to vector<8x32xf32>
    %99 = arith.mulf %96, %82 : vector<8x32xf32>
    %100 = arith.mulf %95, %97 : vector<8x32xf32>
    %101 = arith.addf %99, %100 : vector<8x32xf32>
    %102 = math.tanh %101 : vector<8x32xf32>
    %103 = arith.mulf %98, %102 : vector<8x32xf32>
    %c5 = arith.constant 5 : index
    %c0_29 = arith.constant 0 : index
    %c0_30 = arith.constant 0 : index
    %104 = vector.load %arg1[%c5, %c0_29, %c0_30] : memref<8x8x128xf32, #tpu.memory_space<vmem>>, vector<1x8x128xf32>
    %105 = vector.shape_cast %104 : vector<1x8x128xf32> to vector<8x128xf32>
    %cst_31 = arith.constant dense<0.000000e+00> : vector<8x128xf32>
    %106 = tpu.matmul %103, %0, %cst_31 {dimension_numbers = #tpu.dot_dimension_numbers<[1], [0], [0], [1], [0, 0, 1, 1], [], []>} : vector<8x32xf32>, vector<32x128xf32>, vector<8x128xf32> -> vector<8x128xf32>
    %107 = arith.addf %105, %106 : vector<8x128xf32>
    %108 = arith.negf %107 : vector<8x128xf32>
    %109 = math.exp %108 : vector<8x128xf32>
    %cst_32 = arith.constant 1.000000e+00 : f32
    %110 = vector.broadcast %cst_32 : f32 to vector<8x128xf32>
    %111 = arith.addf %110, %109 : vector<8x128xf32>
    %112 = arith.divf %110, %111 : vector<8x128xf32>
    %113 = math.tanh %107 : vector<8x128xf32>
    %114 = vector.extract_strided_slice %112 {offsets = [0, 0], sizes = [8, 32], strides = [1, 1]} : vector<8x128xf32> to vector<8x32xf32>
    %115 = vector.extract_strided_slice %112 {offsets = [0, 32], sizes = [8, 32], strides = [1, 1]} : vector<8x128xf32> to vector<8x32xf32>
    %116 = vector.extract_strided_slice %113 {offsets = [0, 64], sizes = [8, 32], strides = [1, 1]} : vector<8x128xf32> to vector<8x32xf32>
    %117 = vector.extract_strided_slice %112 {offsets = [0, 96], sizes = [8, 32], strides = [1, 1]} : vector<8x128xf32> to vector<8x32xf32>
    %118 = arith.mulf %115, %101 : vector<8x32xf32>
    %119 = arith.mulf %114, %116 : vector<8x32xf32>
    %120 = arith.addf %118, %119 : vector<8x32xf32>
    %121 = math.tanh %120 : vector<8x32xf32>
    %122 = arith.mulf %117, %121 : vector<8x32xf32>
    %c6 = arith.constant 6 : index
    %c0_33 = arith.constant 0 : index
    %c0_34 = arith.constant 0 : index
    %123 = vector.load %arg1[%c6, %c0_33, %c0_34] : memref<8x8x128xf32, #tpu.memory_space<vmem>>, vector<1x8x128xf32>
    %124 = vector.shape_cast %123 : vector<1x8x128xf32> to vector<8x128xf32>
    %cst_35 = arith.constant dense<0.000000e+00> : vector<8x128xf32>
    %125 = tpu.matmul %122, %0, %cst_35 {dimension_numbers = #tpu.dot_dimension_numbers<[1], [0], [0], [1], [0, 0, 1, 1], [], []>} : vector<8x32xf32>, vector<32x128xf32>, vector<8x128xf32> -> vector<8x128xf32>
    %126 = arith.addf %124, %125 : vector<8x128xf32>
    %127 = arith.negf %126 : vector<8x128xf32>
    %128 = math.exp %127 : vector<8x128xf32>
    %cst_36 = arith.constant 1.000000e+00 : f32
    %129 = vector.broadcast %cst_36 : f32 to vector<8x128xf32>
    %130 = arith.addf %129, %128 : vector<8x128xf32>
    %131 = arith.divf %129, %130 : vector<8x128xf32>
    %132 = math.tanh %126 : vector<8x128xf32>
    %133 = vector.extract_strided_slice %131 {offsets = [0, 0], sizes = [8, 32], strides = [1, 1]} : vector<8x128xf32> to vector<8x32xf32>
    %134 = vector.extract_strided_slice %131 {offsets = [0, 32], sizes = [8, 32], strides = [1, 1]} : vector<8x128xf32> to vector<8x32xf32>
    %135 = vector.extract_strided_slice %132 {offsets = [0, 64], sizes = [8, 32], strides = [1, 1]} : vector<8x128xf32> to vector<8x32xf32>
    %136 = vector.extract_strided_slice %131 {offsets = [0, 96], sizes = [8, 32], strides = [1, 1]} : vector<8x128xf32> to vector<8x32xf32>
    %137 = arith.mulf %134, %120 : vector<8x32xf32>
    %138 = arith.mulf %133, %135 : vector<8x32xf32>
    %139 = arith.addf %137, %138 : vector<8x32xf32>
    %140 = math.tanh %139 : vector<8x32xf32>
    %141 = arith.mulf %136, %140 : vector<8x32xf32>
    %c7 = arith.constant 7 : index
    %c0_37 = arith.constant 0 : index
    %c0_38 = arith.constant 0 : index
    %142 = vector.load %arg1[%c7, %c0_37, %c0_38] : memref<8x8x128xf32, #tpu.memory_space<vmem>>, vector<1x8x128xf32>
    %143 = vector.shape_cast %142 : vector<1x8x128xf32> to vector<8x128xf32>
    %cst_39 = arith.constant dense<0.000000e+00> : vector<8x128xf32>
    %144 = tpu.matmul %141, %0, %cst_39 {dimension_numbers = #tpu.dot_dimension_numbers<[1], [0], [0], [1], [0, 0, 1, 1], [], []>} : vector<8x32xf32>, vector<32x128xf32>, vector<8x128xf32> -> vector<8x128xf32>
    %145 = arith.addf %143, %144 : vector<8x128xf32>
    %146 = arith.negf %145 : vector<8x128xf32>
    %147 = math.exp %146 : vector<8x128xf32>
    %cst_40 = arith.constant 1.000000e+00 : f32
    %148 = vector.broadcast %cst_40 : f32 to vector<8x128xf32>
    %149 = arith.addf %148, %147 : vector<8x128xf32>
    %150 = arith.divf %148, %149 : vector<8x128xf32>
    %151 = math.tanh %145 : vector<8x128xf32>
    %152 = vector.extract_strided_slice %150 {offsets = [0, 0], sizes = [8, 32], strides = [1, 1]} : vector<8x128xf32> to vector<8x32xf32>
    %153 = vector.extract_strided_slice %150 {offsets = [0, 32], sizes = [8, 32], strides = [1, 1]} : vector<8x128xf32> to vector<8x32xf32>
    %154 = vector.extract_strided_slice %151 {offsets = [0, 64], sizes = [8, 32], strides = [1, 1]} : vector<8x128xf32> to vector<8x32xf32>
    %155 = vector.extract_strided_slice %150 {offsets = [0, 96], sizes = [8, 32], strides = [1, 1]} : vector<8x128xf32> to vector<8x32xf32>
    %156 = arith.mulf %153, %139 : vector<8x32xf32>
    %157 = arith.mulf %152, %154 : vector<8x32xf32>
    %158 = arith.addf %156, %157 : vector<8x32xf32>
    %159 = math.tanh %158 : vector<8x32xf32>
    %160 = arith.mulf %155, %159 : vector<8x32xf32>
    %cst_41 = arith.constant 0.000000e+00 : f32
    %161 = vector.broadcast %cst_41 : f32 to vector<8x128xf32>
    %c0_42 = arith.constant 0 : index
    %c0_43 = arith.constant 0 : index
    %c0_44 = arith.constant 0 : index
    %162 = vector.load %arg7[%c0_42, %c0_43, %c0_44] : memref<8x8x128xf32, #tpu.memory_space<vmem>>, vector<1x8x128xf32>
    %163 = vector.shape_cast %162 : vector<1x8x128xf32> to vector<8x128xf32>
    %164 = vector.shape_cast %161 : vector<8x128xf32> to vector<1x8x128xf32>
    tpu.vector_store %arg7[%c0_42, %c0_43, %c0_44], %164 {strides = array<i32>} : memref<8x8x128xf32, #tpu.memory_space<vmem>>, vector<1x8x128xf32>,
    %cst_45 = arith.constant dense<0.000000e+00> : vector<8x256xf32>
    %165 = tpu.matmul %160, %1, %cst_45 {dimension_numbers = #tpu.dot_dimension_numbers<[1], [0], [0], [1], [0, 0, 1, 1], [], []>} : vector<8x32xf32>, vector<32x256xf32>, vector<8x256xf32> -> vector<8x256xf32>
    %c0_46 = arith.constant 0 : index
    %c0_47 = arith.constant 0 : index
    %c0_48 = arith.constant 0 : index
    %166 = vector.load %arg2[%c0_46, %c0_47, %c0_48] : memref<8x8x128xf32, #tpu.memory_space<vmem>>, vector<1x8x128xf32>
    %167 = vector.shape_cast %166 : vector<1x8x128xf32> to vector<8x128xf32>
    %168 = vector.extract_strided_slice %165 {offsets = [0, 0], sizes = [8, 128], strides = [1, 1]} : vector<8x256xf32> to vector<8x128xf32>
    %169 = arith.addf %167, %168 : vector<8x128xf32>
    %170 = arith.negf %169 : vector<8x128xf32>
    %171 = math.exp %170 : vector<8x128xf32>
    %cst_49 = arith.constant 1.000000e+00 : f32
    %172 = vector.broadcast %cst_49 : f32 to vector<8x128xf32>
    %173 = arith.addf %172, %171 : vector<8x128xf32>
    %174 = arith.divf %172, %173 : vector<8x128xf32>
    %175 = math.tanh %169 : vector<8x128xf32>
    %176 = vector.extract_strided_slice %174 {offsets = [0, 0], sizes = [8, 32], strides = [1, 1]} : vector<8x128xf32> to vector<8x32xf32>
    %177 = vector.extract_strided_slice %174 {offsets = [0, 32], sizes = [8, 32], strides = [1, 1]} : vector<8x128xf32> to vector<8x32xf32>
    %178 = vector.extract_strided_slice %175 {offsets = [0, 64], sizes = [8, 32], strides = [1, 1]} : vector<8x128xf32> to vector<8x32xf32>
    %179 = vector.extract_strided_slice %174 {offsets = [0, 96], sizes = [8, 32], strides = [1, 1]} : vector<8x128xf32> to vector<8x32xf32>
    %180 = arith.mulf %177, %158 : vector<8x32xf32>
    %181 = arith.mulf %176, %178 : vector<8x32xf32>
    %182 = arith.addf %180, %181 : vector<8x32xf32>
    %183 = math.tanh %182 : vector<8x32xf32>
    %184 = arith.mulf %179, %183 : vector<8x32xf32>
    %cst_50 = arith.constant dense<0.000000e+00> : vector<8x256xf32>
    %185 = tpu.matmul %184, %1, %cst_50 {dimension_numbers = #tpu.dot_dimension_numbers<[1], [0], [0], [1], [0, 0, 1, 1], [], []>} : vector<8x32xf32>, vector<32x256xf32>, vector<8x256xf32> -> vector<8x256xf32>
    %186 = vector.extract_strided_slice %185 {offsets = [0, 128], sizes = [8, 128], strides = [1, 1]} : vector<8x256xf32> to vector<8x128xf32>
    %187 = arith.addf %186, %4 : vector<8x128xf32>
    %c1_51 = arith.constant 1 : index
    %c0_52 = arith.constant 0 : index
    %c0_53 = arith.constant 0 : index
    %188 = vector.load %arg7[%c1_51, %c0_52, %c0_53] : memref<8x8x128xf32, #tpu.memory_space<vmem>>, vector<1x8x128xf32>
    %189 = vector.shape_cast %188 : vector<1x8x128xf32> to vector<8x128xf32>
    %190 = vector.shape_cast %187 : vector<8x128xf32> to vector<1x8x128xf32>
    tpu.vector_store %arg7[%c1_51, %c0_52, %c0_53], %190 {strides = array<i32>} : memref<8x8x128xf32, #tpu.memory_space<vmem>>, vector<1x8x128xf32>,
    %c1_54 = arith.constant 1 : index
    %c0_55 = arith.constant 0 : index
    %c0_56 = arith.constant 0 : index
    %191 = vector.load %arg2[%c1_54, %c0_55, %c0_56] : memref<8x8x128xf32, #tpu.memory_space<vmem>>, vector<1x8x128xf32>
    %192 = vector.shape_cast %191 : vector<1x8x128xf32> to vector<8x128xf32>
    %c1_57 = arith.constant 1 : index
    %193 = memref.load %arg0[%c1_57] : memref<8xi32, #tpu.memory_space<smem>>
    %c0_i32 = arith.constant 0 : i32
    %194 = arith.cmpi ne, %193, %c0_i32 : i32
    %195 = arith.extui %194 : i1 to i32
    %c0_i32_58 = arith.constant 0 : i32
    %196 = arith.cmpi ne, %195, %c0_i32_58 : i32
    %197 = scf.if %196 -> (vector<8x128xf32>) {
      scf.yield %192 : vector<8x128xf32>
    } else {
      %cst_119 = arith.constant dense<0xFF800000> : vector<8xf32>
      %371 = vector.multi_reduction <maximumf>, %187, %cst_119 [1] : vector<8x128xf32> to vector<8xf32>
      %372 = vector.shape_cast %371 : vector<8xf32> to vector<8x1xf32>
      %373 = vector.broadcast %372 : vector<8x1xf32> to vector<8x128xf32>
      %374 = arith.cmpf oeq, %187, %373 : vector<8x128xf32>
      %c128_i32 = arith.constant 128 : i32
      %375 = vector.broadcast %c128_i32 : i32 to vector<8x128xi32>
      %376 = arith.select %374, %6, %375 : vector<8x128xi1>, vector<8x128xi32>
      %cst_120 = arith.constant dense<2147483647> : vector<8xi32>
      %377 = vector.multi_reduction <minsi>, %376, %cst_120 [1] : vector<8x128xi32> to vector<8xi32>
      %378 = vector.shape_cast %377 : vector<8xi32> to vector<8x1xi32>
      %379 = vector.broadcast %378 : vector<8x1xi32> to vector<8x128xi32>
      %380 = arith.cmpi eq, %6, %379 : vector<8x128xi32>
      %381 = arith.extui %380 : vector<8x128xi1> to vector<8x128xi32>
      %382 = arith.sitofp %381 : vector<8x128xi32> to vector<8x128xf32>
      %cst_121 = arith.constant dense<0.000000e+00> : vector<8x128xf32>
      %383 = tpu.matmul %382, %5, %cst_121 {dimension_numbers = #tpu.dot_dimension_numbers<[1], [0], [0], [1], [0, 0, 1, 1], [], []>} : vector<8x128xf32>, vector<128x128xf32>, vector<8x128xf32> -> vector<8x128xf32>
      scf.yield %383 : vector<8x128xf32>
    }
    %198 = vector.extract_strided_slice %185 {offsets = [0, 0], sizes = [8, 128], strides = [1, 1]} : vector<8x256xf32> to vector<8x128xf32>
    %199 = arith.addf %197, %198 : vector<8x128xf32>
    %200 = arith.negf %199 : vector<8x128xf32>
    %201 = math.exp %200 : vector<8x128xf32>
    %cst_59 = arith.constant 1.000000e+00 : f32
    %202 = vector.broadcast %cst_59 : f32 to vector<8x128xf32>
    %203 = arith.addf %202, %201 : vector<8x128xf32>
    %204 = arith.divf %202, %203 : vector<8x128xf32>
    %205 = math.tanh %199 : vector<8x128xf32>
    %206 = vector.extract_strided_slice %204 {offsets = [0, 0], sizes = [8, 32], strides = [1, 1]} : vector<8x128xf32> to vector<8x32xf32>
    %207 = vector.extract_strided_slice %204 {offsets = [0, 32], sizes = [8, 32], strides = [1, 1]} : vector<8x128xf32> to vector<8x32xf32>
    %208 = vector.extract_strided_slice %205 {offsets = [0, 64], sizes = [8, 32], strides = [1, 1]} : vector<8x128xf32> to vector<8x32xf32>
    %209 = vector.extract_strided_slice %204 {offsets = [0, 96], sizes = [8, 32], strides = [1, 1]} : vector<8x128xf32> to vector<8x32xf32>
    %210 = arith.mulf %207, %158 : vector<8x32xf32>
    %211 = arith.mulf %206, %208 : vector<8x32xf32>
    %212 = arith.addf %210, %211 : vector<8x32xf32>
    %213 = math.tanh %212 : vector<8x32xf32>
    %214 = arith.mulf %209, %213 : vector<8x32xf32>
    %cst_60 = arith.constant dense<0.000000e+00> : vector<8x256xf32>
    %215 = tpu.matmul %214, %1, %cst_60 {dimension_numbers = #tpu.dot_dimension_numbers<[1], [0], [0], [1], [0, 0, 1, 1], [], []>} : vector<8x32xf32>, vector<32x256xf32>, vector<8x256xf32> -> vector<8x256xf32>
    %216 = vector.extract_strided_slice %215 {offsets = [0, 128], sizes = [8, 128], strides = [1, 1]} : vector<8x256xf32> to vector<8x128xf32>
    %217 = arith.addf %216, %4 : vector<8x128xf32>
    %c2_61 = arith.constant 2 : index
    %c0_62 = arith.constant 0 : index
    %c0_63 = arith.constant 0 : index
    %218 = vector.load %arg7[%c2_61, %c0_62, %c0_63] : memref<8x8x128xf32, #tpu.memory_space<vmem>>, vector<1x8x128xf32>
    %219 = vector.shape_cast %218 : vector<1x8x128xf32> to vector<8x128xf32>
    %220 = vector.shape_cast %217 : vector<8x128xf32> to vector<1x8x128xf32>
    tpu.vector_store %arg7[%c2_61, %c0_62, %c0_63], %220 {strides = array<i32>} : memref<8x8x128xf32, #tpu.memory_space<vmem>>, vector<1x8x128xf32>,
    %c2_64 = arith.constant 2 : index
    %c0_65 = arith.constant 0 : index
    %c0_66 = arith.constant 0 : index
    %221 = vector.load %arg2[%c2_64, %c0_65, %c0_66] : memref<8x8x128xf32, #tpu.memory_space<vmem>>, vector<1x8x128xf32>
    %222 = vector.shape_cast %221 : vector<1x8x128xf32> to vector<8x128xf32>
    %c2_67 = arith.constant 2 : index
    %223 = memref.load %arg0[%c2_67] : memref<8xi32, #tpu.memory_space<smem>>
    %c0_i32_68 = arith.constant 0 : i32
    %224 = arith.cmpi ne, %223, %c0_i32_68 : i32
    %225 = arith.extui %224 : i1 to i32
    %c0_i32_69 = arith.constant 0 : i32
    %226 = arith.cmpi ne, %225, %c0_i32_69 : i32
    %227 = scf.if %226 -> (vector<8x128xf32>) {
      scf.yield %222 : vector<8x128xf32>
    } else {
      %cst_119 = arith.constant dense<0xFF800000> : vector<8xf32>
      %371 = vector.multi_reduction <maximumf>, %217, %cst_119 [1] : vector<8x128xf32> to vector<8xf32>
      %372 = vector.shape_cast %371 : vector<8xf32> to vector<8x1xf32>
      %373 = vector.broadcast %372 : vector<8x1xf32> to vector<8x128xf32>
      %374 = arith.cmpf oeq, %217, %373 : vector<8x128xf32>
      %c128_i32 = arith.constant 128 : i32
      %375 = vector.broadcast %c128_i32 : i32 to vector<8x128xi32>
      %376 = arith.select %374, %6, %375 : vector<8x128xi1>, vector<8x128xi32>
      %cst_120 = arith.constant dense<2147483647> : vector<8xi32>
      %377 = vector.multi_reduction <minsi>, %376, %cst_120 [1] : vector<8x128xi32> to vector<8xi32>
      %378 = vector.shape_cast %377 : vector<8xi32> to vector<8x1xi32>
      %379 = vector.broadcast %378 : vector<8x1xi32> to vector<8x128xi32>
      %380 = arith.cmpi eq, %6, %379 : vector<8x128xi32>
      %381 = arith.extui %380 : vector<8x128xi1> to vector<8x128xi32>
      %382 = arith.sitofp %381 : vector<8x128xi32> to vector<8x128xf32>
      %cst_121 = arith.constant dense<0.000000e+00> : vector<8x128xf32>
      %383 = tpu.matmul %382, %5, %cst_121 {dimension_numbers = #tpu.dot_dimension_numbers<[1], [0], [0], [1], [0, 0, 1, 1], [], []>} : vector<8x128xf32>, vector<128x128xf32>, vector<8x128xf32> -> vector<8x128xf32>
      scf.yield %383 : vector<8x128xf32>
    }
    %228 = vector.extract_strided_slice %215 {offsets = [0, 0], sizes = [8, 128], strides = [1, 1]} : vector<8x256xf32> to vector<8x128xf32>
    %229 = arith.addf %227, %228 : vector<8x128xf32>
    %230 = arith.negf %229 : vector<8x128xf32>
    %231 = math.exp %230 : vector<8x128xf32>
    %cst_70 = arith.constant 1.000000e+00 : f32
    %232 = vector.broadcast %cst_70 : f32 to vector<8x128xf32>
    %233 = arith.addf %232, %231 : vector<8x128xf32>
    %234 = arith.divf %232, %233 : vector<8x128xf32>
    %235 = math.tanh %229 : vector<8x128xf32>
    %236 = vector.extract_strided_slice %234 {offsets = [0, 0], sizes = [8, 32], strides = [1, 1]} : vector<8x128xf32> to vector<8x32xf32>
    %237 = vector.extract_strided_slice %234 {offsets = [0, 32], sizes = [8, 32], strides = [1, 1]} : vector<8x128xf32> to vector<8x32xf32>
    %238 = vector.extract_strided_slice %235 {offsets = [0, 64], sizes = [8, 32], strides = [1, 1]} : vector<8x128xf32> to vector<8x32xf32>
    %239 = vector.extract_strided_slice %234 {offsets = [0, 96], sizes = [8, 32], strides = [1, 1]} : vector<8x128xf32> to vector<8x32xf32>
    %240 = arith.mulf %237, %158 : vector<8x32xf32>
    %241 = arith.mulf %236, %238 : vector<8x32xf32>
    %242 = arith.addf %240, %241 : vector<8x32xf32>
    %243 = math.tanh %242 : vector<8x32xf32>
    %244 = arith.mulf %239, %243 : vector<8x32xf32>
    %cst_71 = arith.constant dense<0.000000e+00> : vector<8x256xf32>
    %245 = tpu.matmul %244, %1, %cst_71 {dimension_numbers = #tpu.dot_dimension_numbers<[1], [0], [0], [1], [0, 0, 1, 1], [], []>} : vector<8x32xf32>, vector<32x256xf32>, vector<8x256xf32> -> vector<8x256xf32>
    %246 = vector.extract_strided_slice %245 {offsets = [0, 128], sizes = [8, 128], strides = [1, 1]} : vector<8x256xf32> to vector<8x128xf32>
    %247 = arith.addf %246, %4 : vector<8x128xf32>
    %c3_72 = arith.constant 3 : index
    %c0_73 = arith.constant 0 : index
    %c0_74 = arith.constant 0 : index
    %248 = vector.load %arg7[%c3_72, %c0_73, %c0_74] : memref<8x8x128xf32, #tpu.memory_space<vmem>>, vector<1x8x128xf32>
    %249 = vector.shape_cast %248 : vector<1x8x128xf32> to vector<8x128xf32>
    %250 = vector.shape_cast %247 : vector<8x128xf32> to vector<1x8x128xf32>
    tpu.vector_store %arg7[%c3_72, %c0_73, %c0_74], %250 {strides = array<i32>} : memref<8x8x128xf32, #tpu.memory_space<vmem>>, vector<1x8x128xf32>,
    %c3_75 = arith.constant 3 : index
    %c0_76 = arith.constant 0 : index
    %c0_77 = arith.constant 0 : index
    %251 = vector.load %arg2[%c3_75, %c0_76, %c0_77] : memref<8x8x128xf32, #tpu.memory_space<vmem>>, vector<1x8x128xf32>
    %252 = vector.shape_cast %251 : vector<1x8x128xf32> to vector<8x128xf32>
    %c3_78 = arith.constant 3 : index
    %253 = memref.load %arg0[%c3_78] : memref<8xi32, #tpu.memory_space<smem>>
    %c0_i32_79 = arith.constant 0 : i32
    %254 = arith.cmpi ne, %253, %c0_i32_79 : i32
    %255 = arith.extui %254 : i1 to i32
    %c0_i32_80 = arith.constant 0 : i32
    %256 = arith.cmpi ne, %255, %c0_i32_80 : i32
    %257 = scf.if %256 -> (vector<8x128xf32>) {
      scf.yield %252 : vector<8x128xf32>
    } else {
      %cst_119 = arith.constant dense<0xFF800000> : vector<8xf32>
      %371 = vector.multi_reduction <maximumf>, %247, %cst_119 [1] : vector<8x128xf32> to vector<8xf32>
      %372 = vector.shape_cast %371 : vector<8xf32> to vector<8x1xf32>
      %373 = vector.broadcast %372 : vector<8x1xf32> to vector<8x128xf32>
      %374 = arith.cmpf oeq, %247, %373 : vector<8x128xf32>
      %c128_i32 = arith.constant 128 : i32
      %375 = vector.broadcast %c128_i32 : i32 to vector<8x128xi32>
      %376 = arith.select %374, %6, %375 : vector<8x128xi1>, vector<8x128xi32>
      %cst_120 = arith.constant dense<2147483647> : vector<8xi32>
      %377 = vector.multi_reduction <minsi>, %376, %cst_120 [1] : vector<8x128xi32> to vector<8xi32>
      %378 = vector.shape_cast %377 : vector<8xi32> to vector<8x1xi32>
      %379 = vector.broadcast %378 : vector<8x1xi32> to vector<8x128xi32>
      %380 = arith.cmpi eq, %6, %379 : vector<8x128xi32>
      %381 = arith.extui %380 : vector<8x128xi1> to vector<8x128xi32>
      %382 = arith.sitofp %381 : vector<8x128xi32> to vector<8x128xf32>
      %cst_121 = arith.constant dense<0.000000e+00> : vector<8x128xf32>
      %383 = tpu.matmul %382, %5, %cst_121 {dimension_numbers = #tpu.dot_dimension_numbers<[1], [0], [0], [1], [0, 0, 1, 1], [], []>} : vector<8x128xf32>, vector<128x128xf32>, vector<8x128xf32> -> vector<8x128xf32>
      scf.yield %383 : vector<8x128xf32>
    }
    %258 = vector.extract_strided_slice %245 {offsets = [0, 0], sizes = [8, 128], strides = [1, 1]} : vector<8x256xf32> to vector<8x128xf32>
    %259 = arith.addf %257, %258 : vector<8x128xf32>
    %260 = arith.negf %259 : vector<8x128xf32>
    %261 = math.exp %260 : vector<8x128xf32>
    %cst_81 = arith.constant 1.000000e+00 : f32
    %262 = vector.broadcast %cst_81 : f32 to vector<8x128xf32>
    %263 = arith.addf %262, %261 : vector<8x128xf32>
    %264 = arith.divf %262, %263 : vector<8x128xf32>
    %265 = math.tanh %259 : vector<8x128xf32>
    %266 = vector.extract_strided_slice %264 {offsets = [0, 0], sizes = [8, 32], strides = [1, 1]} : vector<8x128xf32> to vector<8x32xf32>
    %267 = vector.extract_strided_slice %264 {offsets = [0, 32], sizes = [8, 32], strides = [1, 1]} : vector<8x128xf32> to vector<8x32xf32>
    %268 = vector.extract_strided_slice %265 {offsets = [0, 64], sizes = [8, 32], strides = [1, 1]} : vector<8x128xf32> to vector<8x32xf32>
    %269 = vector.extract_strided_slice %264 {offsets = [0, 96], sizes = [8, 32], strides = [1, 1]} : vector<8x128xf32> to vector<8x32xf32>
    %270 = arith.mulf %267, %158 : vector<8x32xf32>
    %271 = arith.mulf %266, %268 : vector<8x32xf32>
    %272 = arith.addf %270, %271 : vector<8x32xf32>
    %273 = math.tanh %272 : vector<8x32xf32>
    %274 = arith.mulf %269, %273 : vector<8x32xf32>
    %cst_82 = arith.constant dense<0.000000e+00> : vector<8x256xf32>
    %275 = tpu.matmul %274, %1, %cst_82 {dimension_numbers = #tpu.dot_dimension_numbers<[1], [0], [0], [1], [0, 0, 1, 1], [], []>} : vector<8x32xf32>, vector<32x256xf32>, vector<8x256xf32> -> vector<8x256xf32>
    %276 = vector.extract_strided_slice %275 {offsets = [0, 128], sizes = [8, 128], strides = [1, 1]} : vector<8x256xf32> to vector<8x128xf32>
    %277 = arith.addf %276, %4 : vector<8x128xf32>
    %c4_83 = arith.constant 4 : index
    %c0_84 = arith.constant 0 : index
    %c0_85 = arith.constant 0 : index
    %278 = vector.load %arg7[%c4_83, %c0_84, %c0_85] : memref<8x8x128xf32, #tpu.memory_space<vmem>>, vector<1x8x128xf32>
    %279 = vector.shape_cast %278 : vector<1x8x128xf32> to vector<8x128xf32>
    %280 = vector.shape_cast %277 : vector<8x128xf32> to vector<1x8x128xf32>
    tpu.vector_store %arg7[%c4_83, %c0_84, %c0_85], %280 {strides = array<i32>} : memref<8x8x128xf32, #tpu.memory_space<vmem>>, vector<1x8x128xf32>,
    %c4_86 = arith.constant 4 : index
    %c0_87 = arith.constant 0 : index
    %c0_88 = arith.constant 0 : index
    %281 = vector.load %arg2[%c4_86, %c0_87, %c0_88] : memref<8x8x128xf32, #tpu.memory_space<vmem>>, vector<1x8x128xf32>
    %282 = vector.shape_cast %281 : vector<1x8x128xf32> to vector<8x128xf32>
    %c4_89 = arith.constant 4 : index
    %283 = memref.load %arg0[%c4_89] : memref<8xi32, #tpu.memory_space<smem>>
    %c0_i32_90 = arith.constant 0 : i32
    %284 = arith.cmpi ne, %283, %c0_i32_90 : i32
    %285 = arith.extui %284 : i1 to i32
    %c0_i32_91 = arith.constant 0 : i32
    %286 = arith.cmpi ne, %285, %c0_i32_91 : i32
    %287 = scf.if %286 -> (vector<8x128xf32>) {
      scf.yield %282 : vector<8x128xf32>
    } else {
      %cst_119 = arith.constant dense<0xFF800000> : vector<8xf32>
      %371 = vector.multi_reduction <maximumf>, %277, %cst_119 [1] : vector<8x128xf32> to vector<8xf32>
      %372 = vector.shape_cast %371 : vector<8xf32> to vector<8x1xf32>
      %373 = vector.broadcast %372 : vector<8x1xf32> to vector<8x128xf32>
      %374 = arith.cmpf oeq, %277, %373 : vector<8x128xf32>
      %c128_i32 = arith.constant 128 : i32
      %375 = vector.broadcast %c128_i32 : i32 to vector<8x128xi32>
      %376 = arith.select %374, %6, %375 : vector<8x128xi1>, vector<8x128xi32>
      %cst_120 = arith.constant dense<2147483647> : vector<8xi32>
      %377 = vector.multi_reduction <minsi>, %376, %cst_120 [1] : vector<8x128xi32> to vector<8xi32>
      %378 = vector.shape_cast %377 : vector<8xi32> to vector<8x1xi32>
      %379 = vector.broadcast %378 : vector<8x1xi32> to vector<8x128xi32>
      %380 = arith.cmpi eq, %6, %379 : vector<8x128xi32>
      %381 = arith.extui %380 : vector<8x128xi1> to vector<8x128xi32>
      %382 = arith.sitofp %381 : vector<8x128xi32> to vector<8x128xf32>
      %cst_121 = arith.constant dense<0.000000e+00> : vector<8x128xf32>
      %383 = tpu.matmul %382, %5, %cst_121 {dimension_numbers = #tpu.dot_dimension_numbers<[1], [0], [0], [1], [0, 0, 1, 1], [], []>} : vector<8x128xf32>, vector<128x128xf32>, vector<8x128xf32> -> vector<8x128xf32>
      scf.yield %383 : vector<8x128xf32>
    }
    %288 = vector.extract_strided_slice %275 {offsets = [0, 0], sizes = [8, 128], strides = [1, 1]} : vector<8x256xf32> to vector<8x128xf32>
    %289 = arith.addf %287, %288 : vector<8x128xf32>
    %290 = arith.negf %289 : vector<8x128xf32>
    %291 = math.exp %290 : vector<8x128xf32>
    %cst_92 = arith.constant 1.000000e+00 : f32
    %292 = vector.broadcast %cst_92 : f32 to vector<8x128xf32>
    %293 = arith.addf %292, %291 : vector<8x128xf32>
    %294 = arith.divf %292, %293 : vector<8x128xf32>
    %295 = math.tanh %289 : vector<8x128xf32>
    %296 = vector.extract_strided_slice %294 {offsets = [0, 0], sizes = [8, 32], strides = [1, 1]} : vector<8x128xf32> to vector<8x32xf32>
    %297 = vector.extract_strided_slice %294 {offsets = [0, 32], sizes = [8, 32], strides = [1, 1]} : vector<8x128xf32> to vector<8x32xf32>
    %298 = vector.extract_strided_slice %295 {offsets = [0, 64], sizes = [8, 32], strides = [1, 1]} : vector<8x128xf32> to vector<8x32xf32>
    %299 = vector.extract_strided_slice %294 {offsets = [0, 96], sizes = [8, 32], strides = [1, 1]} : vector<8x128xf32> to vector<8x32xf32>
    %300 = arith.mulf %297, %158 : vector<8x32xf32>
    %301 = arith.mulf %296, %298 : vector<8x32xf32>
    %302 = arith.addf %300, %301 : vector<8x32xf32>
    %303 = math.tanh %302 : vector<8x32xf32>
    %304 = arith.mulf %299, %303 : vector<8x32xf32>
    %cst_93 = arith.constant dense<0.000000e+00> : vector<8x256xf32>
    %305 = tpu.matmul %304, %1, %cst_93 {dimension_numbers = #tpu.dot_dimension_numbers<[1], [0], [0], [1], [0, 0, 1, 1], [], []>} : vector<8x32xf32>, vector<32x256xf32>, vector<8x256xf32> -> vector<8x256xf32>
    %306 = vector.extract_strided_slice %305 {offsets = [0, 128], sizes = [8, 128], strides = [1, 1]} : vector<8x256xf32> to vector<8x128xf32>
    %307 = arith.addf %306, %4 : vector<8x128xf32>
    %c5_94 = arith.constant 5 : index
    %c0_95 = arith.constant 0 : index
    %c0_96 = arith.constant 0 : index
    %308 = vector.load %arg7[%c5_94, %c0_95, %c0_96] : memref<8x8x128xf32, #tpu.memory_space<vmem>>, vector<1x8x128xf32>
    %309 = vector.shape_cast %308 : vector<1x8x128xf32> to vector<8x128xf32>
    %310 = vector.shape_cast %307 : vector<8x128xf32> to vector<1x8x128xf32>
    tpu.vector_store %arg7[%c5_94, %c0_95, %c0_96], %310 {strides = array<i32>} : memref<8x8x128xf32, #tpu.memory_space<vmem>>, vector<1x8x128xf32>,
    %c5_97 = arith.constant 5 : index
    %c0_98 = arith.constant 0 : index
    %c0_99 = arith.constant 0 : index
    %311 = vector.load %arg2[%c5_97, %c0_98, %c0_99] : memref<8x8x128xf32, #tpu.memory_space<vmem>>, vector<1x8x128xf32>
    %312 = vector.shape_cast %311 : vector<1x8x128xf32> to vector<8x128xf32>
    %c5_100 = arith.constant 5 : index
    %313 = memref.load %arg0[%c5_100] : memref<8xi32, #tpu.memory_space<smem>>
    %c0_i32_101 = arith.constant 0 : i32
    %314 = arith.cmpi ne, %313, %c0_i32_101 : i32
    %315 = arith.extui %314 : i1 to i32
    %c0_i32_102 = arith.constant 0 : i32
    %316 = arith.cmpi ne, %315, %c0_i32_102 : i32
    %317 = scf.if %316 -> (vector<8x128xf32>) {
      scf.yield %312 : vector<8x128xf32>
    } else {
      %cst_119 = arith.constant dense<0xFF800000> : vector<8xf32>
      %371 = vector.multi_reduction <maximumf>, %307, %cst_119 [1] : vector<8x128xf32> to vector<8xf32>
      %372 = vector.shape_cast %371 : vector<8xf32> to vector<8x1xf32>
      %373 = vector.broadcast %372 : vector<8x1xf32> to vector<8x128xf32>
      %374 = arith.cmpf oeq, %307, %373 : vector<8x128xf32>
      %c128_i32 = arith.constant 128 : i32
      %375 = vector.broadcast %c128_i32 : i32 to vector<8x128xi32>
      %376 = arith.select %374, %6, %375 : vector<8x128xi1>, vector<8x128xi32>
      %cst_120 = arith.constant dense<2147483647> : vector<8xi32>
      %377 = vector.multi_reduction <minsi>, %376, %cst_120 [1] : vector<8x128xi32> to vector<8xi32>
      %378 = vector.shape_cast %377 : vector<8xi32> to vector<8x1xi32>
      %379 = vector.broadcast %378 : vector<8x1xi32> to vector<8x128xi32>
      %380 = arith.cmpi eq, %6, %379 : vector<8x128xi32>
      %381 = arith.extui %380 : vector<8x128xi1> to vector<8x128xi32>
      %382 = arith.sitofp %381 : vector<8x128xi32> to vector<8x128xf32>
      %cst_121 = arith.constant dense<0.000000e+00> : vector<8x128xf32>
      %383 = tpu.matmul %382, %5, %cst_121 {dimension_numbers = #tpu.dot_dimension_numbers<[1], [0], [0], [1], [0, 0, 1, 1], [], []>} : vector<8x128xf32>, vector<128x128xf32>, vector<8x128xf32> -> vector<8x128xf32>
      scf.yield %383 : vector<8x128xf32>
    }
    %318 = vector.extract_strided_slice %305 {offsets = [0, 0], sizes = [8, 128], strides = [1, 1]} : vector<8x256xf32> to vector<8x128xf32>
    %319 = arith.addf %317, %318 : vector<8x128xf32>
    %320 = arith.negf %319 : vector<8x128xf32>
    %321 = math.exp %320 : vector<8x128xf32>
    %cst_103 = arith.constant 1.000000e+00 : f32
    %322 = vector.broadcast %cst_103 : f32 to vector<8x128xf32>
    %323 = arith.addf %322, %321 : vector<8x128xf32>
    %324 = arith.divf %322, %323 : vector<8x128xf32>
    %325 = math.tanh %319 : vector<8x128xf32>
    %326 = vector.extract_strided_slice %324 {offsets = [0, 0], sizes = [8, 32], strides = [1, 1]} : vector<8x128xf32> to vector<8x32xf32>
    %327 = vector.extract_strided_slice %324 {offsets = [0, 32], sizes = [8, 32], strides = [1, 1]} : vector<8x128xf32> to vector<8x32xf32>
    %328 = vector.extract_strided_slice %325 {offsets = [0, 64], sizes = [8, 32], strides = [1, 1]} : vector<8x128xf32> to vector<8x32xf32>
    %329 = vector.extract_strided_slice %324 {offsets = [0, 96], sizes = [8, 32], strides = [1, 1]} : vector<8x128xf32> to vector<8x32xf32>
    %330 = arith.mulf %327, %158 : vector<8x32xf32>
    %331 = arith.mulf %326, %328 : vector<8x32xf32>
    %332 = arith.addf %330, %331 : vector<8x32xf32>
    %333 = math.tanh %332 : vector<8x32xf32>
    %334 = arith.mulf %329, %333 : vector<8x32xf32>
    %cst_104 = arith.constant dense<0.000000e+00> : vector<8x256xf32>
    %335 = tpu.matmul %334, %1, %cst_104 {dimension_numbers = #tpu.dot_dimension_numbers<[1], [0], [0], [1], [0, 0, 1, 1], [], []>} : vector<8x32xf32>, vector<32x256xf32>, vector<8x256xf32> -> vector<8x256xf32>
    %336 = vector.extract_strided_slice %335 {offsets = [0, 128], sizes = [8, 128], strides = [1, 1]} : vector<8x256xf32> to vector<8x128xf32>
    %337 = arith.addf %336, %4 : vector<8x128xf32>
    %c6_105 = arith.constant 6 : index
    %c0_106 = arith.constant 0 : index
    %c0_107 = arith.constant 0 : index
    %338 = vector.load %arg7[%c6_105, %c0_106, %c0_107] : memref<8x8x128xf32, #tpu.memory_space<vmem>>, vector<1x8x128xf32>
    %339 = vector.shape_cast %338 : vector<1x8x128xf32> to vector<8x128xf32>
    %340 = vector.shape_cast %337 : vector<8x128xf32> to vector<1x8x128xf32>
    tpu.vector_store %arg7[%c6_105, %c0_106, %c0_107], %340 {strides = array<i32>} : memref<8x8x128xf32, #tpu.memory_space<vmem>>, vector<1x8x128xf32>,
    %c6_108 = arith.constant 6 : index
    %c0_109 = arith.constant 0 : index
    %c0_110 = arith.constant 0 : index
    %341 = vector.load %arg2[%c6_108, %c0_109, %c0_110] : memref<8x8x128xf32, #tpu.memory_space<vmem>>, vector<1x8x128xf32>
    %342 = vector.shape_cast %341 : vector<1x8x128xf32> to vector<8x128xf32>
    %c6_111 = arith.constant 6 : index
    %343 = memref.load %arg0[%c6_111] : memref<8xi32, #tpu.memory_space<smem>>
    %c0_i32_112 = arith.constant 0 : i32
    %344 = arith.cmpi ne, %343, %c0_i32_112 : i32
    %345 = arith.extui %344 : i1 to i32
    %c0_i32_113 = arith.constant 0 : i32
    %346 = arith.cmpi ne, %345, %c0_i32_113 : i32
    %347 = scf.if %346 -> (vector<8x128xf32>) {
      scf.yield %342 : vector<8x128xf32>
    } else {
      %cst_119 = arith.constant dense<0xFF800000> : vector<8xf32>
      %371 = vector.multi_reduction <maximumf>, %337, %cst_119 [1] : vector<8x128xf32> to vector<8xf32>
      %372 = vector.shape_cast %371 : vector<8xf32> to vector<8x1xf32>
      %373 = vector.broadcast %372 : vector<8x1xf32> to vector<8x128xf32>
      %374 = arith.cmpf oeq, %337, %373 : vector<8x128xf32>
      %c128_i32 = arith.constant 128 : i32
      %375 = vector.broadcast %c128_i32 : i32 to vector<8x128xi32>
      %376 = arith.select %374, %6, %375 : vector<8x128xi1>, vector<8x128xi32>
      %cst_120 = arith.constant dense<2147483647> : vector<8xi32>
      %377 = vector.multi_reduction <minsi>, %376, %cst_120 [1] : vector<8x128xi32> to vector<8xi32>
      %378 = vector.shape_cast %377 : vector<8xi32> to vector<8x1xi32>
      %379 = vector.broadcast %378 : vector<8x1xi32> to vector<8x128xi32>
      %380 = arith.cmpi eq, %6, %379 : vector<8x128xi32>
      %381 = arith.extui %380 : vector<8x128xi1> to vector<8x128xi32>
      %382 = arith.sitofp %381 : vector<8x128xi32> to vector<8x128xf32>
      %cst_121 = arith.constant dense<0.000000e+00> : vector<8x128xf32>
      %383 = tpu.matmul %382, %5, %cst_121 {dimension_numbers = #tpu.dot_dimension_numbers<[1], [0], [0], [1], [0, 0, 1, 1], [], []>} : vector<8x128xf32>, vector<128x128xf32>, vector<8x128xf32> -> vector<8x128xf32>
      scf.yield %383 : vector<8x128xf32>
    }
    %348 = vector.extract_strided_slice %335 {offsets = [0, 0], sizes = [8, 128], strides = [1, 1]} : vector<8x256xf32> to vector<8x128xf32>
    %349 = arith.addf %347, %348 : vector<8x128xf32>
    %350 = arith.negf %349 : vector<8x128xf32>
    %351 = math.exp %350 : vector<8x128xf32>
    %cst_114 = arith.constant 1.000000e+00 : f32
    %352 = vector.broadcast %cst_114 : f32 to vector<8x128xf32>
    %353 = arith.addf %352, %351 : vector<8x128xf32>
    %354 = arith.divf %352, %353 : vector<8x128xf32>
    %355 = math.tanh %349 : vector<8x128xf32>
    %356 = vector.extract_strided_slice %354 {offsets = [0, 0], sizes = [8, 32], strides = [1, 1]} : vector<8x128xf32> to vector<8x32xf32>
    %357 = vector.extract_strided_slice %354 {offsets = [0, 32], sizes = [8, 32], strides = [1, 1]} : vector<8x128xf32> to vector<8x32xf32>
    %358 = vector.extract_strided_slice %355 {offsets = [0, 64], sizes = [8, 32], strides = [1, 1]} : vector<8x128xf32> to vector<8x32xf32>
    %359 = vector.extract_strided_slice %354 {offsets = [0, 96], sizes = [8, 32], strides = [1, 1]} : vector<8x128xf32> to vector<8x32xf32>
    %360 = arith.mulf %357, %158 : vector<8x32xf32>
    %361 = arith.mulf %356, %358 : vector<8x32xf32>
    %362 = arith.addf %360, %361 : vector<8x32xf32>
    %363 = math.tanh %362 : vector<8x32xf32>
    %364 = arith.mulf %359, %363 : vector<8x32xf32>
    %cst_115 = arith.constant dense<0.000000e+00> : vector<8x256xf32>
    %365 = tpu.matmul %364, %1, %cst_115 {dimension_numbers = #tpu.dot_dimension_numbers<[1], [0], [0], [1], [0, 0, 1, 1], [], []>} : vector<8x32xf32>, vector<32x256xf32>, vector<8x256xf32> -> vector<8x256xf32>
    %366 = vector.extract_strided_slice %365 {offsets = [0, 128], sizes = [8, 128], strides = [1, 1]} : vector<8x256xf32> to vector<8x128xf32>
    %367 = arith.addf %366, %4 : vector<8x128xf32>
    %c7_116 = arith.constant 7 : index
    %c0_117 = arith.constant 0 : index
    %c0_118 = arith.constant 0 : index
    %368 = vector.load %arg7[%c7_116, %c0_117, %c0_118] : memref<8x8x128xf32, #tpu.memory_space<vmem>>, vector<1x8x128xf32>
    %369 = vector.shape_cast %368 : vector<1x8x128xf32> to vector<8x128xf32>
    %370 = vector.shape_cast %367 : vector<8x128xf32> to vector<1x8x128xf32>
    tpu.vector_store %arg7[%c7_116, %c0_117, %c0_118], %370 {strides = array<i32>} : memref<8x8x128xf32, #tpu.memory_space<vmem>>, vector<1x8x128xf32>,
    return
  }
}

</mosaic_0001>

<llo_original>
// kernel: _seq2seq_apply.1
$region0: #{_seq2seq_apply.1}
  #allocation0 [shape = 'u32[]', space=smem, size = 0x4, offset = 0x4, fixed_abs, tag = 'smem constant byte address 0x4 - core index']
  #allocation1 [shape = 'u32[144,128]{1,0:T(1,128)}', space=vmem, size = 0x12000, scoped, tag = 'internal scratch']
  %s0 = inlined_call_operand.vmem [shape: s32[8], index: 0, kind: input, shape index: {}]
  %s1 = inlined_call_operand.vmem [shape: f32[8,8,128], index: 1, kind: input, shape index: {}]
  %s2 = inlined_call_operand.vmem [shape: f32[8,8,128], index: 2, kind: input, shape index: {}]
  %s3 = inlined_call_operand.vmem [shape: f32[32,128], index: 3, kind: input, shape index: {}]
  %s4 = inlined_call_operand.vmem [shape: f32[32,256], index: 4, kind: input, shape index: {}]
  %s5 = inlined_call_operand.vmem [shape: f32[1,128], index: 5, kind: input, shape index: {}]
  %s6 = inlined_call_operand.vmem [shape: f32[128,128], index: 6, kind: input, shape index: {}]
  %s7 = inlined_call_operand.vmem [shape: f32[8,8,128], index: 7, kind: output, shape index: {}]
  %s8 = sld [smem:[#allocation0]]
  $region90: #{_seq2seq_apply.1} parent=0
    _
  %s10 = ssub.s32 1, %s8
  %s11 = scalar_select 0, %s10, %s8
  $region1: #{_seq2seq_apply.1} parent=0
    #allocation2 [shape = 'u8[512]{0}', space=smem, size = 0x200, scoped, tag = 'input window, operand 0, single buffered']
    #allocation3 [shape = 's32[1]{0}', space=sflag, size = 0x4, scoped, tag = 'scoped memory for _seq2seq_apply.1']
    %12 = vsyncpa [#allocation3], 0
    // Predicated region
    $region2: #{_seq2seq_apply.1} parent=1 // pred_check
      _
    $region3: #{_seq2seq_apply.1} parent=1 // pred_check_branch
      %14 = sbr.rel (0) target = $region5
    $region4: #{_seq2seq_apply.1} parent=1 // pred_region
      %s16 = ssub.s32 16, 16
      %17 = vsyncadd [#allocation3], %s16
      %s19 = sshll.u32 %s0, 4
      %s20 = int_to_ptr.vmem [resolvable:$true] %s19
      %22 = dma.vmem_to_smem %s20, 16, [#allocation2], [#allocation3]
    $region5: #{_seq2seq_apply.1} parent=1 // pred_fallthru
      _
    // Predicated region
    $region6: #{_seq2seq_apply.1} parent=1 // pred_check
      _
    $region7: #{_seq2seq_apply.1} parent=1 // pred_check_branch
      %24 = sbr.rel (0) target = $region9
    $region8: #{_seq2seq_apply.1} parent=1 // pred_region
      _
    $region9: #{_seq2seq_apply.1} parent=1 // pred_fallthru
      _
    // Predicated region
    $region10: #{_seq2seq_apply.1} parent=1 // pred_check
      _
    $region11: #{_seq2seq_apply.1} parent=1 // pred_check_branch
      %26 = sbr.rel (0) target = $region13
    $region12: #{_seq2seq_apply.1} parent=1 // pred_region
      _
    $region13: #{_seq2seq_apply.1} parent=1 // pred_fallthru
      _
    // Predicated region
    $region14: #{_seq2seq_apply.1} parent=1 // pred_check
      _
    $region15: #{_seq2seq_apply.1} parent=1 // pred_check_branch
      %28 = sbr.rel (0) target = $region17
    $region16: #{_seq2seq_apply.1} parent=1 // pred_region
      _
    $region17: #{_seq2seq_apply.1} parent=1 // pred_fallthru
      _
    // Predicated region
    $region18: #{_seq2seq_apply.1} parent=1 // pred_check
      _
    $region19: #{_seq2seq_apply.1} parent=1 // pred_check_branch
      %30 = sbr.rel (0) target = $region21
    $region20: #{_seq2seq_apply.1} parent=1 // pred_region
      _
    $region21: #{_seq2seq_apply.1} parent=1 // pred_fallthru
      _
    // Predicated region
    $region22: #{_seq2seq_apply.1} parent=1 // pred_check
      _
    $region23: #{_seq2seq_apply.1} parent=1 // pred_check_branch
      %32 = sbr.rel (0) target = $region25
    $region24: #{_seq2seq_apply.1} parent=1 // pred_region
      _
    $region25: #{_seq2seq_apply.1} parent=1 // pred_fallthru
      _
    // Predicated region
    $region26: #{_seq2seq_apply.1} parent=1 // pred_check
      _
    $region27: #{_seq2seq_apply.1} parent=1 // pred_check_branch
      %34 = sbr.rel (0) target = $region29
    $region28: #{_seq2seq_apply.1} parent=1 // pred_region
      _
    $region29: #{_seq2seq_apply.1} parent=1 // pred_fallthru
      _
    // Predicated region
    $region30: #{_seq2seq_apply.1} parent=1 // pred_check
      _
    $region31: #{_seq2seq_apply.1} parent=1 // pred_check_branch
      %36 = sbr.rel (0) target = $region33
    $region32: #{_seq2seq_apply.1} parent=1 // pred_region
      %37 = dma.done [#allocation3], 16
    $region33: #{_seq2seq_apply.1} parent=1 // pred_fallthru
      _
    %38 = sfence
    %v39 = vld [vmem:[%s3] sm:$0xff]
    %v40 = vld [vmem:[%s3 + $0x8] sm:$0xff]
    %v41 = vld [vmem:[%s3 + $0x10] sm:$0xff]
    %v42 = vld [vmem:[%s3 + $0x18] sm:$0xff]
    %v43 = vld [vmem:[%s4] sm:$0xff]
    %v44 = vld [vmem:[%s4 + $0x8] sm:$0xff]
    %v45 = vld [vmem:[%s4 + $0x10] sm:$0xff]
    %v46 = vld [vmem:[%s4 + $0x18] sm:$0xff]
    %v47 = vld [vmem:[%s4 + $0x20] sm:$0xff]
    %v48 = vld [vmem:[%s4 + $0x28] sm:$0xff]
    %v49 = vld [vmem:[%s4 + $0x30] sm:$0xff]
    %v50 = vld [vmem:[%s4 + $0x38] sm:$0xff]
    %v51 = vld [vmem:[%s5] sm:$0x1]
    %v53 = vlaneseq
    %v54 = vshrl.u32 %v53, 7
    %v55 = vsub.s32 0, %v54
    %v56 = vrot.slane %v51, %v55
    %v58 = vld [vmem:[%s6] sm:$0xff]
    %v59 = vld [vmem:[%s6 + $0x8] sm:$0xff]
    %v60 = vld [vmem:[%s6 + $0x10] sm:$0xff]
    %v61 = vld [vmem:[%s6 + $0x18] sm:$0xff]
    %v62 = vld [vmem:[%s6 + $0x20] sm:$0xff]
    %v63 = vld [vmem:[%s6 + $0x28] sm:$0xff]
    %v64 = vld [vmem:[%s6 + $0x30] sm:$0xff]
    %v65 = vld [vmem:[%s6 + $0x38] sm:$0xff]
    %v66 = vld [vmem:[%s6 + $0x40] sm:$0xff]
    %v67 = vld [vmem:[%s6 + $0x48] sm:$0xff]
    %v68 = vld [vmem:[%s6 + $0x50] sm:$0xff]
    %v69 = vld [vmem:[%s6 + $0x58] sm:$0xff]
    %v70 = vld [vmem:[%s6 + $0x60] sm:$0xff]
    %v71 = vld [vmem:[%s6 + $0x68] sm:$0xff]
    %v72 = vld [vmem:[%s6 + $0x70] sm:$0xff]
    %v73 = vld [vmem:[%s6 + $0x78] sm:$0xff]
    %v74 = vlaneseq
    %v75 = vand.u32 %v74, 127
    %v76 = vld [vmem:[%s1] sm:$0xff]
    %vm77 = vcmask 261120
    %v79 = vsel %vm77, 0.0, 0
    %81 = vmatprep.subr.mxu0 0.0
    %82 = vmatpush1.msra.mxu0 0.0
    %83 = vmatprep.subr.mxu0 0.0
    %84 = vmatpush1.msra.mxu0 0.0
    %85 = vmatprep.subr.mxu0 0.0
    %86 = vmatpush1.msra.mxu0 0.0
    %87 = vmatprep.subr.mxu0 0.0
    %88 = vmatpush1.msra.mxu0 0.0
    %89 = vmatprep.subr.mxu0 0.0
    %90 = vmatpush1.msra.mxu0 0.0
    %91 = vmatprep.subr.mxu0 0.0
    %92 = vmatpush1.msra.mxu0 0.0
    %93 = vmatprep.subr.mxu0 0.0
    %94 = vmatpush1.msra.mxu0 0.0
    %95 = vmatprep.subr.mxu0 0.0
    %96 = vmatpush1.msra.mxu0 0.0
    %97 = vmatprep.subr.mxu0 0.0
    %98 = vmatpush1.msra.mxu0 0.0
    %99 = vmatprep.subr.mxu0 0.0
    %100 = vmatpush1.msra.mxu0 0.0
    %101 = vmatprep.subr.mxu0 0.0
    %102 = vmatpush1.msra.mxu0 0.0
    %103 = vmatprep.subr.mxu0 0.0
    %104 = vmatpush1.msra.mxu0 0.0
    %105 = vmatprep.subr.mxu0 0.0
    %106 = vmatpush1.msra.mxu0 %v42
    %107 = vmatprep.subr.mxu0 0.0
    %108 = vmatpush1.msra.mxu0 %v41
    %109 = vmatprep.subr.mxu0 0.0
    %110 = vmatpush1.msra.mxu0 %v40
    %111 = vmatprep.subr.mxu0 0.0
    %112 = vmatpush1.msra.mxu0 %v39
    %113 = vmatprep.subr.mxu0 0.0
    %114 = vmatpush2.msra.mxu0 0.0
    %115 = vmatprep.subr.mxu0 0.0
    %116 = vmatpush2.msra.mxu0 0.0
    %117 = vmatprep.subr.mxu0 0.0
    %118 = vmatpush2.msra.mxu0 0.0
    %119 = vmatprep.subr.mxu0 0.0
    %120 = vmatpush2.msra.mxu0 0.0
    %121 = vmatprep.subr.mxu0 0.0
    %122 = vmatpush2.msra.mxu0 0.0
    %123 = vmatprep.subr.mxu0 0.0
    %124 = vmatpush2.msra.mxu0 0.0
    %125 = vmatprep.subr.mxu0 0.0
    %126 = vmatpush2.msra.mxu0 0.0
    %127 = vmatprep.subr.mxu0 0.0
    %128 = vmatpush2.msra.mxu0 0.0
    %129 = vmatprep.subr.mxu0 0.0
    %130 = vmatpush2.msra.mxu0 0.0
    %131 = vmatprep.subr.mxu0 0.0
    %132 = vmatpush2.msra.mxu0 0.0
    %133 = vmatprep.subr.mxu0 0.0
    %134 = vmatpush2.msra.mxu0 0.0
    %135 = vmatprep.subr.mxu0 0.0
    %136 = vmatpush2.msra.mxu0 0.0
    %137 = vmatprep.subr.mxu0 0.0
    %138 = vmatpush2.msra.mxu0 0.0
    %139 = vmatprep.subr.mxu0 0.0
    %140 = vmatpush2.msra.mxu0 0.0
    %141 = vmatprep.subr.mxu0 0.0
    %142 = vmatpush2.msra.mxu0 0.0
    %143 = vmatprep.subr.mxu0 0.0
    %144 = vmatpush2.msra.mxu0 0.0
    %145 = vmatprep.mubr.f32.mxu0 0.0
    %146 = vmatmul.mubr.f32.gmra.mxu0 %v79
    %v147 = vpop.f32.mrf.mxu0
    %v148 = vadd.f32 0.0, %v147
    %v149 = vpop.f32.mrf.mxu0
    %150 = vdwg.mxu0
    %v151 = vadd.f32 %v76, %v148
    %v152 = vxor.u32 %v151, 2147483648
    %v153 = vmul.f32 %v152, 1.442695
    %v154 = vpow.pop %v153
    %v155 = vadd.f32 %v154, 1.0
    %v156 = vrcp.pop %v155
    %v157 = vmul.f32 1.0, %v156
    %v158 = vtanh.pop %v151
    %v159 = vmul.f32 %v157, 0.0
    %161 = vrot.lane.b32.xlu0 %v158, 64
    %v162 = vpop.permute.xlu0 %161
    %v164 = vmul.f32 %v157, %v162
    %166 = vrot.lane.b32.xlu0 %v164, 32
    %v167 = vpop.permute.xlu0 %166
    %v169 = vadd.f32 %v159, %v167
    %v170 = vtanh.pop %v169
    %172 = vrot.lane.b32.xlu0 %v170, 64
    %v173 = vpop.permute.xlu0 %172
    %v175 = vmul.f32 %v157, %v173
    %s176 = scalar_lea.vmem %s1, 8
    %v177 = vld [vmem:[%s176] sm:$0xff]
    %179 = vrot.lane.b32.xlu0 %v175, 32
    %v180 = vpop.permute.xlu0 %179
    %v181 = vsel %vm77, %v180, 0
    %183 = vmatprep.subr.mxu0 0.0
    %184 = vmatpush1.msra.mxu0 0.0
    %185 = vmatprep.subr.mxu0 0.0
    %186 = vmatpush1.msra.mxu0 0.0
    %187 = vmatprep.subr.mxu0 0.0
    %188 = vmatpush1.msra.mxu0 0.0
    %189 = vmatprep.subr.mxu0 0.0
    %190 = vmatpush1.msra.mxu0 0.0
    %191 = vmatprep.subr.mxu0 0.0
    %192 = vmatpush1.msra.mxu0 0.0
    %193 = vmatprep.subr.mxu0 0.0
    %194 = vmatpush1.msra.mxu0 0.0
    %195 = vmatprep.subr.mxu0 0.0
    %196 = vmatpush1.msra.mxu0 0.0
    %197 = vmatprep.subr.mxu0 0.0
    %198 = vmatpush1.msra.mxu0 0.0
    %199 = vmatprep.subr.mxu0 0.0
    %200 = vmatpush1.msra.mxu0 0.0
    %201 = vmatprep.subr.mxu0 0.0
    %202 = vmatpush1.msra.mxu0 0.0
    %203 = vmatprep.subr.mxu0 0.0
    %204 = vmatpush1.msra.mxu0 0.0
    %205 = vmatprep.subr.mxu0 0.0
    %206 = vmatpush1.msra.mxu0 0.0
    %207 = vmatprep.subr.mxu0 0.0
    %208 = vmatpush1.msra.mxu0 %v42
    %209 = vmatprep.subr.mxu0 0.0
    %210 = vmatpush1.msra.mxu0 %v41
    %211 = vmatprep.subr.mxu0 0.0
    %212 = vmatpush1.msra.mxu0 %v40
    %213 = vmatprep.subr.mxu0 0.0
    %214 = vmatpush1.msra.mxu0 %v39
    %215 = vmatprep.subr.mxu0 0.0
    %216 = vmatpush2.msra.mxu0 0.0
    %217 = vmatprep.subr.mxu0 0.0
    %218 = vmatpush2.msra.mxu0 0.0
    %219 = vmatprep.subr.mxu0 0.0
    %220 = vmatpush2.msra.mxu0 0.0
    %221 = vmatprep.subr.mxu0 0.0
    %222 = vmatpush2.msra.mxu0 0.0
    %223 = vmatprep.subr.mxu0 0.0
    %224 = vmatpush2.msra.mxu0 0.0
    %225 = vmatprep.subr.mxu0 0.0
    %226 = vmatpush2.msra.mxu0 0.0
    %227 = vmatprep.subr.mxu0 0.0
    %228 = vmatpush2.msra.mxu0 0.0
    %229 = vmatprep.subr.mxu0 0.0
    %230 = vmatpush2.msra.mxu0 0.0
    %231 = vmatprep.subr.mxu0 0.0
    %232 = vmatpush2.msra.mxu0 0.0
    %233 = vmatprep.subr.mxu0 0.0
    %234 = vmatpush2.msra.mxu0 0.0
    %235 = vmatprep.subr.mxu0 0.0
    %236 = vmatpush2.msra.mxu0 0.0
    %237 = vmatprep.subr.mxu0 0.0
    %238 = vmatpush2.msra.mxu0 0.0
    %239 = vmatprep.subr.mxu0 0.0
    %240 = vmatpush2.msra.mxu0 0.0
    %241 = vmatprep.subr.mxu0 0.0
    %242 = vmatpush2.msra.mxu0 0.0
    %243 = vmatprep.subr.mxu0 0.0
    %244 = vmatpush2.msra.mxu0 0.0
    %245 = vmatprep.subr.mxu0 0.0
    %246 = vmatpush2.msra.mxu0 0.0
    %247 = vmatprep.mubr.f32.mxu0 0.0
    %248 = vmatmul.mubr.f32.gmra.mxu0 %v181
    %v249 = vpop.f32.mrf.mxu0
    %v250 = vadd.f32 0.0, %v249
    %v251 = vpop.f32.mrf.mxu0
    %252 = vdwg.mxu0
    %v253 = vadd.f32 %v177, %v250
    %v254 = vxor.u32 %v253, 2147483648
    %v255 = vmul.f32 %v254, 1.442695
    %v256 = vpow.pop %v255
    %v257 = vadd.f32 %v256, 1.0
    %v258 = vrcp.pop %v257
    %v259 = vmul.f32 1.0, %v258
    %v260 = vtanh.pop %v253
    %v261 = vmul.f32 %v259, %v169
    %263 = vrot.lane.b32.xlu0 %v260, 64
    %v264 = vpop.permute.xlu0 %263
    %v266 = vmul.f32 %v259, %v264
    %268 = vrot.lane.b32.xlu0 %v266, 32
    %v269 = vpop.permute.xlu0 %268
    %v271 = vadd.f32 %v261, %v269
    %v272 = vtanh.pop %v271
    %274 = vrot.lane.b32.xlu0 %v272, 64
    %v275 = vpop.permute.xlu0 %274
    %v277 = vmul.f32 %v259, %v275
    %s278 = scalar_lea.vmem %s1, 16
    %v279 = vld [vmem:[%s278] sm:$0xff]
    %281 = vrot.lane.b32.xlu0 %v277, 32
    %v282 = vpop.permute.xlu0 %281
    %v283 = vsel %vm77, %v282, 0
    %285 = vmatprep.subr.mxu0 0.0
    %286 = vmatpush1.msra.mxu0 0.0
    %287 = vmatprep.subr.mxu0 0.0
    %288 = vmatpush1.msra.mxu0 0.0
    %289 = vmatprep.subr.mxu0 0.0
    %290 = vmatpush1.msra.mxu0 0.0
    %291 = vmatprep.subr.mxu0 0.0
    %292 = vmatpush1.msra.mxu0 0.0
    %293 = vmatprep.subr.mxu0 0.0
    %294 = vmatpush1.msra.mxu0 0.0
    %295 = vmatprep.subr.mxu0 0.0
    %296 = vmatpush1.msra.mxu0 0.0
    %297 = vmatprep.subr.mxu0 0.0
    %298 = vmatpush1.msra.mxu0 0.0
    %299 = vmatprep.subr.mxu0 0.0
    %300 = vmatpush1.msra.mxu0 0.0
    %301 = vmatprep.subr.mxu0 0.0
    %302 = vmatpush1.msra.mxu0 0.0
    %303 = vmatprep.subr.mxu0 0.0
    %304 = vmatpush1.msra.mxu0 0.0
    %305 = vmatprep.subr.mxu0 0.0
    %306 = vmatpush1.msra.mxu0 0.0
    %307 = vmatprep.subr.mxu0 0.0
    %308 = vmatpush1.msra.mxu0 0.0
    %309 = vmatprep.subr.mxu0 0.0
    %310 = vmatpush1.msra.mxu0 %v42
    %311 = vmatprep.subr.mxu0 0.0
    %312 = vmatpush1.msra.mxu0 %v41
    %313 = vmatprep.subr.mxu0 0.0
    %314 = vmatpush1.msra.mxu0 %v40
    %315 = vmatprep.subr.mxu0 0.0
    %316 = vmatpush1.msra.mxu0 %v39
    %317 = vmatprep.subr.mxu0 0.0
    %318 = vmatpush2.msra.mxu0 0.0
    %319 = vmatprep.subr.mxu0 0.0
    %320 = vmatpush2.msra.mxu0 0.0
    %321 = vmatprep.subr.mxu0 0.0
    %322 = vmatpush2.msra.mxu0 0.0
    %323 = vmatprep.subr.mxu0 0.0
    %324 = vmatpush2.msra.mxu0 0.0
    %325 = vmatprep.subr.mxu0 0.0
    %326 = vmatpush2.msra.mxu0 0.0
    %327 = vmatprep.subr.mxu0 0.0
    %328 = vmatpush2.msra.mxu0 0.0
    %329 = vmatprep.subr.mxu0 0.0
    %330 = vmatpush2.msra.mxu0 0.0
    %331 = vmatprep.subr.mxu0 0.0
    %332 = vmatpush2.msra.mxu0 0.0
    %333 = vmatprep.subr.mxu0 0.0
    %334 = vmatpush2.msra.mxu0 0.0
    %335 = vmatprep.subr.mxu0 0.0
    %336 = vmatpush2.msra.mxu0 0.0
    %337 = vmatprep.subr.mxu0 0.0
    %338 = vmatpush2.msra.mxu0 0.0
    %339 = vmatprep.subr.mxu0 0.0
    %340 = vmatpush2.msra.mxu0 0.0
    %341 = vmatprep.subr.mxu0 0.0
    %342 = vmatpush2.msra.mxu0 0.0
    %343 = vmatprep.subr.mxu0 0.0
    %344 = vmatpush2.msra.mxu0 0.0
    %345 = vmatprep.subr.mxu0 0.0
    %346 = vmatpush2.msra.mxu0 0.0
    %347 = vmatprep.subr.mxu0 0.0
    %348 = vmatpush2.msra.mxu0 0.0
    %349 = vmatprep.mubr.f32.mxu0 0.0
    %350 = vmatmul.mubr.f32.gmra.mxu0 %v283
    %v351 = vpop.f32.mrf.mxu0
    %v352 = vadd.f32 0.0, %v351
    %v353 = vpop.f32.mrf.mxu0
    %354 = vdwg.mxu0
    %v355 = vadd.f32 %v279, %v352
    %v356 = vxor.u32 %v355, 2147483648
    %v357 = vmul.f32 %v356, 1.442695
    %v358 = vpow.pop %v357
    %v359 = vadd.f32 %v358, 1.0
    %v360 = vrcp.pop %v359
    %v361 = vmul.f32 1.0, %v360
    %v362 = vtanh.pop %v355
    %v363 = vmul.f32 %v361, %v271
    %365 = vrot.lane.b32.xlu0 %v362, 64
    %v366 = vpop.permute.xlu0 %365
    %v368 = vmul.f32 %v361, %v366
    %370 = vrot.lane.b32.xlu0 %v368, 32
    %v371 = vpop.permute.xlu0 %370
    %v373 = vadd.f32 %v363, %v371
    %v374 = vtanh.pop %v373
    %376 = vrot.lane.b32.xlu0 %v374, 64
    %v377 = vpop.permute.xlu0 %376
    %v379 = vmul.f32 %v361, %v377
    %s380 = scalar_lea.vmem %s1, 24
    %v381 = vld [vmem:[%s380] sm:$0xff]
    %383 = vrot.lane.b32.xlu0 %v379, 32
    %v384 = vpop.permute.xlu0 %383
    %v385 = vsel %vm77, %v384, 0
    %387 = vmatprep.subr.mxu0 0.0
    %388 = vmatpush1.msra.mxu0 0.0
    %389 = vmatprep.subr.mxu0 0.0
    %390 = vmatpush1.msra.mxu0 0.0
    %391 = vmatprep.subr.mxu0 0.0
    %392 = vmatpush1.msra.mxu0 0.0
    %393 = vmatprep.subr.mxu0 0.0
    %394 = vmatpush1.msra.mxu0 0.0
    %395 = vmatprep.subr.mxu0 0.0
    %396 = vmatpush1.msra.mxu0 0.0
    %397 = vmatprep.subr.mxu0 0.0
    %398 = vmatpush1.msra.mxu0 0.0
    %399 = vmatprep.subr.mxu0 0.0
    %400 = vmatpush1.msra.mxu0 0.0
    %401 = vmatprep.subr.mxu0 0.0
    %402 = vmatpush1.msra.mxu0 0.0
    %403 = vmatprep.subr.mxu0 0.0
    %404 = vmatpush1.msra.mxu0 0.0
    %405 = vmatprep.subr.mxu0 0.0
    %406 = vmatpush1.msra.mxu0 0.0
    %407 = vmatprep.subr.mxu0 0.0
    %408 = vmatpush1.msra.mxu0 0.0
    %409 = vmatprep.subr.mxu0 0.0
    %410 = vmatpush1.msra.mxu0 0.0
    %411 = vmatprep.subr.mxu0 0.0
    %412 = vmatpush1.msra.mxu0 %v42
    %413 = vmatprep.subr.mxu0 0.0
    %414 = vmatpush1.msra.mxu0 %v41
    %415 = vmatprep.subr.mxu0 0.0
    %416 = vmatpush1.msra.mxu0 %v40
    %417 = vmatprep.subr.mxu0 0.0
    %418 = vmatpush1.msra.mxu0 %v39
    %419 = vmatprep.subr.mxu0 0.0
    %420 = vmatpush2.msra.mxu0 0.0
    %421 = vmatprep.subr.mxu0 0.0
    %422 = vmatpush2.msra.mxu0 0.0
    %423 = vmatprep.subr.mxu0 0.0
    %424 = vmatpush2.msra.mxu0 0.0
    %425 = vmatprep.subr.mxu0 0.0
    %426 = vmatpush2.msra.mxu0 0.0
    %427 = vmatprep.subr.mxu0 0.0
    %428 = vmatpush2.msra.mxu0 0.0
    %429 = vmatprep.subr.mxu0 0.0
    %430 = vmatpush2.msra.mxu0 0.0
    %431 = vmatprep.subr.mxu0 0.0
    %432 = vmatpush2.msra.mxu0 0.0
    %433 = vmatprep.subr.mxu0 0.0
    %434 = vmatpush2.msra.mxu0 0.0
    %435 = vmatprep.subr.mxu0 0.0
    %436 = vmatpush2.msra.mxu0 0.0
    %437 = vmatprep.subr.mxu0 0.0
    %438 = vmatpush2.msra.mxu0 0.0
    %439 = vmatprep.subr.mxu0 0.0
    %440 = vmatpush2.msra.mxu0 0.0
    %441 = vmatprep.subr.mxu0 0.0
    %442 = vmatpush2.msra.mxu0 0.0
    %443 = vmatprep.subr.mxu0 0.0
    %444 = vmatpush2.msra.mxu0 0.0
    %445 = vmatprep.subr.mxu0 0.0
    %446 = vmatpush2.msra.mxu0 0.0
    %447 = vmatprep.subr.mxu0 0.0
    %448 = vmatpush2.msra.mxu0 0.0
    %449 = vmatprep.subr.mxu0 0.0
    %450 = vmatpush2.msra.mxu0 0.0
    %451 = vmatprep.mubr.f32.mxu0 0.0
    %452 = vmatmul.mubr.f32.gmra.mxu0 %v385
    %v453 = vpop.f32.mrf.mxu0
    %v454 = vadd.f32 0.0, %v453
    %v455 = vpop.f32.mrf.mxu0
    %456 = vdwg.mxu0
    %v457 = vadd.f32 %v381, %v454
    %v458 = vxor.u32 %v457, 2147483648
    %v459 = vmul.f32 %v458, 1.442695
    %v460 = vpow.pop %v459
    %v461 = vadd.f32 %v460, 1.0
    %v462 = vrcp.pop %v461
    %v463 = vmul.f32 1.0, %v462
    %v464 = vtanh.pop %v457
    %v465 = vmul.f32 %v463, %v373
    %467 = vrot.lane.b32.xlu0 %v464, 64
    %v468 = vpop.permute.xlu0 %467
    %v470 = vmul.f32 %v463, %v468
    %472 = vrot.lane.b32.xlu0 %v470, 32
    %v473 = vpop.permute.xlu0 %472
    %v475 = vadd.f32 %v465, %v473
    %v476 = vtanh.pop %v475
    %478 = vrot.lane.b32.xlu0 %v476, 64
    %v479 = vpop.permute.xlu0 %478
    %v481 = vmul.f32 %v463, %v479
    %s482 = scalar_lea.vmem %s1, 32
    %v483 = vld [vmem:[%s482] sm:$0xff]
    %485 = vrot.lane.b32.xlu0 %v481, 32
    %v486 = vpop.permute.xlu0 %485
    %v487 = vsel %vm77, %v486, 0
    %489 = vmatprep.subr.mxu0 0.0
    %490 = vmatpush1.msra.mxu0 0.0
    %491 = vmatprep.subr.mxu0 0.0
    %492 = vmatpush1.msra.mxu0 0.0
    %493 = vmatprep.subr.mxu0 0.0
    %494 = vmatpush1.msra.mxu0 0.0
    %495 = vmatprep.subr.mxu0 0.0
    %496 = vmatpush1.msra.mxu0 0.0
    %497 = vmatprep.subr.mxu0 0.0
    %498 = vmatpush1.msra.mxu0 0.0
    %499 = vmatprep.subr.mxu0 0.0
    %500 = vmatpush1.msra.mxu0 0.0
    %501 = vmatprep.subr.mxu0 0.0
    %502 = vmatpush1.msra.mxu0 0.0
    %503 = vmatprep.subr.mxu0 0.0
    %504 = vmatpush1.msra.mxu0 0.0
    %505 = vmatprep.subr.mxu0 0.0
    %506 = vmatpush1.msra.mxu0 0.0
    %507 = vmatprep.subr.mxu0 0.0
    %508 = vmatpush1.msra.mxu0 0.0
    %509 = vmatprep.subr.mxu0 0.0
    %510 = vmatpush1.msra.mxu0 0.0
    %511 = vmatprep.subr.mxu0 0.0
    %512 = vmatpush1.msra.mxu0 0.0
    %513 = vmatprep.subr.mxu0 0.0
    %514 = vmatpush1.msra.mxu0 %v42
    %515 = vmatprep.subr.mxu0 0.0
    %516 = vmatpush1.msra.mxu0 %v41
    %517 = vmatprep.subr.mxu0 0.0
    %518 = vmatpush1.msra.mxu0 %v40
    %519 = vmatprep.subr.mxu0 0.0
    %520 = vmatpush1.msra.mxu0 %v39
    %521 = vmatprep.subr.mxu0 0.0
    %522 = vmatpush2.msra.mxu0 0.0
    %523 = vmatprep.subr.mxu0 0.0
    %524 = vmatpush2.msra.mxu0 0.0
    %525 = vmatprep.subr.mxu0 0.0
    %526 = vmatpush2.msra.mxu0 0.0
    %527 = vmatprep.subr.mxu0 0.0
    %528 = vmatpush2.msra.mxu0 0.0
    %529 = vmatprep.subr.mxu0 0.0
    %530 = vmatpush2.msra.mxu0 0.0
    %531 = vmatprep.subr.mxu0 0.0
    %532 = vmatpush2.msra.mxu0 0.0
    %533 = vmatprep.subr.mxu0 0.0
    %534 = vmatpush2.msra.mxu0 0.0
    %535 = vmatprep.subr.mxu0 0.0
    %536 = vmatpush2.msra.mxu0 0.0
    %537 = vmatprep.subr.mxu0 0.0
    %538 = vmatpush2.msra.mxu0 0.0
    %539 = vmatprep.subr.mxu0 0.0
    %540 = vmatpush2.msra.mxu0 0.0
    %541 = vmatprep.subr.mxu0 0.0
    %542 = vmatpush2.msra.mxu0 0.0
    %543 = vmatprep.subr.mxu0 0.0
    %544 = vmatpush2.msra.mxu0 0.0
    %545 = vmatprep.subr.mxu0 0.0
    %546 = vmatpush2.msra.mxu0 0.0
    %547 = vmatprep.subr.mxu0 0.0
    %548 = vmatpush2.msra.mxu0 0.0
    %549 = vmatprep.subr.mxu0 0.0
    %550 = vmatpush2.msra.mxu0 0.0
    %551 = vmatprep.subr.mxu0 0.0
    %552 = vmatpush2.msra.mxu0 0.0
    %553 = vmatprep.mubr.f32.mxu0 0.0
    %554 = vmatmul.mubr.f32.gmra.mxu0 %v487
    %v555 = vpop.f32.mrf.mxu0
    %v556 = vadd.f32 0.0, %v555
    %v557 = vpop.f32.mrf.mxu0
    %558 = vdwg.mxu0
    %v559 = vadd.f32 %v483, %v556
    %v560 = vxor.u32 %v559, 2147483648
    %v561 = vmul.f32 %v560, 1.442695
    %v562 = vpow.pop %v561
    %v563 = vadd.f32 %v562, 1.0
    %v564 = vrcp.pop %v563
    %v565 = vmul.f32 1.0, %v564
    %v566 = vtanh.pop %v559
    %v567 = vmul.f32 %v565, %v475
    %569 = vrot.lane.b32.xlu0 %v566, 64
    %v570 = vpop.permute.xlu0 %569
    %v572 = vmul.f32 %v565, %v570
    %574 = vrot.lane.b32.xlu0 %v572, 32
    %v575 = vpop.permute.xlu0 %574
    %v577 = vadd.f32 %v567, %v575
    %v578 = vtanh.pop %v577
    %580 = vrot.lane.b32.xlu0 %v578, 64
    %v581 = vpop.permute.xlu0 %580
    %v583 = vmul.f32 %v565, %v581
    %s584 = scalar_lea.vmem %s1, 40
    %v585 = vld [vmem:[%s584] sm:$0xff]
    %587 = vrot.lane.b32.xlu0 %v583, 32
    %v588 = vpop.permute.xlu0 %587
    %v589 = vsel %vm77, %v588, 0
    %591 = vmatprep.subr.mxu0 0.0
    %592 = vmatpush1.msra.mxu0 0.0
    %593 = vmatprep.subr.mxu0 0.0
    %594 = vmatpush1.msra.mxu0 0.0
    %595 = vmatprep.subr.mxu0 0.0
    %596 = vmatpush1.msra.mxu0 0.0
    %597 = vmatprep.subr.mxu0 0.0
    %598 = vmatpush1.msra.mxu0 0.0
    %599 = vmatprep.subr.mxu0 0.0
    %600 = vmatpush1.msra.mxu0 0.0
    %601 = vmatprep.subr.mxu0 0.0
    %602 = vmatpush1.msra.mxu0 0.0
    %603 = vmatprep.subr.mxu0 0.0
    %604 = vmatpush1.msra.mxu0 0.0
    %605 = vmatprep.subr.mxu0 0.0
    %606 = vmatpush1.msra.mxu0 0.0
    %607 = vmatprep.subr.mxu0 0.0
    %608 = vmatpush1.msra.mxu0 0.0
    %609 = vmatprep.subr.mxu0 0.0
    %610 = vmatpush1.msra.mxu0 0.0
    %611 = vmatprep.subr.mxu0 0.0
    %612 = vmatpush1.msra.mxu0 0.0
    %613 = vmatprep.subr.mxu0 0.0
    %614 = vmatpush1.msra.mxu0 0.0
    %615 = vmatprep.subr.mxu0 0.0
    %616 = vmatpush1.msra.mxu0 %v42
    %617 = vmatprep.subr.mxu0 0.0
    %618 = vmatpush1.msra.mxu0 %v41
    %619 = vmatprep.subr.mxu0 0.0
    %620 = vmatpush1.msra.mxu0 %v40
    %621 = vmatprep.subr.mxu0 0.0
    %622 = vmatpush1.msra.mxu0 %v39
    %623 = vmatprep.subr.mxu0 0.0
    %624 = vmatpush2.msra.mxu0 0.0
    %625 = vmatprep.subr.mxu0 0.0
    %626 = vmatpush2.msra.mxu0 0.0
    %627 = vmatprep.subr.mxu0 0.0
    %628 = vmatpush2.msra.mxu0 0.0
    %629 = vmatprep.subr.mxu0 0.0
    %630 = vmatpush2.msra.mxu0 0.0
    %631 = vmatprep.subr.mxu0 0.0
    %632 = vmatpush2.msra.mxu0 0.0
    %633 = vmatprep.subr.mxu0 0.0
    %634 = vmatpush2.msra.mxu0 0.0
    %635 = vmatprep.subr.mxu0 0.0
    %636 = vmatpush2.msra.mxu0 0.0
    %637 = vmatprep.subr.mxu0 0.0
    %638 = vmatpush2.msra.mxu0 0.0
    %639 = vmatprep.subr.mxu0 0.0
    %640 = vmatpush2.msra.mxu0 0.0
    %641 = vmatprep.subr.mxu0 0.0
    %642 = vmatpush2.msra.mxu0 0.0
    %643 = vmatprep.subr.mxu0 0.0
    %644 = vmatpush2.msra.mxu0 0.0
    %645 = vmatprep.subr.mxu0 0.0
    %646 = vmatpush2.msra.mxu0 0.0
    %647 = vmatprep.subr.mxu0 0.0
    %648 = vmatpush2.msra.mxu0 0.0
    %649 = vmatprep.subr.mxu0 0.0
    %650 = vmatpush2.msra.mxu0 0.0
    %651 = vmatprep.subr.mxu0 0.0
    %652 = vmatpush2.msra.mxu0 0.0
    %653 = vmatprep.subr.mxu0 0.0
    %654 = vmatpush2.msra.mxu0 0.0
    %655 = vmatprep.mubr.f32.mxu0 0.0
    %656 = vmatmul.mubr.f32.gmra.mxu0 %v589
    %v657 = vpop.f32.mrf.mxu0
    %v658 = vadd.f32 0.0, %v657
    %v659 = vpop.f32.mrf.mxu0
    %660 = vdwg.mxu0
    %v661 = vadd.f32 %v585, %v658
    %v662 = vxor.u32 %v661, 2147483648
    %v663 = vmul.f32 %v662, 1.442695
    %v664 = vpow.pop %v663
    %v665 = vadd.f32 %v664, 1.0
    %v666 = vrcp.pop %v665
    %v667 = vmul.f32 1.0, %v666
    %v668 = vtanh.pop %v661
    %v669 = vmul.f32 %v667, %v577
    %671 = vrot.lane.b32.xlu0 %v668, 64
    %v672 = vpop.permute.xlu0 %671
    %v674 = vmul.f32 %v667, %v672
    %676 = vrot.lane.b32.xlu0 %v674, 32
    %v677 = vpop.permute.xlu0 %676
    %v679 = vadd.f32 %v669, %v677
    %v680 = vtanh.pop %v679
    %682 = vrot.lane.b32.xlu0 %v680, 64
    %v683 = vpop.permute.xlu0 %682
    %v685 = vmul.f32 %v667, %v683
    %s686 = scalar_lea.vmem %s1, 48
    %v687 = vld [vmem:[%s686] sm:$0xff]
    %689 = vrot.lane.b32.xlu0 %v685, 32
    %v690 = vpop.permute.xlu0 %689
    %v691 = vsel %vm77, %v690, 0
    %693 = vmatprep.subr.mxu0 0.0
    %694 = vmatpush1.msra.mxu0 0.0
    %695 = vmatprep.subr.mxu0 0.0
    %696 = vmatpush1.msra.mxu0 0.0
    %697 = vmatprep.subr.mxu0 0.0
    %698 = vmatpush1.msra.mxu0 0.0
    %699 = vmatprep.subr.mxu0 0.0
    %700 = vmatpush1.msra.mxu0 0.0
    %701 = vmatprep.subr.mxu0 0.0
    %702 = vmatpush1.msra.mxu0 0.0
    %703 = vmatprep.subr.mxu0 0.0
    %704 = vmatpush1.msra.mxu0 0.0
    %705 = vmatprep.subr.mxu0 0.0
    %706 = vmatpush1.msra.mxu0 0.0
    %707 = vmatprep.subr.mxu0 0.0
    %708 = vmatpush1.msra.mxu0 0.0
    %709 = vmatprep.subr.mxu0 0.0
    %710 = vmatpush1.msra.mxu0 0.0
    %711 = vmatprep.subr.mxu0 0.0
    %712 = vmatpush1.msra.mxu0 0.0
    %713 = vmatprep.subr.mxu0 0.0
    %714 = vmatpush1.msra.mxu0 0.0
    %715 = vmatprep.subr.mxu0 0.0
    %716 = vmatpush1.msra.mxu0 0.0
    %717 = vmatprep.subr.mxu0 0.0
    %718 = vmatpush1.msra.mxu0 %v42
    %719 = vmatprep.subr.mxu0 0.0
    %720 = vmatpush1.msra.mxu0 %v41
    %721 = vmatprep.subr.mxu0 0.0
    %722 = vmatpush1.msra.mxu0 %v40
    %723 = vmatprep.subr.mxu0 0.0
    %724 = vmatpush1.msra.mxu0 %v39
    %725 = vmatprep.subr.mxu0 0.0
    %726 = vmatpush2.msra.mxu0 0.0
    %727 = vmatprep.subr.mxu0 0.0
    %728 = vmatpush2.msra.mxu0 0.0
    %729 = vmatprep.subr.mxu0 0.0
    %730 = vmatpush2.msra.mxu0 0.0
    %731 = vmatprep.subr.mxu0 0.0
    %732 = vmatpush2.msra.mxu0 0.0
    %733 = vmatprep.subr.mxu0 0.0
    %734 = vmatpush2.msra.mxu0 0.0
    %735 = vmatprep.subr.mxu0 0.0
    %736 = vmatpush2.msra.mxu0 0.0
    %737 = vmatprep.subr.mxu0 0.0
    %738 = vmatpush2.msra.mxu0 0.0
    %739 = vmatprep.subr.mxu0 0.0
    %740 = vmatpush2.msra.mxu0 0.0
    %741 = vmatprep.subr.mxu0 0.0
    %742 = vmatpush2.msra.mxu0 0.0
    %743 = vmatprep.subr.mxu0 0.0
    %744 = vmatpush2.msra.mxu0 0.0
    %745 = vmatprep.subr.mxu0 0.0
    %746 = vmatpush2.msra.mxu0 0.0
    %747 = vmatprep.subr.mxu0 0.0
    %748 = vmatpush2.msra.mxu0 0.0
    %749 = vmatprep.subr.mxu0 0.0
    %750 = vmatpush2.msra.mxu0 0.0
    %751 = vmatprep.subr.mxu0 0.0
    %752 = vmatpush2.msra.mxu0 0.0
    %753 = vmatprep.subr.mxu0 0.0
    %754 = vmatpush2.msra.mxu0 0.0
    %755 = vmatprep.subr.mxu0 0.0
    %756 = vmatpush2.msra.mxu0 0.0
    %757 = vmatprep.mubr.f32.mxu0 0.0
    %758 = vmatmul.mubr.f32.gmra.mxu0 %v691
    %v759 = vpop.f32.mrf.mxu0
    %v760 = vadd.f32 0.0, %v759
    %v761 = vpop.f32.mrf.mxu0
    %762 = vdwg.mxu0
    %v763 = vadd.f32 %v687, %v760
    %v764 = vxor.u32 %v763, 2147483648
    %v765 = vmul.f32 %v764, 1.442695
    %v766 = vpow.pop %v765
    %v767 = vadd.f32 %v766, 1.0
    %v768 = vrcp.pop %v767
    %v769 = vmul.f32 1.0, %v768
    %v770 = vtanh.pop %v763
    %v771 = vmul.f32 %v769, %v679
    %773 = vrot.lane.b32.xlu0 %v770, 64
    %v774 = vpop.permute.xlu0 %773
    %v776 = vmul.f32 %v769, %v774
    %778 = vrot.lane.b32.xlu0 %v776, 32
    %v779 = vpop.permute.xlu0 %778
    %v781 = vadd.f32 %v771, %v779
    %v782 = vtanh.pop %v781
    %784 = vrot.lane.b32.xlu0 %v782, 64
    %v785 = vpop.permute.xlu0 %784
    %v787 = vmul.f32 %v769, %v785
    %s788 = scalar_lea.vmem %s1, 56
    %v789 = vld [vmem:[%s788] sm:$0xff]
    %791 = vrot.lane.b32.xlu0 %v787, 32
    %v792 = vpop.permute.xlu0 %791
    %v793 = vsel %vm77, %v792, 0
    %795 = vmatprep.subr.mxu0 0.0
    %796 = vmatpush1.msra.mxu0 0.0
    %797 = vmatprep.subr.mxu0 0.0
    %798 = vmatpush1.msra.mxu0 0.0
    %799 = vmatprep.subr.mxu0 0.0
    %800 = vmatpush1.msra.mxu0 0.0
    %801 = vmatprep.subr.mxu0 0.0
    %802 = vmatpush1.msra.mxu0 0.0
    %803 = vmatprep.subr.mxu0 0.0
    %804 = vmatpush1.msra.mxu0 0.0
    %805 = vmatprep.subr.mxu0 0.0
    %806 = vmatpush1.msra.mxu0 0.0
    %807 = vmatprep.subr.mxu0 0.0
    %808 = vmatpush1.msra.mxu0 0.0
    %809 = vmatprep.subr.mxu0 0.0
    %810 = vmatpush1.msra.mxu0 0.0
    %811 = vmatprep.subr.mxu0 0.0
    %812 = vmatpush1.msra.mxu0 0.0
    %813 = vmatprep.subr.mxu0 0.0
    %814 = vmatpush1.msra.mxu0 0.0
    %815 = vmatprep.subr.mxu0 0.0
    %816 = vmatpush1.msra.mxu0 0.0
    %817 = vmatprep.subr.mxu0 0.0
    %818 = vmatpush1.msra.mxu0 0.0
    %819 = vmatprep.subr.mxu0 0.0
    %820 = vmatpush1.msra.mxu0 %v42
    %821 = vmatprep.subr.mxu0 0.0
    %822 = vmatpush1.msra.mxu0 %v41
    %823 = vmatprep.subr.mxu0 0.0
    %824 = vmatpush1.msra.mxu0 %v40
    %825 = vmatprep.subr.mxu0 0.0
    %826 = vmatpush1.msra.mxu0 %v39
    %827 = vmatprep.subr.mxu0 0.0
    %828 = vmatpush2.msra.mxu0 0.0
    %829 = vmatprep.subr.mxu0 0.0
    %830 = vmatpush2.msra.mxu0 0.0
    %831 = vmatprep.subr.mxu0 0.0
    %832 = vmatpush2.msra.mxu0 0.0
    %833 = vmatprep.subr.mxu0 0.0
    %834 = vmatpush2.msra.mxu0 0.0
    %835 = vmatprep.subr.mxu0 0.0
    %836 = vmatpush2.msra.mxu0 0.0
    %837 = vmatprep.subr.mxu0 0.0
    %838 = vmatpush2.msra.mxu0 0.0
    %839 = vmatprep.subr.mxu0 0.0
    %840 = vmatpush2.msra.mxu0 0.0
    %841 = vmatprep.subr.mxu0 0.0
    %842 = vmatpush2.msra.mxu0 0.0
    %843 = vmatprep.subr.mxu0 0.0
    %844 = vmatpush2.msra.mxu0 0.0
    %845 = vmatprep.subr.mxu0 0.0
    %846 = vmatpush2.msra.mxu0 0.0
    %847 = vmatprep.subr.mxu0 0.0
    %848 = vmatpush2.msra.mxu0 0.0
    %849 = vmatprep.subr.mxu0 0.0
    %850 = vmatpush2.msra.mxu0 0.0
    %851 = vmatprep.subr.mxu0 0.0
    %852 = vmatpush2.msra.mxu0 0.0
    %853 = vmatprep.subr.mxu0 0.0
    %854 = vmatpush2.msra.mxu0 0.0
    %855 = vmatprep.subr.mxu0 0.0
    %856 = vmatpush2.msra.mxu0 0.0
    %857 = vmatprep.subr.mxu0 0.0
    %858 = vmatpush2.msra.mxu0 0.0
    %859 = vmatprep.mubr.f32.mxu0 0.0
    %860 = vmatmul.mubr.f32.gmra.mxu0 %v793
    %v861 = vpop.f32.mrf.mxu0
    %v862 = vadd.f32 0.0, %v861
    %v863 = vpop.f32.mrf.mxu0
    %864 = vdwg.mxu0
    %v865 = vadd.f32 %v789, %v862
    %v866 = vxor.u32 %v865, 2147483648
    %v867 = vmul.f32 %v866, 1.442695
    %v868 = vpow.pop %v867
    %v869 = vadd.f32 %v868, 1.0
    %v870 = vrcp.pop %v869
    %v871 = vmul.f32 1.0, %v870
    %v872 = vtanh.pop %v865
    %v873 = vmul.f32 %v871, %v781
    %875 = vrot.lane.b32.xlu0 %v872, 64
    %v876 = vpop.permute.xlu0 %875
    %v878 = vmul.f32 %v871, %v876
    %880 = vrot.lane.b32.xlu0 %v878, 32
    %v881 = vpop.permute.xlu0 %880
    %v883 = vadd.f32 %v873, %v881
    %v884 = vtanh.pop %v883
    %886 = vrot.lane.b32.xlu0 %v884, 64
    %v887 = vpop.permute.xlu0 %886
    %v889 = vmul.f32 %v871, %v887
    %890 = vst [vmem:[%s7] sm:$0xff] 0.0
    %892 = vrot.lane.b32.xlu0 %v889, 32
    %v893 = vpop.permute.xlu0 %892
    %v894 = vsel %vm77, %v893, 0
    %896 = vmatprep.subr.mxu0 0.0
    %897 = vmatpush1.msra.mxu0 0.0
    %898 = vmatprep.subr.mxu0 0.0
    %899 = vmatpush1.msra.mxu0 0.0
    %900 = vmatprep.subr.mxu0 0.0
    %901 = vmatpush1.msra.mxu0 0.0
    %902 = vmatprep.subr.mxu0 0.0
    %903 = vmatpush1.msra.mxu0 0.0
    %904 = vmatprep.subr.mxu0 0.0
    %905 = vmatpush1.msra.mxu0 0.0
    %906 = vmatprep.subr.mxu0 0.0
    %907 = vmatpush1.msra.mxu0 0.0
    %908 = vmatprep.subr.mxu0 0.0
    %909 = vmatpush1.msra.mxu0 0.0
    %910 = vmatprep.subr.mxu0 0.0
    %911 = vmatpush1.msra.mxu0 0.0
    %912 = vmatprep.subr.mxu0 0.0
    %913 = vmatpush1.msra.mxu0 0.0
    %914 = vmatprep.subr.mxu0 0.0
    %915 = vmatpush1.msra.mxu0 0.0
    %916 = vmatprep.subr.mxu0 0.0
    %917 = vmatpush1.msra.mxu0 0.0
    %918 = vmatprep.subr.mxu0 0.0
    %919 = vmatpush1.msra.mxu0 0.0
    %920 = vmatprep.subr.mxu0 %v50
    %921 = vmatpush1.msra.mxu0 %v49
    %922 = vmatprep.subr.mxu0 %v48
    %923 = vmatpush1.msra.mxu0 %v47
    %924 = vmatprep.subr.mxu0 %v46
    %925 = vmatpush1.msra.mxu0 %v45
    %926 = vmatprep.subr.mxu0 %v44
    %927 = vmatpush1.msra.mxu0 %v43
    %928 = vmatprep.subr.mxu0 0.0
    %929 = vmatpush2.msra.mxu0 0.0
    %930 = vmatprep.subr.mxu0 0.0
    %931 = vmatpush2.msra.mxu0 0.0
    %932 = vmatprep.subr.mxu0 0.0
    %933 = vmatpush2.msra.mxu0 0.0
    %934 = vmatprep.subr.mxu0 0.0
    %935 = vmatpush2.msra.mxu0 0.0
    %936 = vmatprep.subr.mxu0 0.0
    %937 = vmatpush2.msra.mxu0 0.0
    %938 = vmatprep.subr.mxu0 0.0
    %939 = vmatpush2.msra.mxu0 0.0
    %940 = vmatprep.subr.mxu0 0.0
    %941 = vmatpush2.msra.mxu0 0.0
    %942 = vmatprep.subr.mxu0 0.0
    %943 = vmatpush2.msra.mxu0 0.0
    %944 = vmatprep.subr.mxu0 0.0
    %945 = vmatpush2.msra.mxu0 0.0
    %946 = vmatprep.subr.mxu0 0.0
    %947 = vmatpush2.msra.mxu0 0.0
    %948 = vmatprep.subr.mxu0 0.0
    %949 = vmatpush2.msra.mxu0 0.0
    %950 = vmatprep.subr.mxu0 0.0
    %951 = vmatpush2.msra.mxu0 0.0
    %952 = vmatprep.subr.mxu0 0.0
    %953 = vmatpush2.msra.mxu0 0.0
    %954 = vmatprep.subr.mxu0 0.0
    %955 = vmatpush2.msra.mxu0 0.0
    %956 = vmatprep.subr.mxu0 0.0
    %957 = vmatpush2.msra.mxu0 0.0
    %958 = vmatprep.subr.mxu0 0.0
    %959 = vmatpush2.msra.mxu0 0.0
    %960 = vmatprep.mubr.f32.mxu0 0.0
    %961 = vmatmul.mubr.f32.gmra.mxu0 %v894
    %v962 = vpop.f32.mrf.mxu0
    %v963 = vadd.f32 0.0, %v962
    %v964 = vpop.f32.mrf.mxu0
    %965 = vdwg.mxu0
    %v966 = vld [vmem:[%s2] sm:$0xff]
    %v967 = vadd.f32 %v966, %v963
    %v968 = vxor.u32 %v967, 2147483648
    %v969 = vmul.f32 %v968, 1.442695
    %v970 = vpow.pop %v969
    %v971 = vadd.f32 %v970, 1.0
    %v972 = vrcp.pop %v971
    %v973 = vmul.f32 1.0, %v972
    %v974 = vtanh.pop %v967
    %v975 = vmul.f32 %v973, %v883
    %977 = vrot.lane.b32.xlu0 %v974, 64
    %v978 = vpop.permute.xlu0 %977
    %v980 = vmul.f32 %v973, %v978
    %982 = vrot.lane.b32.xlu0 %v980, 32
    %v983 = vpop.permute.xlu0 %982
    %v985 = vadd.f32 %v975, %v983
    %v986 = vtanh.pop %v985
    %988 = vrot.lane.b32.xlu0 %v986, 64
    %v989 = vpop.permute.xlu0 %988
    %v991 = vmul.f32 %v973, %v989
    %993 = vrot.lane.b32.xlu0 %v991, 32
    %v994 = vpop.permute.xlu0 %993
    %v995 = vsel %vm77, %v994, 0
    %997 = vmatprep.subr.mxu0 0.0
    %998 = vmatpush1.msra.mxu0 0.0
    %999 = vmatprep.subr.mxu0 0.0
    %1000 = vmatpush1.msra.mxu0 0.0
    %1001 = vmatprep.subr.mxu0 0.0
    %1002 = vmatpush1.msra.mxu0 0.0
    %1003 = vmatprep.subr.mxu0 0.0
    %1004 = vmatpush1.msra.mxu0 0.0
    %1005 = vmatprep.subr.mxu0 0.0
    %1006 = vmatpush1.msra.mxu0 0.0
    %1007 = vmatprep.subr.mxu0 0.0
    %1008 = vmatpush1.msra.mxu0 0.0
    %1009 = vmatprep.subr.mxu0 0.0
    %1010 = vmatpush1.msra.mxu0 0.0
    %1011 = vmatprep.subr.mxu0 0.0
    %1012 = vmatpush1.msra.mxu0 0.0
    %1013 = vmatprep.subr.mxu0 0.0
    %1014 = vmatpush1.msra.mxu0 0.0
    %1015 = vmatprep.subr.mxu0 0.0
    %1016 = vmatpush1.msra.mxu0 0.0
    %1017 = vmatprep.subr.mxu0 0.0
    %1018 = vmatpush1.msra.mxu0 0.0
    %1019 = vmatprep.subr.mxu0 0.0
    %1020 = vmatpush1.msra.mxu0 0.0
    %1021 = vmatprep.subr.mxu0 %v50
    %1022 = vmatpush1.msra.mxu0 %v49
    %1023 = vmatprep.subr.mxu0 %v48
    %1024 = vmatpush1.msra.mxu0 %v47
    %1025 = vmatprep.subr.mxu0 %v46
    %1026 = vmatpush1.msra.mxu0 %v45
    %1027 = vmatprep.subr.mxu0 %v44
    %1028 = vmatpush1.msra.mxu0 %v43
    %1029 = vmatprep.subr.mxu0 0.0
    %1030 = vmatpush2.msra.mxu0 0.0
    %1031 = vmatprep.subr.mxu0 0.0
    %1032 = vmatpush2.msra.mxu0 0.0
    %1033 = vmatprep.subr.mxu0 0.0
    %1034 = vmatpush2.msra.mxu0 0.0
    %1035 = vmatprep.subr.mxu0 0.0
    %1036 = vmatpush2.msra.mxu0 0.0
    %1037 = vmatprep.subr.mxu0 0.0
    %1038 = vmatpush2.msra.mxu0 0.0
    %1039 = vmatprep.subr.mxu0 0.0
    %1040 = vmatpush2.msra.mxu0 0.0
    %1041 = vmatprep.subr.mxu0 0.0
    %1042 = vmatpush2.msra.mxu0 0.0
    %1043 = vmatprep.subr.mxu0 0.0
    %1044 = vmatpush2.msra.mxu0 0.0
    %1045 = vmatprep.subr.mxu0 0.0
    %1046 = vmatpush2.msra.mxu0 0.0
    %1047 = vmatprep.subr.mxu0 0.0
    %1048 = vmatpush2.msra.mxu0 0.0
    %1049 = vmatprep.subr.mxu0 0.0
    %1050 = vmatpush2.msra.mxu0 0.0
    %1051 = vmatprep.subr.mxu0 0.0
    %1052 = vmatpush2.msra.mxu0 0.0
    %1053 = vmatprep.subr.mxu0 0.0
    %1054 = vmatpush2.msra.mxu0 0.0
    %1055 = vmatprep.subr.mxu0 0.0
    %1056 = vmatpush2.msra.mxu0 0.0
    %1057 = vmatprep.subr.mxu0 0.0
    %1058 = vmatpush2.msra.mxu0 0.0
    %1059 = vmatprep.subr.mxu0 0.0
    %1060 = vmatpush2.msra.mxu0 0.0
    %1061 = vmatprep.mubr.f32.mxu0 0.0
    %1062 = vmatmul.mubr.f32.gmra.mxu0 %v995
    %v1063 = vpop.f32.mrf.mxu0
    %v1064 = vadd.f32 0.0, %v1063
    %v1065 = vpop.f32.mrf.mxu0
    %v1066 = vadd.f32 0.0, %v1065
    %1067 = vdwg.mxu0
    %v1068 = vadd.f32 %v1066, %v56
    %s1069 = scalar_lea.vmem %s7, 8
    %1070 = vst [vmem:[%s1069] sm:$0xff] %v1068
    %s1071 = scalar_lea.vmem %s2, 8
    %v1072 = vld [vmem:[%s1071] sm:$0xff]
    %s1073 = sld [smem:[#allocation2 + $0x1]]
    %p1074 = scmp.ne.s32.totalorder %s1073, 0
    // Predicated region
    $region34: #{_seq2seq_apply.1} parent=1 // pred_check
      %p1075 = pneg %p1074
    $region35: #{_seq2seq_apply.1} parent=1 // pred_check_branch
      %1077 = sbr.rel (%p1075) target = $region37
    $region36: #{_seq2seq_apply.1} parent=1 // pred_region
      _
    $region37: #{_seq2seq_apply.1} parent=1 // pred_fallthru
      _
    %p1078 = pneg %p1074
    // Predicated region
    $region38: #{_seq2seq_apply.1} parent=1 // pred_check
      _
    $region39: #{_seq2seq_apply.1} parent=1 // pred_check_branch
      %1080 = sbr.rel (%p1074) target = $region41
    $region40: #{_seq2seq_apply.1} parent=1 // pred_region
      %1081 = vmax.xlane.f32.xlu0 %v1068
      %v1082 = vpop.xlane.xlu0 %1081
      %vm1083 = vcmp.eq.f32.partialorder %v1068, %v1082
      %v1084 = vsel %vm1083, %v75, 128
      %v1085 = vand.u32 %v1084, 65535
      %v1086 = vshra.s32 %v1084, 16
      %v1087 = vcvt.s32.f32 %v1085
      %v1088 = vcvt.s32.f32 %v1086
      %1089 = vmin.xlane.f32.xlu0 %v1088
      %v1090 = vpop.xlane.xlu0 %1089
      %vm1091 = vcmp.eq.f32.partialorder %v1088, %v1090
      %v1092 = vsel %vm1091, %v1087, inf
      %1093 = vmin.xlane.f32.xlu0 %v1092
      %v1094 = vpop.xlane.xlu0 %1093
      %v1095 = vcvt.f32.s32 %v1094
      %v1096 = vcvt.f32.s32 %v1090
      %v1097 = vshll.u32 %v1096, 16
      %v1098 = vadd.s32 %v1097, %v1095
      %vm1099 = vcmp.eq.s32.totalorder %v75, %v1098
      %v1100 = vsel %vm1099, 1, 0
      %v1101 = vcvt.s32.f32 %v1100
      %1102 = vmatprep.subr.mxu0 0.0
      %1103 = vmatpush1.msra.mxu0 %v73
      %1104 = vmatprep.subr.mxu0 0.0
      %1105 = vmatpush1.msra.mxu0 %v72
      %1106 = vmatprep.subr.mxu0 0.0
      %1107 = vmatpush1.msra.mxu0 %v71
      %1108 = vmatprep.subr.mxu0 0.0
      %1109 = vmatpush1.msra.mxu0 %v70
      %1110 = vmatprep.subr.mxu0 0.0
      %1111 = vmatpush1.msra.mxu0 %v69
      %1112 = vmatprep.subr.mxu0 0.0
      %1113 = vmatpush1.msra.mxu0 %v68
      %1114 = vmatprep.subr.mxu0 0.0
      %1115 = vmatpush1.msra.mxu0 %v67
      %1116 = vmatprep.subr.mxu0 0.0
      %1117 = vmatpush1.msra.mxu0 %v66
      %1118 = vmatprep.subr.mxu0 0.0
      %1119 = vmatpush1.msra.mxu0 %v65
      %1120 = vmatprep.subr.mxu0 0.0
      %1121 = vmatpush1.msra.mxu0 %v64
      %1122 = vmatprep.subr.mxu0 0.0
      %1123 = vmatpush1.msra.mxu0 %v63
      %1124 = vmatprep.subr.mxu0 0.0
      %1125 = vmatpush1.msra.mxu0 %v62
      %1126 = vmatprep.subr.mxu0 0.0
      %1127 = vmatpush1.msra.mxu0 %v61
      %1128 = vmatprep.subr.mxu0 0.0
      %1129 = vmatpush1.msra.mxu0 %v60
      %1130 = vmatprep.subr.mxu0 0.0
      %1131 = vmatpush1.msra.mxu0 %v59
      %1132 = vmatprep.subr.mxu0 0.0
      %1133 = vmatpush1.msra.mxu0 %v58
      %1134 = vmatprep.subr.mxu0 0.0
      %1135 = vmatpush2.msra.mxu0 0.0
      %1136 = vmatprep.subr.mxu0 0.0
      %1137 = vmatpush2.msra.mxu0 0.0
      %1138 = vmatprep.subr.mxu0 0.0
      %1139 = vmatpush2.msra.mxu0 0.0
      %1140 = vmatprep.subr.mxu0 0.0
      %1141 = vmatpush2.msra.mxu0 0.0
      %1142 = vmatprep.subr.mxu0 0.0
      %1143 = vmatpush2.msra.mxu0 0.0
      %1144 = vmatprep.subr.mxu0 0.0
      %1145 = vmatpush2.msra.mxu0 0.0
      %1146 = vmatprep.subr.mxu0 0.0
      %1147 = vmatpush2.msra.mxu0 0.0
      %1148 = vmatprep.subr.mxu0 0.0
      %1149 = vmatpush2.msra.mxu0 0.0
      %1150 = vmatprep.subr.mxu0 0.0
      %1151 = vmatpush2.msra.mxu0 0.0
      %1152 = vmatprep.subr.mxu0 0.0
      %1153 = vmatpush2.msra.mxu0 0.0
      %1154 = vmatprep.subr.mxu0 0.0
      %1155 = vmatpush2.msra.mxu0 0.0
      %1156 = vmatprep.subr.mxu0 0.0
      %1157 = vmatpush2.msra.mxu0 0.0
      %1158 = vmatprep.subr.mxu0 0.0
      %1159 = vmatpush2.msra.mxu0 0.0
      %1160 = vmatprep.subr.mxu0 0.0
      %1161 = vmatpush2.msra.mxu0 0.0
      %1162 = vmatprep.subr.mxu0 0.0
      %1163 = vmatpush2.msra.mxu0 0.0
      %1164 = vmatprep.subr.mxu0 0.0
      %1165 = vmatpush2.msra.mxu0 0.0
      %1166 = vmatprep.mubr.f32.mxu0 0.0
      %1167 = vmatmul.mubr.f32.gmra.mxu0 %v1101
      %v1168 = vpop.f32.mrf.mxu0
      %v1169 = vadd.f32 0.0, %v1168
      %v1170 = vpop.f32.mrf.mxu0
      %1171 = vdwg.mxu0
    $region41: #{_seq2seq_apply.1} parent=1 // pred_fallthru
      %v1172 = vphi %v1072, %v1169
    %v1173 = vadd.f32 %v1172, %v1064
    %v1174 = vxor.u32 %v1173, 2147483648
    %v1175 = vmul.f32 %v1174, 1.442695
    %v1176 = vpow.pop %v1175
    %v1177 = vadd.f32 %v1176, 1.0
    %v1178 = vrcp.pop %v1177
    %v1179 = vmul.f32 1.0, %v1178
    %v1180 = vtanh.pop %v1173
    %v1181 = vmul.f32 %v1179, %v883
    %1183 = vrot.lane.b32.xlu0 %v1180, 64
    %v1184 = vpop.permute.xlu0 %1183
    %v1186 = vmul.f32 %v1179, %v1184
    %1188 = vrot.lane.b32.xlu0 %v1186, 32
    %v1189 = vpop.permute.xlu0 %1188
    %v1191 = vadd.f32 %v1181, %v1189
    %v1192 = vtanh.pop %v1191
    %1194 = vrot.lane.b32.xlu0 %v1192, 64
    %v1195 = vpop.permute.xlu0 %1194
    %v1197 = vmul.f32 %v1179, %v1195
    %1199 = vrot.lane.b32.xlu0 %v1197, 32
    %v1200 = vpop.permute.xlu0 %1199
    %v1201 = vsel %vm77, %v1200, 0
    %1203 = vmatprep.subr.mxu0 0.0
    %1204 = vmatpush1.msra.mxu0 0.0
    %1205 = vmatprep.subr.mxu0 0.0
    %1206 = vmatpush1.msra.mxu0 0.0
    %1207 = vmatprep.subr.mxu0 0.0
    %1208 = vmatpush1.msra.mxu0 0.0
    %1209 = vmatprep.subr.mxu0 0.0
    %1210 = vmatpush1.msra.mxu0 0.0
    %1211 = vmatprep.subr.mxu0 0.0
    %1212 = vmatpush1.msra.mxu0 0.0
    %1213 = vmatprep.subr.mxu0 0.0
    %1214 = vmatpush1.msra.mxu0 0.0
    %1215 = vmatprep.subr.mxu0 0.0
    %1216 = vmatpush1.msra.mxu0 0.0
    %1217 = vmatprep.subr.mxu0 0.0
    %1218 = vmatpush1.msra.mxu0 0.0
    %1219 = vmatprep.subr.mxu0 0.0
    %1220 = vmatpush1.msra.mxu0 0.0
    %1221 = vmatprep.subr.mxu0 0.0
    %1222 = vmatpush1.msra.mxu0 0.0
    %1223 = vmatprep.subr.mxu0 0.0
    %1224 = vmatpush1.msra.mxu0 0.0
    %1225 = vmatprep.subr.mxu0 0.0
    %1226 = vmatpush1.msra.mxu0 0.0
    %1227 = vmatprep.subr.mxu0 %v50
    %1228 = vmatpush1.msra.mxu0 %v49
    %1229 = vmatprep.subr.mxu0 %v48
    %1230 = vmatpush1.msra.mxu0 %v47
    %1231 = vmatprep.subr.mxu0 %v46
    %1232 = vmatpush1.msra.mxu0 %v45
    %1233 = vmatprep.subr.mxu0 %v44
    %1234 = vmatpush1.msra.mxu0 %v43
    %1235 = vmatprep.subr.mxu0 0.0
    %1236 = vmatpush2.msra.mxu0 0.0
    %1237 = vmatprep.subr.mxu0 0.0
    %1238 = vmatpush2.msra.mxu0 0.0
    %1239 = vmatprep.subr.mxu0 0.0
    %1240 = vmatpush2.msra.mxu0 0.0
    %1241 = vmatprep.subr.mxu0 0.0
    %1242 = vmatpush2.msra.mxu0 0.0
    %1243 = vmatprep.subr.mxu0 0.0
    %1244 = vmatpush2.msra.mxu0 0.0
    %1245 = vmatprep.subr.mxu0 0.0
    %1246 = vmatpush2.msra.mxu0 0.0
    %1247 = vmatprep.subr.mxu0 0.0
    %1248 = vmatpush2.msra.mxu0 0.0
    %1249 = vmatprep.subr.mxu0 0.0
    %1250 = vmatpush2.msra.mxu0 0.0
    %1251 = vmatprep.subr.mxu0 0.0
    %1252 = vmatpush2.msra.mxu0 0.0
    %1253 = vmatprep.subr.mxu0 0.0
    %1254 = vmatpush2.msra.mxu0 0.0
    %1255 = vmatprep.subr.mxu0 0.0
    %1256 = vmatpush2.msra.mxu0 0.0
    %1257 = vmatprep.subr.mxu0 0.0
    %1258 = vmatpush2.msra.mxu0 0.0
    %1259 = vmatprep.subr.mxu0 0.0
    %1260 = vmatpush2.msra.mxu0 0.0
    %1261 = vmatprep.subr.mxu0 0.0
    %1262 = vmatpush2.msra.mxu0 0.0
    %1263 = vmatprep.subr.mxu0 0.0
    %1264 = vmatpush2.msra.mxu0 0.0
    %1265 = vmatprep.subr.mxu0 0.0
    %1266 = vmatpush2.msra.mxu0 0.0
    %1267 = vmatprep.mubr.f32.mxu0 0.0
    %1268 = vmatmul.mubr.f32.gmra.mxu0 %v1201
    %v1269 = vpop.f32.mrf.mxu0
    %v1270 = vadd.f32 0.0, %v1269
    %v1271 = vpop.f32.mrf.mxu0
    %v1272 = vadd.f32 0.0, %v1271
    %1273 = vdwg.mxu0
    %v1274 = vadd.f32 %v1272, %v56
    %s1275 = scalar_lea.vmem %s7, 16
    %1276 = vst [vmem:[%s1275] sm:$0xff] %v1274
    %s1277 = scalar_lea.vmem %s2, 16
    %v1278 = vld [vmem:[%s1277] sm:$0xff]
    %s1279 = sld [smem:[#allocation2 + $0x2]]
    %p1280 = scmp.ne.s32.totalorder %s1279, 0
    // Predicated region
    $region42: #{_seq2seq_apply.1} parent=1 // pred_check
      %p1281 = pneg %p1280
    $region43: #{_seq2seq_apply.1} parent=1 // pred_check_branch
      %1283 = sbr.rel (%p1281) target = $region45
    $region44: #{_seq2seq_apply.1} parent=1 // pred_region
      _
    $region45: #{_seq2seq_apply.1} parent=1 // pred_fallthru
      _
    %p1284 = pneg %p1280
    // Predicated region
    $region46: #{_seq2seq_apply.1} parent=1 // pred_check
      _
    $region47: #{_seq2seq_apply.1} parent=1 // pred_check_branch
      %1286 = sbr.rel (%p1280) target = $region49
    $region48: #{_seq2seq_apply.1} parent=1 // pred_region
      %1287 = vmax.xlane.f32.xlu0 %v1274
      %v1288 = vpop.xlane.xlu0 %1287
      %vm1289 = vcmp.eq.f32.partialorder %v1274, %v1288
      %v1290 = vsel %vm1289, %v75, 128
      %v1291 = vand.u32 %v1290, 65535
      %v1292 = vshra.s32 %v1290, 16
      %v1293 = vcvt.s32.f32 %v1291
      %v1294 = vcvt.s32.f32 %v1292
      %1295 = vmin.xlane.f32.xlu0 %v1294
      %v1296 = vpop.xlane.xlu0 %1295
      %vm1297 = vcmp.eq.f32.partialorder %v1294, %v1296
      %v1298 = vsel %vm1297, %v1293, inf
      %1299 = vmin.xlane.f32.xlu0 %v1298
      %v1300 = vpop.xlane.xlu0 %1299
      %v1301 = vcvt.f32.s32 %v1300
      %v1302 = vcvt.f32.s32 %v1296
      %v1303 = vshll.u32 %v1302, 16
      %v1304 = vadd.s32 %v1303, %v1301
      %vm1305 = vcmp.eq.s32.totalorder %v75, %v1304
      %v1306 = vsel %vm1305, 1, 0
      %v1307 = vcvt.s32.f32 %v1306
      %1308 = vmatprep.subr.mxu0 0.0
      %1309 = vmatpush1.msra.mxu0 %v73
      %1310 = vmatprep.subr.mxu0 0.0
      %1311 = vmatpush1.msra.mxu0 %v72
      %1312 = vmatprep.subr.mxu0 0.0
      %1313 = vmatpush1.msra.mxu0 %v71
      %1314 = vmatprep.subr.mxu0 0.0
      %1315 = vmatpush1.msra.mxu0 %v70
      %1316 = vmatprep.subr.mxu0 0.0
      %1317 = vmatpush1.msra.mxu0 %v69
      %1318 = vmatprep.subr.mxu0 0.0
      %1319 = vmatpush1.msra.mxu0 %v68
      %1320 = vmatprep.subr.mxu0 0.0
      %1321 = vmatpush1.msra.mxu0 %v67
      %1322 = vmatprep.subr.mxu0 0.0
      %1323 = vmatpush1.msra.mxu0 %v66
      %1324 = vmatprep.subr.mxu0 0.0
      %1325 = vmatpush1.msra.mxu0 %v65
      %1326 = vmatprep.subr.mxu0 0.0
      %1327 = vmatpush1.msra.mxu0 %v64
      %1328 = vmatprep.subr.mxu0 0.0
      %1329 = vmatpush1.msra.mxu0 %v63
      %1330 = vmatprep.subr.mxu0 0.0
      %1331 = vmatpush1.msra.mxu0 %v62
      %1332 = vmatprep.subr.mxu0 0.0
      %1333 = vmatpush1.msra.mxu0 %v61
      %1334 = vmatprep.subr.mxu0 0.0
      %1335 = vmatpush1.msra.mxu0 %v60
      %1336 = vmatprep.subr.mxu0 0.0
      %1337 = vmatpush1.msra.mxu0 %v59
      %1338 = vmatprep.subr.mxu0 0.0
      %1339 = vmatpush1.msra.mxu0 %v58
      %1340 = vmatprep.subr.mxu0 0.0
      %1341 = vmatpush2.msra.mxu0 0.0
      %1342 = vmatprep.subr.mxu0 0.0
      %1343 = vmatpush2.msra.mxu0 0.0
      %1344 = vmatprep.subr.mxu0 0.0
      %1345 = vmatpush2.msra.mxu0 0.0
      %1346 = vmatprep.subr.mxu0 0.0
      %1347 = vmatpush2.msra.mxu0 0.0
      %1348 = vmatprep.subr.mxu0 0.0
      %1349 = vmatpush2.msra.mxu0 0.0
      %1350 = vmatprep.subr.mxu0 0.0
      %1351 = vmatpush2.msra.mxu0 0.0
      %1352 = vmatprep.subr.mxu0 0.0
      %1353 = vmatpush2.msra.mxu0 0.0
      %1354 = vmatprep.subr.mxu0 0.0
      %1355 = vmatpush2.msra.mxu0 0.0
      %1356 = vmatprep.subr.mxu0 0.0
      %1357 = vmatpush2.msra.mxu0 0.0
      %1358 = vmatprep.subr.mxu0 0.0
      %1359 = vmatpush2.msra.mxu0 0.0
      %1360 = vmatprep.subr.mxu0 0.0
      %1361 = vmatpush2.msra.mxu0 0.0
      %1362 = vmatprep.subr.mxu0 0.0
      %1363 = vmatpush2.msra.mxu0 0.0
      %1364 = vmatprep.subr.mxu0 0.0
      %1365 = vmatpush2.msra.mxu0 0.0
      %1366 = vmatprep.subr.mxu0 0.0
      %1367 = vmatpush2.msra.mxu0 0.0
      %1368 = vmatprep.subr.mxu0 0.0
      %1369 = vmatpush2.msra.mxu0 0.0
      %1370 = vmatprep.subr.mxu0 0.0
      %1371 = vmatpush2.msra.mxu0 0.0
      %1372 = vmatprep.mubr.f32.mxu0 0.0
      %1373 = vmatmul.mubr.f32.gmra.mxu0 %v1307
      %v1374 = vpop.f32.mrf.mxu0
      %v1375 = vadd.f32 0.0, %v1374
      %v1376 = vpop.f32.mrf.mxu0
      %1377 = vdwg.mxu0
    $region49: #{_seq2seq_apply.1} parent=1 // pred_fallthru
      %v1378 = vphi %v1278, %v1375
    %v1379 = vadd.f32 %v1378, %v1270
    %v1380 = vxor.u32 %v1379, 2147483648
    %v1381 = vmul.f32 %v1380, 1.442695
    %v1382 = vpow.pop %v1381
    %v1383 = vadd.f32 %v1382, 1.0
    %v1384 = vrcp.pop %v1383
    %v1385 = vmul.f32 1.0, %v1384
    %v1386 = vtanh.pop %v1379
    %v1387 = vmul.f32 %v1385, %v883
    %1389 = vrot.lane.b32.xlu0 %v1386, 64
    %v1390 = vpop.permute.xlu0 %1389
    %v1392 = vmul.f32 %v1385, %v1390
    %1394 = vrot.lane.b32.xlu0 %v1392, 32
    %v1395 = vpop.permute.xlu0 %1394
    %v1397 = vadd.f32 %v1387, %v1395
    %v1398 = vtanh.pop %v1397
    %1400 = vrot.lane.b32.xlu0 %v1398, 64
    %v1401 = vpop.permute.xlu0 %1400
    %v1403 = vmul.f32 %v1385, %v1401
    %1405 = vrot.lane.b32.xlu0 %v1403, 32
    %v1406 = vpop.permute.xlu0 %1405
    %v1407 = vsel %vm77, %v1406, 0
    %1409 = vmatprep.subr.mxu0 0.0
    %1410 = vmatpush1.msra.mxu0 0.0
    %1411 = vmatprep.subr.mxu0 0.0
    %1412 = vmatpush1.msra.mxu0 0.0
    %1413 = vmatprep.subr.mxu0 0.0
    %1414 = vmatpush1.msra.mxu0 0.0
    %1415 = vmatprep.subr.mxu0 0.0
    %1416 = vmatpush1.msra.mxu0 0.0
    %1417 = vmatprep.subr.mxu0 0.0
    %1418 = vmatpush1.msra.mxu0 0.0
    %1419 = vmatprep.subr.mxu0 0.0
    %1420 = vmatpush1.msra.mxu0 0.0
    %1421 = vmatprep.subr.mxu0 0.0
    %1422 = vmatpush1.msra.mxu0 0.0
    %1423 = vmatprep.subr.mxu0 0.0
    %1424 = vmatpush1.msra.mxu0 0.0
    %1425 = vmatprep.subr.mxu0 0.0
    %1426 = vmatpush1.msra.mxu0 0.0
    %1427 = vmatprep.subr.mxu0 0.0
    %1428 = vmatpush1.msra.mxu0 0.0
    %1429 = vmatprep.subr.mxu0 0.0
    %1430 = vmatpush1.msra.mxu0 0.0
    %1431 = vmatprep.subr.mxu0 0.0
    %1432 = vmatpush1.msra.mxu0 0.0
    %1433 = vmatprep.subr.mxu0 %v50
    %1434 = vmatpush1.msra.mxu0 %v49
    %1435 = vmatprep.subr.mxu0 %v48
    %1436 = vmatpush1.msra.mxu0 %v47
    %1437 = vmatprep.subr.mxu0 %v46
    %1438 = vmatpush1.msra.mxu0 %v45
    %1439 = vmatprep.subr.mxu0 %v44
    %1440 = vmatpush1.msra.mxu0 %v43
    %1441 = vmatprep.subr.mxu0 0.0
    %1442 = vmatpush2.msra.mxu0 0.0
    %1443 = vmatprep.subr.mxu0 0.0
    %1444 = vmatpush2.msra.mxu0 0.0
    %1445 = vmatprep.subr.mxu0 0.0
    %1446 = vmatpush2.msra.mxu0 0.0
    %1447 = vmatprep.subr.mxu0 0.0
    %1448 = vmatpush2.msra.mxu0 0.0
    %1449 = vmatprep.subr.mxu0 0.0
    %1450 = vmatpush2.msra.mxu0 0.0
    %1451 = vmatprep.subr.mxu0 0.0
    %1452 = vmatpush2.msra.mxu0 0.0
    %1453 = vmatprep.subr.mxu0 0.0
    %1454 = vmatpush2.msra.mxu0 0.0
    %1455 = vmatprep.subr.mxu0 0.0
    %1456 = vmatpush2.msra.mxu0 0.0
    %1457 = vmatprep.subr.mxu0 0.0
    %1458 = vmatpush2.msra.mxu0 0.0
    %1459 = vmatprep.subr.mxu0 0.0
    %1460 = vmatpush2.msra.mxu0 0.0
    %1461 = vmatprep.subr.mxu0 0.0
    %1462 = vmatpush2.msra.mxu0 0.0
    %1463 = vmatprep.subr.mxu0 0.0
    %1464 = vmatpush2.msra.mxu0 0.0
    %1465 = vmatprep.subr.mxu0 0.0
    %1466 = vmatpush2.msra.mxu0 0.0
    %1467 = vmatprep.subr.mxu0 0.0
    %1468 = vmatpush2.msra.mxu0 0.0
    %1469 = vmatprep.subr.mxu0 0.0
    %1470 = vmatpush2.msra.mxu0 0.0
    %1471 = vmatprep.subr.mxu0 0.0
    %1472 = vmatpush2.msra.mxu0 0.0
    %1473 = vmatprep.mubr.f32.mxu0 0.0
    %1474 = vmatmul.mubr.f32.gmra.mxu0 %v1407
    %v1475 = vpop.f32.mrf.mxu0
    %v1476 = vadd.f32 0.0, %v1475
    %v1477 = vpop.f32.mrf.mxu0
    %v1478 = vadd.f32 0.0, %v1477
    %1479 = vdwg.mxu0
    %v1480 = vadd.f32 %v1478, %v56
    %s1481 = scalar_lea.vmem %s7, 24
    %1482 = vst [vmem:[%s1481] sm:$0xff] %v1480
    %s1483 = scalar_lea.vmem %s2, 24
    %v1484 = vld [vmem:[%s1483] sm:$0xff]
    %s1485 = sld [smem:[#allocation2 + $0x3]]
    %p1486 = scmp.ne.s32.totalorder %s1485, 0
    // Predicated region
    $region50: #{_seq2seq_apply.1} parent=1 // pred_check
      %p1487 = pneg %p1486
    $region51: #{_seq2seq_apply.1} parent=1 // pred_check_branch
      %1489 = sbr.rel (%p1487) target = $region53
    $region52: #{_seq2seq_apply.1} parent=1 // pred_region
      _
    $region53: #{_seq2seq_apply.1} parent=1 // pred_fallthru
      _
    %p1490 = pneg %p1486
    // Predicated region
    $region54: #{_seq2seq_apply.1} parent=1 // pred_check
      _
    $region55: #{_seq2seq_apply.1} parent=1 // pred_check_branch
      %1492 = sbr.rel (%p1486) target = $region57
    $region56: #{_seq2seq_apply.1} parent=1 // pred_region
      %1493 = vmax.xlane.f32.xlu0 %v1480
      %v1494 = vpop.xlane.xlu0 %1493
      %vm1495 = vcmp.eq.f32.partialorder %v1480, %v1494
      %v1496 = vsel %vm1495, %v75, 128
      %v1497 = vand.u32 %v1496, 65535
      %v1498 = vshra.s32 %v1496, 16
      %v1499 = vcvt.s32.f32 %v1497
      %v1500 = vcvt.s32.f32 %v1498
      %1501 = vmin.xlane.f32.xlu0 %v1500
      %v1502 = vpop.xlane.xlu0 %1501
      %vm1503 = vcmp.eq.f32.partialorder %v1500, %v1502
      %v1504 = vsel %vm1503, %v1499, inf
      %1505 = vmin.xlane.f32.xlu0 %v1504
      %v1506 = vpop.xlane.xlu0 %1505
      %v1507 = vcvt.f32.s32 %v1506
      %v1508 = vcvt.f32.s32 %v1502
      %v1509 = vshll.u32 %v1508, 16
      %v1510 = vadd.s32 %v1509, %v1507
      %vm1511 = vcmp.eq.s32.totalorder %v75, %v1510
      %v1512 = vsel %vm1511, 1, 0
      %v1513 = vcvt.s32.f32 %v1512
      %1514 = vmatprep.subr.mxu0 0.0
      %1515 = vmatpush1.msra.mxu0 %v73
      %1516 = vmatprep.subr.mxu0 0.0
      %1517 = vmatpush1.msra.mxu0 %v72
      %1518 = vmatprep.subr.mxu0 0.0
      %1519 = vmatpush1.msra.mxu0 %v71
      %1520 = vmatprep.subr.mxu0 0.0
      %1521 = vmatpush1.msra.mxu0 %v70
      %1522 = vmatprep.subr.mxu0 0.0
      %1523 = vmatpush1.msra.mxu0 %v69
      %1524 = vmatprep.subr.mxu0 0.0
      %1525 = vmatpush1.msra.mxu0 %v68
      %1526 = vmatprep.subr.mxu0 0.0
      %1527 = vmatpush1.msra.mxu0 %v67
      %1528 = vmatprep.subr.mxu0 0.0
      %1529 = vmatpush1.msra.mxu0 %v66
      %1530 = vmatprep.subr.mxu0 0.0
      %1531 = vmatpush1.msra.mxu0 %v65
      %1532 = vmatprep.subr.mxu0 0.0
      %1533 = vmatpush1.msra.mxu0 %v64
      %1534 = vmatprep.subr.mxu0 0.0
      %1535 = vmatpush1.msra.mxu0 %v63
      %1536 = vmatprep.subr.mxu0 0.0
      %1537 = vmatpush1.msra.mxu0 %v62
      %1538 = vmatprep.subr.mxu0 0.0
      %1539 = vmatpush1.msra.mxu0 %v61
      %1540 = vmatprep.subr.mxu0 0.0
      %1541 = vmatpush1.msra.mxu0 %v60
      %1542 = vmatprep.subr.mxu0 0.0
      %1543 = vmatpush1.msra.mxu0 %v59
      %1544 = vmatprep.subr.mxu0 0.0
      %1545 = vmatpush1.msra.mxu0 %v58
      %1546 = vmatprep.subr.mxu0 0.0
      %1547 = vmatpush2.msra.mxu0 0.0
      %1548 = vmatprep.subr.mxu0 0.0
      %1549 = vmatpush2.msra.mxu0 0.0
      %1550 = vmatprep.subr.mxu0 0.0
      %1551 = vmatpush2.msra.mxu0 0.0
      %1552 = vmatprep.subr.mxu0 0.0
      %1553 = vmatpush2.msra.mxu0 0.0
      %1554 = vmatprep.subr.mxu0 0.0
      %1555 = vmatpush2.msra.mxu0 0.0
      %1556 = vmatprep.subr.mxu0 0.0
      %1557 = vmatpush2.msra.mxu0 0.0
      %1558 = vmatprep.subr.mxu0 0.0
      %1559 = vmatpush2.msra.mxu0 0.0
      %1560 = vmatprep.subr.mxu0 0.0
      %1561 = vmatpush2.msra.mxu0 0.0
      %1562 = vmatprep.subr.mxu0 0.0
      %1563 = vmatpush2.msra.mxu0 0.0
      %1564 = vmatprep.subr.mxu0 0.0
      %1565 = vmatpush2.msra.mxu0 0.0
      %1566 = vmatprep.subr.mxu0 0.0
      %1567 = vmatpush2.msra.mxu0 0.0
      %1568 = vmatprep.subr.mxu0 0.0
      %1569 = vmatpush2.msra.mxu0 0.0
      %1570 = vmatprep.subr.mxu0 0.0
      %1571 = vmatpush2.msra.mxu0 0.0
      %1572 = vmatprep.subr.mxu0 0.0
      %1573 = vmatpush2.msra.mxu0 0.0
      %1574 = vmatprep.subr.mxu0 0.0
      %1575 = vmatpush2.msra.mxu0 0.0
      %1576 = vmatprep.subr.mxu0 0.0
      %1577 = vmatpush2.msra.mxu0 0.0
      %1578 = vmatprep.mubr.f32.mxu0 0.0
      %1579 = vmatmul.mubr.f32.gmra.mxu0 %v1513
      %v1580 = vpop.f32.mrf.mxu0
      %v1581 = vadd.f32 0.0, %v1580
      %v1582 = vpop.f32.mrf.mxu0
      %1583 = vdwg.mxu0
    $region57: #{_seq2seq_apply.1} parent=1 // pred_fallthru
      %v1584 = vphi %v1484, %v1581
    %v1585 = vadd.f32 %v1584, %v1476
    %v1586 = vxor.u32 %v1585, 2147483648
    %v1587 = vmul.f32 %v1586, 1.442695
    %v1588 = vpow.pop %v1587
    %v1589 = vadd.f32 %v1588, 1.0
    %v1590 = vrcp.pop %v1589
    %v1591 = vmul.f32 1.0, %v1590
    %v1592 = vtanh.pop %v1585
    %v1593 = vmul.f32 %v1591, %v883
    %1595 = vrot.lane.b32.xlu0 %v1592, 64
    %v1596 = vpop.permute.xlu0 %1595
    %v1598 = vmul.f32 %v1591, %v1596
    %1600 = vrot.lane.b32.xlu0 %v1598, 32
    %v1601 = vpop.permute.xlu0 %1600
    %v1603 = vadd.f32 %v1593, %v1601
    %v1604 = vtanh.pop %v1603
    %1606 = vrot.lane.b32.xlu0 %v1604, 64
    %v1607 = vpop.permute.xlu0 %1606
    %v1609 = vmul.f32 %v1591, %v1607
    %1611 = vrot.lane.b32.xlu0 %v1609, 32
    %v1612 = vpop.permute.xlu0 %1611
    %v1613 = vsel %vm77, %v1612, 0
    %1615 = vmatprep.subr.mxu0 0.0
    %1616 = vmatpush1.msra.mxu0 0.0
    %1617 = vmatprep.subr.mxu0 0.0
    %1618 = vmatpush1.msra.mxu0 0.0
    %1619 = vmatprep.subr.mxu0 0.0
    %1620 = vmatpush1.msra.mxu0 0.0
    %1621 = vmatprep.subr.mxu0 0.0
    %1622 = vmatpush1.msra.mxu0 0.0
    %1623 = vmatprep.subr.mxu0 0.0
    %1624 = vmatpush1.msra.mxu0 0.0
    %1625 = vmatprep.subr.mxu0 0.0
    %1626 = vmatpush1.msra.mxu0 0.0
    %1627 = vmatprep.subr.mxu0 0.0
    %1628 = vmatpush1.msra.mxu0 0.0
    %1629 = vmatprep.subr.mxu0 0.0
    %1630 = vmatpush1.msra.mxu0 0.0
    %1631 = vmatprep.subr.mxu0 0.0
    %1632 = vmatpush1.msra.mxu0 0.0
    %1633 = vmatprep.subr.mxu0 0.0
    %1634 = vmatpush1.msra.mxu0 0.0
    %1635 = vmatprep.subr.mxu0 0.0
    %1636 = vmatpush1.msra.mxu0 0.0
    %1637 = vmatprep.subr.mxu0 0.0
    %1638 = vmatpush1.msra.mxu0 0.0
    %1639 = vmatprep.subr.mxu0 %v50
    %1640 = vmatpush1.msra.mxu0 %v49
    %1641 = vmatprep.subr.mxu0 %v48
    %1642 = vmatpush1.msra.mxu0 %v47
    %1643 = vmatprep.subr.mxu0 %v46
    %1644 = vmatpush1.msra.mxu0 %v45
    %1645 = vmatprep.subr.mxu0 %v44
    %1646 = vmatpush1.msra.mxu0 %v43
    %1647 = vmatprep.subr.mxu0 0.0
    %1648 = vmatpush2.msra.mxu0 0.0
    %1649 = vmatprep.subr.mxu0 0.0
    %1650 = vmatpush2.msra.mxu0 0.0
    %1651 = vmatprep.subr.mxu0 0.0
    %1652 = vmatpush2.msra.mxu0 0.0
    %1653 = vmatprep.subr.mxu0 0.0
    %1654 = vmatpush2.msra.mxu0 0.0
    %1655 = vmatprep.subr.mxu0 0.0
    %1656 = vmatpush2.msra.mxu0 0.0
    %1657 = vmatprep.subr.mxu0 0.0
    %1658 = vmatpush2.msra.mxu0 0.0
    %1659 = vmatprep.subr.mxu0 0.0
    %1660 = vmatpush2.msra.mxu0 0.0
    %1661 = vmatprep.subr.mxu0 0.0
    %1662 = vmatpush2.msra.mxu0 0.0
    %1663 = vmatprep.subr.mxu0 0.0
    %1664 = vmatpush2.msra.mxu0 0.0
    %1665 = vmatprep.subr.mxu0 0.0
    %1666 = vmatpush2.msra.mxu0 0.0
    %1667 = vmatprep.subr.mxu0 0.0
    %1668 = vmatpush2.msra.mxu0 0.0
    %1669 = vmatprep.subr.mxu0 0.0
    %1670 = vmatpush2.msra.mxu0 0.0
    %1671 = vmatprep.subr.mxu0 0.0
    %1672 = vmatpush2.msra.mxu0 0.0
    %1673 = vmatprep.subr.mxu0 0.0
    %1674 = vmatpush2.msra.mxu0 0.0
    %1675 = vmatprep.subr.mxu0 0.0
    %1676 = vmatpush2.msra.mxu0 0.0
    %1677 = vmatprep.subr.mxu0 0.0
    %1678 = vmatpush2.msra.mxu0 0.0
    %1679 = vmatprep.mubr.f32.mxu0 0.0
    %1680 = vmatmul.mubr.f32.gmra.mxu0 %v1613
    %v1681 = vpop.f32.mrf.mxu0
    %v1682 = vadd.f32 0.0, %v1681
    %v1683 = vpop.f32.mrf.mxu0
    %v1684 = vadd.f32 0.0, %v1683
    %1685 = vdwg.mxu0
    %v1686 = vadd.f32 %v1684, %v56
    %s1687 = scalar_lea.vmem %s7, 32
    %1688 = vst [vmem:[%s1687] sm:$0xff] %v1686
    %s1689 = scalar_lea.vmem %s2, 32
    %v1690 = vld [vmem:[%s1689] sm:$0xff]
    %s1691 = sld [smem:[#allocation2 + $0x4]]
    %p1692 = scmp.ne.s32.totalorder %s1691, 0
    // Predicated region
    $region58: #{_seq2seq_apply.1} parent=1 // pred_check
      %p1693 = pneg %p1692
    $region59: #{_seq2seq_apply.1} parent=1 // pred_check_branch
      %1695 = sbr.rel (%p1693) target = $region61
    $region60: #{_seq2seq_apply.1} parent=1 // pred_region
      _
    $region61: #{_seq2seq_apply.1} parent=1 // pred_fallthru
      _
    %p1696 = pneg %p1692
    // Predicated region
    $region62: #{_seq2seq_apply.1} parent=1 // pred_check
      _
    $region63: #{_seq2seq_apply.1} parent=1 // pred_check_branch
      %1698 = sbr.rel (%p1692) target = $region65
    $region64: #{_seq2seq_apply.1} parent=1 // pred_region
      %1699 = vmax.xlane.f32.xlu0 %v1686
      %v1700 = vpop.xlane.xlu0 %1699
      %vm1701 = vcmp.eq.f32.partialorder %v1686, %v1700
      %v1702 = vsel %vm1701, %v75, 128
      %v1703 = vand.u32 %v1702, 65535
      %v1704 = vshra.s32 %v1702, 16
      %v1705 = vcvt.s32.f32 %v1703
      %v1706 = vcvt.s32.f32 %v1704
      %1707 = vmin.xlane.f32.xlu0 %v1706
      %v1708 = vpop.xlane.xlu0 %1707
      %vm1709 = vcmp.eq.f32.partialorder %v1706, %v1708
      %v1710 = vsel %vm1709, %v1705, inf
      %1711 = vmin.xlane.f32.xlu0 %v1710
      %v1712 = vpop.xlane.xlu0 %1711
      %v1713 = vcvt.f32.s32 %v1712
      %v1714 = vcvt.f32.s32 %v1708
      %v1715 = vshll.u32 %v1714, 16
      %v1716 = vadd.s32 %v1715, %v1713
      %vm1717 = vcmp.eq.s32.totalorder %v75, %v1716
      %v1718 = vsel %vm1717, 1, 0
      %v1719 = vcvt.s32.f32 %v1718
      %1720 = vmatprep.subr.mxu0 0.0
      %1721 = vmatpush1.msra.mxu0 %v73
      %1722 = vmatprep.subr.mxu0 0.0
      %1723 = vmatpush1.msra.mxu0 %v72
      %1724 = vmatprep.subr.mxu0 0.0
      %1725 = vmatpush1.msra.mxu0 %v71
      %1726 = vmatprep.subr.mxu0 0.0
      %1727 = vmatpush1.msra.mxu0 %v70
      %1728 = vmatprep.subr.mxu0 0.0
      %1729 = vmatpush1.msra.mxu0 %v69
      %1730 = vmatprep.subr.mxu0 0.0
      %1731 = vmatpush1.msra.mxu0 %v68
      %1732 = vmatprep.subr.mxu0 0.0
      %1733 = vmatpush1.msra.mxu0 %v67
      %1734 = vmatprep.subr.mxu0 0.0
      %1735 = vmatpush1.msra.mxu0 %v66
      %1736 = vmatprep.subr.mxu0 0.0
      %1737 = vmatpush1.msra.mxu0 %v65
      %1738 = vmatprep.subr.mxu0 0.0
      %1739 = vmatpush1.msra.mxu0 %v64
      %1740 = vmatprep.subr.mxu0 0.0
      %1741 = vmatpush1.msra.mxu0 %v63
      %1742 = vmatprep.subr.mxu0 0.0
      %1743 = vmatpush1.msra.mxu0 %v62
      %1744 = vmatprep.subr.mxu0 0.0
      %1745 = vmatpush1.msra.mxu0 %v61
      %1746 = vmatprep.subr.mxu0 0.0
      %1747 = vmatpush1.msra.mxu0 %v60
      %1748 = vmatprep.subr.mxu0 0.0
      %1749 = vmatpush1.msra.mxu0 %v59
      %1750 = vmatprep.subr.mxu0 0.0
      %1751 = vmatpush1.msra.mxu0 %v58
      %1752 = vmatprep.subr.mxu0 0.0
      %1753 = vmatpush2.msra.mxu0 0.0
      %1754 = vmatprep.subr.mxu0 0.0
      %1755 = vmatpush2.msra.mxu0 0.0
      %1756 = vmatprep.subr.mxu0 0.0
      %1757 = vmatpush2.msra.mxu0 0.0
      %1758 = vmatprep.subr.mxu0 0.0
      %1759 = vmatpush2.msra.mxu0 0.0
      %1760 = vmatprep.subr.mxu0 0.0
      %1761 = vmatpush2.msra.mxu0 0.0
      %1762 = vmatprep.subr.mxu0 0.0
      %1763 = vmatpush2.msra.mxu0 0.0
      %1764 = vmatprep.subr.mxu0 0.0
      %1765 = vmatpush2.msra.mxu0 0.0
      %1766 = vmatprep.subr.mxu0 0.0
      %1767 = vmatpush2.msra.mxu0 0.0
      %1768 = vmatprep.subr.mxu0 0.0
      %1769 = vmatpush2.msra.mxu0 0.0
      %1770 = vmatprep.subr.mxu0 0.0
      %1771 = vmatpush2.msra.mxu0 0.0
      %1772 = vmatprep.subr.mxu0 0.0
      %1773 = vmatpush2.msra.mxu0 0.0
      %1774 = vmatprep.subr.mxu0 0.0
      %1775 = vmatpush2.msra.mxu0 0.0
      %1776 = vmatprep.subr.mxu0 0.0
      %1777 = vmatpush2.msra.mxu0 0.0
      %1778 = vmatprep.subr.mxu0 0.0
      %1779 = vmatpush2.msra.mxu0 0.0
      %1780 = vmatprep.subr.mxu0 0.0
      %1781 = vmatpush2.msra.mxu0 0.0
      %1782 = vmatprep.subr.mxu0 0.0
      %1783 = vmatpush2.msra.mxu0 0.0
      %1784 = vmatprep.mubr.f32.mxu0 0.0
      %1785 = vmatmul.mubr.f32.gmra.mxu0 %v1719
      %v1786 = vpop.f32.mrf.mxu0
      %v1787 = vadd.f32 0.0, %v1786
      %v1788 = vpop.f32.mrf.mxu0
      %1789 = vdwg.mxu0
    $region65: #{_seq2seq_apply.1} parent=1 // pred_fallthru
      %v1790 = vphi %v1690, %v1787
    %v1791 = vadd.f32 %v1790, %v1682
    %v1792 = vxor.u32 %v1791, 2147483648
    %v1793 = vmul.f32 %v1792, 1.442695
    %v1794 = vpow.pop %v1793
    %v1795 = vadd.f32 %v1794, 1.0
    %v1796 = vrcp.pop %v1795
    %v1797 = vmul.f32 1.0, %v1796
    %v1798 = vtanh.pop %v1791
    %v1799 = vmul.f32 %v1797, %v883
    %1801 = vrot.lane.b32.xlu0 %v1798, 64
    %v1802 = vpop.permute.xlu0 %1801
    %v1804 = vmul.f32 %v1797, %v1802
    %1806 = vrot.lane.b32.xlu0 %v1804, 32
    %v1807 = vpop.permute.xlu0 %1806
    %v1809 = vadd.f32 %v1799, %v1807
    %v1810 = vtanh.pop %v1809
    %1812 = vrot.lane.b32.xlu0 %v1810, 64
    %v1813 = vpop.permute.xlu0 %1812
    %v1815 = vmul.f32 %v1797, %v1813
    %1817 = vrot.lane.b32.xlu0 %v1815, 32
    %v1818 = vpop.permute.xlu0 %1817
    %v1819 = vsel %vm77, %v1818, 0
    %1821 = vmatprep.subr.mxu0 0.0
    %1822 = vmatpush1.msra.mxu0 0.0
    %1823 = vmatprep.subr.mxu0 0.0
    %1824 = vmatpush1.msra.mxu0 0.0
    %1825 = vmatprep.subr.mxu0 0.0
    %1826 = vmatpush1.msra.mxu0 0.0
    %1827 = vmatprep.subr.mxu0 0.0
    %1828 = vmatpush1.msra.mxu0 0.0
    %1829 = vmatprep.subr.mxu0 0.0
    %1830 = vmatpush1.msra.mxu0 0.0
    %1831 = vmatprep.subr.mxu0 0.0
    %1832 = vmatpush1.msra.mxu0 0.0
    %1833 = vmatprep.subr.mxu0 0.0
    %1834 = vmatpush1.msra.mxu0 0.0
    %1835 = vmatprep.subr.mxu0 0.0
    %1836 = vmatpush1.msra.mxu0 0.0
    %1837 = vmatprep.subr.mxu0 0.0
    %1838 = vmatpush1.msra.mxu0 0.0
    %1839 = vmatprep.subr.mxu0 0.0
    %1840 = vmatpush1.msra.mxu0 0.0
    %1841 = vmatprep.subr.mxu0 0.0
    %1842 = vmatpush1.msra.mxu0 0.0
    %1843 = vmatprep.subr.mxu0 0.0
    %1844 = vmatpush1.msra.mxu0 0.0
    %1845 = vmatprep.subr.mxu0 %v50
    %1846 = vmatpush1.msra.mxu0 %v49
    %1847 = vmatprep.subr.mxu0 %v48
    %1848 = vmatpush1.msra.mxu0 %v47
    %1849 = vmatprep.subr.mxu0 %v46
    %1850 = vmatpush1.msra.mxu0 %v45
    %1851 = vmatprep.subr.mxu0 %v44
    %1852 = vmatpush1.msra.mxu0 %v43
    %1853 = vmatprep.subr.mxu0 0.0
    %1854 = vmatpush2.msra.mxu0 0.0
    %1855 = vmatprep.subr.mxu0 0.0
    %1856 = vmatpush2.msra.mxu0 0.0
    %1857 = vmatprep.subr.mxu0 0.0
    %1858 = vmatpush2.msra.mxu0 0.0
    %1859 = vmatprep.subr.mxu0 0.0
    %1860 = vmatpush2.msra.mxu0 0.0
    %1861 = vmatprep.subr.mxu0 0.0
    %1862 = vmatpush2.msra.mxu0 0.0
    %1863 = vmatprep.subr.mxu0 0.0
    %1864 = vmatpush2.msra.mxu0 0.0
    %1865 = vmatprep.subr.mxu0 0.0
    %1866 = vmatpush2.msra.mxu0 0.0
    %1867 = vmatprep.subr.mxu0 0.0
    %1868 = vmatpush2.msra.mxu0 0.0
    %1869 = vmatprep.subr.mxu0 0.0
    %1870 = vmatpush2.msra.mxu0 0.0
    %1871 = vmatprep.subr.mxu0 0.0
    %1872 = vmatpush2.msra.mxu0 0.0
    %1873 = vmatprep.subr.mxu0 0.0
    %1874 = vmatpush2.msra.mxu0 0.0
    %1875 = vmatprep.subr.mxu0 0.0
    %1876 = vmatpush2.msra.mxu0 0.0
    %1877 = vmatprep.subr.mxu0 0.0
    %1878 = vmatpush2.msra.mxu0 0.0
    %1879 = vmatprep.subr.mxu0 0.0
    %1880 = vmatpush2.msra.mxu0 0.0
    %1881 = vmatprep.subr.mxu0 0.0
    %1882 = vmatpush2.msra.mxu0 0.0
    %1883 = vmatprep.subr.mxu0 0.0
    %1884 = vmatpush2.msra.mxu0 0.0
    %1885 = vmatprep.mubr.f32.mxu0 0.0
    %1886 = vmatmul.mubr.f32.gmra.mxu0 %v1819
    %v1887 = vpop.f32.mrf.mxu0
    %v1888 = vadd.f32 0.0, %v1887
    %v1889 = vpop.f32.mrf.mxu0
    %v1890 = vadd.f32 0.0, %v1889
    %1891 = vdwg.mxu0
    %v1892 = vadd.f32 %v1890, %v56
    %s1893 = scalar_lea.vmem %s7, 40
    %1894 = vst [vmem:[%s1893] sm:$0xff] %v1892
    %s1895 = scalar_lea.vmem %s2, 40
    %v1896 = vld [vmem:[%s1895] sm:$0xff]
    %s1897 = sld [smem:[#allocation2 + $0x5]]
    %p1898 = scmp.ne.s32.totalorder %s1897, 0
    // Predicated region
    $region66: #{_seq2seq_apply.1} parent=1 // pred_check
      %p1899 = pneg %p1898
    $region67: #{_seq2seq_apply.1} parent=1 // pred_check_branch
      %1901 = sbr.rel (%p1899) target = $region69
    $region68: #{_seq2seq_apply.1} parent=1 // pred_region
      _
    $region69: #{_seq2seq_apply.1} parent=1 // pred_fallthru
      _
    %p1902 = pneg %p1898
    // Predicated region
    $region70: #{_seq2seq_apply.1} parent=1 // pred_check
      _
    $region71: #{_seq2seq_apply.1} parent=1 // pred_check_branch
      %1904 = sbr.rel (%p1898) target = $region73
    $region72: #{_seq2seq_apply.1} parent=1 // pred_region
      %1905 = vmax.xlane.f32.xlu0 %v1892
      %v1906 = vpop.xlane.xlu0 %1905
      %vm1907 = vcmp.eq.f32.partialorder %v1892, %v1906
      %v1908 = vsel %vm1907, %v75, 128
      %v1909 = vand.u32 %v1908, 65535
      %v1910 = vshra.s32 %v1908, 16
      %v1911 = vcvt.s32.f32 %v1909
      %v1912 = vcvt.s32.f32 %v1910
      %1913 = vmin.xlane.f32.xlu0 %v1912
      %v1914 = vpop.xlane.xlu0 %1913
      %vm1915 = vcmp.eq.f32.partialorder %v1912, %v1914
      %v1916 = vsel %vm1915, %v1911, inf
      %1917 = vmin.xlane.f32.xlu0 %v1916
      %v1918 = vpop.xlane.xlu0 %1917
      %v1919 = vcvt.f32.s32 %v1918
      %v1920 = vcvt.f32.s32 %v1914
      %v1921 = vshll.u32 %v1920, 16
      %v1922 = vadd.s32 %v1921, %v1919
      %vm1923 = vcmp.eq.s32.totalorder %v75, %v1922
      %v1924 = vsel %vm1923, 1, 0
      %v1925 = vcvt.s32.f32 %v1924
      %1926 = vmatprep.subr.mxu0 0.0
      %1927 = vmatpush1.msra.mxu0 %v73
      %1928 = vmatprep.subr.mxu0 0.0
      %1929 = vmatpush1.msra.mxu0 %v72
      %1930 = vmatprep.subr.mxu0 0.0
      %1931 = vmatpush1.msra.mxu0 %v71
      %1932 = vmatprep.subr.mxu0 0.0
      %1933 = vmatpush1.msra.mxu0 %v70
      %1934 = vmatprep.subr.mxu0 0.0
      %1935 = vmatpush1.msra.mxu0 %v69
      %1936 = vmatprep.subr.mxu0 0.0
      %1937 = vmatpush1.msra.mxu0 %v68
      %1938 = vmatprep.subr.mxu0 0.0
      %1939 = vmatpush1.msra.mxu0 %v67
      %1940 = vmatprep.subr.mxu0 0.0
      %1941 = vmatpush1.msra.mxu0 %v66
      %1942 = vmatprep.subr.mxu0 0.0
      %1943 = vmatpush1.msra.mxu0 %v65
      %1944 = vmatprep.subr.mxu0 0.0
      %1945 = vmatpush1.msra.mxu0 %v64
      %1946 = vmatprep.subr.mxu0 0.0
      %1947 = vmatpush1.msra.mxu0 %v63
      %1948 = vmatprep.subr.mxu0 0.0
      %1949 = vmatpush1.msra.mxu0 %v62
      %1950 = vmatprep.subr.mxu0 0.0
      %1951 = vmatpush1.msra.mxu0 %v61
      %1952 = vmatprep.subr.mxu0 0.0
      %1953 = vmatpush1.msra.mxu0 %v60
      %1954 = vmatprep.subr.mxu0 0.0
      %1955 = vmatpush1.msra.mxu0 %v59
      %1956 = vmatprep.subr.mxu0 0.0
      %1957 = vmatpush1.msra.mxu0 %v58
      %1958 = vmatprep.subr.mxu0 0.0
      %1959 = vmatpush2.msra.mxu0 0.0
      %1960 = vmatprep.subr.mxu0 0.0
      %1961 = vmatpush2.msra.mxu0 0.0
      %1962 = vmatprep.subr.mxu0 0.0
      %1963 = vmatpush2.msra.mxu0 0.0
      %1964 = vmatprep.subr.mxu0 0.0
      %1965 = vmatpush2.msra.mxu0 0.0
      %1966 = vmatprep.subr.mxu0 0.0
      %1967 = vmatpush2.msra.mxu0 0.0
      %1968 = vmatprep.subr.mxu0 0.0
      %1969 = vmatpush2.msra.mxu0 0.0
      %1970 = vmatprep.subr.mxu0 0.0
      %1971 = vmatpush2.msra.mxu0 0.0
      %1972 = vmatprep.subr.mxu0 0.0
      %1973 = vmatpush2.msra.mxu0 0.0
      %1974 = vmatprep.subr.mxu0 0.0
      %1975 = vmatpush2.msra.mxu0 0.0
      %1976 = vmatprep.subr.mxu0 0.0
      %1977 = vmatpush2.msra.mxu0 0.0
      %1978 = vmatprep.subr.mxu0 0.0
      %1979 = vmatpush2.msra.mxu0 0.0
      %1980 = vmatprep.subr.mxu0 0.0
      %1981 = vmatpush2.msra.mxu0 0.0
      %1982 = vmatprep.subr.mxu0 0.0
      %1983 = vmatpush2.msra.mxu0 0.0
      %1984 = vmatprep.subr.mxu0 0.0
      %1985 = vmatpush2.msra.mxu0 0.0
      %1986 = vmatprep.subr.mxu0 0.0
      %1987 = vmatpush2.msra.mxu0 0.0
      %1988 = vmatprep.subr.mxu0 0.0
      %1989 = vmatpush2.msra.mxu0 0.0
      %1990 = vmatprep.mubr.f32.mxu0 0.0
      %1991 = vmatmul.mubr.f32.gmra.mxu0 %v1925
      %v1992 = vpop.f32.mrf.mxu0
      %v1993 = vadd.f32 0.0, %v1992
      %v1994 = vpop.f32.mrf.mxu0
      %1995 = vdwg.mxu0
    $region73: #{_seq2seq_apply.1} parent=1 // pred_fallthru
      %v1996 = vphi %v1896, %v1993
    %v1997 = vadd.f32 %v1996, %v1888
    %v1998 = vxor.u32 %v1997, 2147483648
    %v1999 = vmul.f32 %v1998, 1.442695
    %v2000 = vpow.pop %v1999
    %v2001 = vadd.f32 %v2000, 1.0
    %v2002 = vrcp.pop %v2001
    %v2003 = vmul.f32 1.0, %v2002
    %v2004 = vtanh.pop %v1997
    %v2005 = vmul.f32 %v2003, %v883
    %2007 = vrot.lane.b32.xlu0 %v2004, 64
    %v2008 = vpop.permute.xlu0 %2007
    %v2010 = vmul.f32 %v2003, %v2008
    %2012 = vrot.lane.b32.xlu0 %v2010, 32
    %v2013 = vpop.permute.xlu0 %2012
    %v2015 = vadd.f32 %v2005, %v2013
    %v2016 = vtanh.pop %v2015
    %2018 = vrot.lane.b32.xlu0 %v2016, 64
    %v2019 = vpop.permute.xlu0 %2018
    %v2021 = vmul.f32 %v2003, %v2019
    %2023 = vrot.lane.b32.xlu0 %v2021, 32
    %v2024 = vpop.permute.xlu0 %2023
    %v2025 = vsel %vm77, %v2024, 0
    %2027 = vmatprep.subr.mxu0 0.0
    %2028 = vmatpush1.msra.mxu0 0.0
    %2029 = vmatprep.subr.mxu0 0.0
    %2030 = vmatpush1.msra.mxu0 0.0
    %2031 = vmatprep.subr.mxu0 0.0
    %2032 = vmatpush1.msra.mxu0 0.0
    %2033 = vmatprep.subr.mxu0 0.0
    %2034 = vmatpush1.msra.mxu0 0.0
    %2035 = vmatprep.subr.mxu0 0.0
    %2036 = vmatpush1.msra.mxu0 0.0
    %2037 = vmatprep.subr.mxu0 0.0
    %2038 = vmatpush1.msra.mxu0 0.0
    %2039 = vmatprep.subr.mxu0 0.0
    %2040 = vmatpush1.msra.mxu0 0.0
    %2041 = vmatprep.subr.mxu0 0.0
    %2042 = vmatpush1.msra.mxu0 0.0
    %2043 = vmatprep.subr.mxu0 0.0
    %2044 = vmatpush1.msra.mxu0 0.0
    %2045 = vmatprep.subr.mxu0 0.0
    %2046 = vmatpush1.msra.mxu0 0.0
    %2047 = vmatprep.subr.mxu0 0.0
    %2048 = vmatpush1.msra.mxu0 0.0
    %2049 = vmatprep.subr.mxu0 0.0
    %2050 = vmatpush1.msra.mxu0 0.0
    %2051 = vmatprep.subr.mxu0 %v50
    %2052 = vmatpush1.msra.mxu0 %v49
    %2053 = vmatprep.subr.mxu0 %v48
    %2054 = vmatpush1.msra.mxu0 %v47
    %2055 = vmatprep.subr.mxu0 %v46
    %2056 = vmatpush1.msra.mxu0 %v45
    %2057 = vmatprep.subr.mxu0 %v44
    %2058 = vmatpush1.msra.mxu0 %v43
    %2059 = vmatprep.subr.mxu0 0.0
    %2060 = vmatpush2.msra.mxu0 0.0
    %2061 = vmatprep.subr.mxu0 0.0
    %2062 = vmatpush2.msra.mxu0 0.0
    %2063 = vmatprep.subr.mxu0 0.0
    %2064 = vmatpush2.msra.mxu0 0.0
    %2065 = vmatprep.subr.mxu0 0.0
    %2066 = vmatpush2.msra.mxu0 0.0
    %2067 = vmatprep.subr.mxu0 0.0
    %2068 = vmatpush2.msra.mxu0 0.0
    %2069 = vmatprep.subr.mxu0 0.0
    %2070 = vmatpush2.msra.mxu0 0.0
    %2071 = vmatprep.subr.mxu0 0.0
    %2072 = vmatpush2.msra.mxu0 0.0
    %2073 = vmatprep.subr.mxu0 0.0
    %2074 = vmatpush2.msra.mxu0 0.0
    %2075 = vmatprep.subr.mxu0 0.0
    %2076 = vmatpush2.msra.mxu0 0.0
    %2077 = vmatprep.subr.mxu0 0.0
    %2078 = vmatpush2.msra.mxu0 0.0
    %2079 = vmatprep.subr.mxu0 0.0
    %2080 = vmatpush2.msra.mxu0 0.0
    %2081 = vmatprep.subr.mxu0 0.0
    %2082 = vmatpush2.msra.mxu0 0.0
    %2083 = vmatprep.subr.mxu0 0.0
    %2084 = vmatpush2.msra.mxu0 0.0
    %2085 = vmatprep.subr.mxu0 0.0
    %2086 = vmatpush2.msra.mxu0 0.0
    %2087 = vmatprep.subr.mxu0 0.0
    %2088 = vmatpush2.msra.mxu0 0.0
    %2089 = vmatprep.subr.mxu0 0.0
    %2090 = vmatpush2.msra.mxu0 0.0
    %2091 = vmatprep.mubr.f32.mxu0 0.0
    %2092 = vmatmul.mubr.f32.gmra.mxu0 %v2025
    %v2093 = vpop.f32.mrf.mxu0
    %v2094 = vadd.f32 0.0, %v2093
    %v2095 = vpop.f32.mrf.mxu0
    %v2096 = vadd.f32 0.0, %v2095
    %2097 = vdwg.mxu0
    %v2098 = vadd.f32 %v2096, %v56
    %s2099 = scalar_lea.vmem %s7, 48
    %2100 = vst [vmem:[%s2099] sm:$0xff] %v2098
    %s2101 = scalar_lea.vmem %s2, 48
    %v2102 = vld [vmem:[%s2101] sm:$0xff]
    %s2103 = sld [smem:[#allocation2 + $0x6]]
    %p2104 = scmp.ne.s32.totalorder %s2103, 0
    // Predicated region
    $region74: #{_seq2seq_apply.1} parent=1 // pred_check
      %p2105 = pneg %p2104
    $region75: #{_seq2seq_apply.1} parent=1 // pred_check_branch
      %2107 = sbr.rel (%p2105) target = $region77
    $region76: #{_seq2seq_apply.1} parent=1 // pred_region
      _
    $region77: #{_seq2seq_apply.1} parent=1 // pred_fallthru
      _
    %p2108 = pneg %p2104
    // Predicated region
    $region78: #{_seq2seq_apply.1} parent=1 // pred_check
      _
    $region79: #{_seq2seq_apply.1} parent=1 // pred_check_branch
      %2110 = sbr.rel (%p2104) target = $region81
    $region80: #{_seq2seq_apply.1} parent=1 // pred_region
      %2111 = vmax.xlane.f32.xlu0 %v2098
      %v2112 = vpop.xlane.xlu0 %2111
      %vm2113 = vcmp.eq.f32.partialorder %v2098, %v2112
      %v2114 = vsel %vm2113, %v75, 128
      %v2115 = vand.u32 %v2114, 65535
      %v2116 = vshra.s32 %v2114, 16
      %v2117 = vcvt.s32.f32 %v2115
      %v2118 = vcvt.s32.f32 %v2116
      %2119 = vmin.xlane.f32.xlu0 %v2118
      %v2120 = vpop.xlane.xlu0 %2119
      %vm2121 = vcmp.eq.f32.partialorder %v2118, %v2120
      %v2122 = vsel %vm2121, %v2117, inf
      %2123 = vmin.xlane.f32.xlu0 %v2122
      %v2124 = vpop.xlane.xlu0 %2123
      %v2125 = vcvt.f32.s32 %v2124
      %v2126 = vcvt.f32.s32 %v2120
      %v2127 = vshll.u32 %v2126, 16
      %v2128 = vadd.s32 %v2127, %v2125
      %vm2129 = vcmp.eq.s32.totalorder %v75, %v2128
      %v2130 = vsel %vm2129, 1, 0
      %v2131 = vcvt.s32.f32 %v2130
      %2132 = vmatprep.subr.mxu0 0.0
      %2133 = vmatpush1.msra.mxu0 %v73
      %2134 = vmatprep.subr.mxu0 0.0
      %2135 = vmatpush1.msra.mxu0 %v72
      %2136 = vmatprep.subr.mxu0 0.0
      %2137 = vmatpush1.msra.mxu0 %v71
      %2138 = vmatprep.subr.mxu0 0.0
      %2139 = vmatpush1.msra.mxu0 %v70
      %2140 = vmatprep.subr.mxu0 0.0
      %2141 = vmatpush1.msra.mxu0 %v69
      %2142 = vmatprep.subr.mxu0 0.0
      %2143 = vmatpush1.msra.mxu0 %v68
      %2144 = vmatprep.subr.mxu0 0.0
      %2145 = vmatpush1.msra.mxu0 %v67
      %2146 = vmatprep.subr.mxu0 0.0
      %2147 = vmatpush1.msra.mxu0 %v66
      %2148 = vmatprep.subr.mxu0 0.0
      %2149 = vmatpush1.msra.mxu0 %v65
      %2150 = vmatprep.subr.mxu0 0.0
      %2151 = vmatpush1.msra.mxu0 %v64
      %2152 = vmatprep.subr.mxu0 0.0
      %2153 = vmatpush1.msra.mxu0 %v63
      %2154 = vmatprep.subr.mxu0 0.0
      %2155 = vmatpush1.msra.mxu0 %v62
      %2156 = vmatprep.subr.mxu0 0.0
      %2157 = vmatpush1.msra.mxu0 %v61
      %2158 = vmatprep.subr.mxu0 0.0
      %2159 = vmatpush1.msra.mxu0 %v60
      %2160 = vmatprep.subr.mxu0 0.0
      %2161 = vmatpush1.msra.mxu0 %v59
      %2162 = vmatprep.subr.mxu0 0.0
      %2163 = vmatpush1.msra.mxu0 %v58
      %2164 = vmatprep.subr.mxu0 0.0
      %2165 = vmatpush2.msra.mxu0 0.0
      %2166 = vmatprep.subr.mxu0 0.0
      %2167 = vmatpush2.msra.mxu0 0.0
      %2168 = vmatprep.subr.mxu0 0.0
      %2169 = vmatpush2.msra.mxu0 0.0
      %2170 = vmatprep.subr.mxu0 0.0
      %2171 = vmatpush2.msra.mxu0 0.0
      %2172 = vmatprep.subr.mxu0 0.0
      %2173 = vmatpush2.msra.mxu0 0.0
      %2174 = vmatprep.subr.mxu0 0.0
      %2175 = vmatpush2.msra.mxu0 0.0
      %2176 = vmatprep.subr.mxu0 0.0
      %2177 = vmatpush2.msra.mxu0 0.0
      %2178 = vmatprep.subr.mxu0 0.0
      %2179 = vmatpush2.msra.mxu0 0.0
      %2180 = vmatprep.subr.mxu0 0.0
      %2181 = vmatpush2.msra.mxu0 0.0
      %2182 = vmatprep.subr.mxu0 0.0
      %2183 = vmatpush2.msra.mxu0 0.0
      %2184 = vmatprep.subr.mxu0 0.0
      %2185 = vmatpush2.msra.mxu0 0.0
      %2186 = vmatprep.subr.mxu0 0.0
      %2187 = vmatpush2.msra.mxu0 0.0
      %2188 = vmatprep.subr.mxu0 0.0
      %2189 = vmatpush2.msra.mxu0 0.0
      %2190 = vmatprep.subr.mxu0 0.0
      %2191 = vmatpush2.msra.mxu0 0.0
      %2192 = vmatprep.subr.mxu0 0.0
      %2193 = vmatpush2.msra.mxu0 0.0
      %2194 = vmatprep.subr.mxu0 0.0
      %2195 = vmatpush2.msra.mxu0 0.0
      %2196 = vmatprep.mubr.f32.mxu0 0.0
      %2197 = vmatmul.mubr.f32.gmra.mxu0 %v2131
      %v2198 = vpop.f32.mrf.mxu0
      %v2199 = vadd.f32 0.0, %v2198
      %v2200 = vpop.f32.mrf.mxu0
      %2201 = vdwg.mxu0
    $region81: #{_seq2seq_apply.1} parent=1 // pred_fallthru
      %v2202 = vphi %v2102, %v2199
    %v2203 = vadd.f32 %v2202, %v2094
    %v2204 = vxor.u32 %v2203, 2147483648
    %v2205 = vmul.f32 %v2204, 1.442695
    %v2206 = vpow.pop %v2205
    %v2207 = vadd.f32 %v2206, 1.0
    %v2208 = vrcp.pop %v2207
    %v2209 = vmul.f32 1.0, %v2208
    %v2210 = vtanh.pop %v2203
    %v2211 = vmul.f32 %v2209, %v883
    %2213 = vrot.lane.b32.xlu0 %v2210, 64
    %v2214 = vpop.permute.xlu0 %2213
    %v2216 = vmul.f32 %v2209, %v2214
    %2218 = vrot.lane.b32.xlu0 %v2216, 32
    %v2219 = vpop.permute.xlu0 %2218
    %v2221 = vadd.f32 %v2211, %v2219
    %v2222 = vtanh.pop %v2221
    %2224 = vrot.lane.b32.xlu0 %v2222, 64
    %v2225 = vpop.permute.xlu0 %2224
    %v2227 = vmul.f32 %v2209, %v2225
    %2229 = vrot.lane.b32.xlu0 %v2227, 32
    %v2230 = vpop.permute.xlu0 %2229
    %v2231 = vsel %vm77, %v2230, 0
    %2233 = vmatprep.subr.mxu0 0.0
    %2234 = vmatpush1.msra.mxu0 0.0
    %2235 = vmatprep.subr.mxu0 0.0
    %2236 = vmatpush1.msra.mxu0 0.0
    %2237 = vmatprep.subr.mxu0 0.0
    %2238 = vmatpush1.msra.mxu0 0.0
    %2239 = vmatprep.subr.mxu0 0.0
    %2240 = vmatpush1.msra.mxu0 0.0
    %2241 = vmatprep.subr.mxu0 0.0
    %2242 = vmatpush1.msra.mxu0 0.0
    %2243 = vmatprep.subr.mxu0 0.0
    %2244 = vmatpush1.msra.mxu0 0.0
    %2245 = vmatprep.subr.mxu0 0.0
    %2246 = vmatpush1.msra.mxu0 0.0
    %2247 = vmatprep.subr.mxu0 0.0
    %2248 = vmatpush1.msra.mxu0 0.0
    %2249 = vmatprep.subr.mxu0 0.0
    %2250 = vmatpush1.msra.mxu0 0.0
    %2251 = vmatprep.subr.mxu0 0.0
    %2252 = vmatpush1.msra.mxu0 0.0
    %2253 = vmatprep.subr.mxu0 0.0
    %2254 = vmatpush1.msra.mxu0 0.0
    %2255 = vmatprep.subr.mxu0 0.0
    %2256 = vmatpush1.msra.mxu0 0.0
    %2257 = vmatprep.subr.mxu0 %v50
    %2258 = vmatpush1.msra.mxu0 %v49
    %2259 = vmatprep.subr.mxu0 %v48
    %2260 = vmatpush1.msra.mxu0 %v47
    %2261 = vmatprep.subr.mxu0 %v46
    %2262 = vmatpush1.msra.mxu0 %v45
    %2263 = vmatprep.subr.mxu0 %v44
    %2264 = vmatpush1.msra.mxu0 %v43
    %2265 = vmatprep.subr.mxu0 0.0
    %2266 = vmatpush2.msra.mxu0 0.0
    %2267 = vmatprep.subr.mxu0 0.0
    %2268 = vmatpush2.msra.mxu0 0.0
    %2269 = vmatprep.subr.mxu0 0.0
    %2270 = vmatpush2.msra.mxu0 0.0
    %2271 = vmatprep.subr.mxu0 0.0
    %2272 = vmatpush2.msra.mxu0 0.0
    %2273 = vmatprep.subr.mxu0 0.0
    %2274 = vmatpush2.msra.mxu0 0.0
    %2275 = vmatprep.subr.mxu0 0.0
    %2276 = vmatpush2.msra.mxu0 0.0
    %2277 = vmatprep.subr.mxu0 0.0
    %2278 = vmatpush2.msra.mxu0 0.0
    %2279 = vmatprep.subr.mxu0 0.0
    %2280 = vmatpush2.msra.mxu0 0.0
    %2281 = vmatprep.subr.mxu0 0.0
    %2282 = vmatpush2.msra.mxu0 0.0
    %2283 = vmatprep.subr.mxu0 0.0
    %2284 = vmatpush2.msra.mxu0 0.0
    %2285 = vmatprep.subr.mxu0 0.0
    %2286 = vmatpush2.msra.mxu0 0.0
    %2287 = vmatprep.subr.mxu0 0.0
    %2288 = vmatpush2.msra.mxu0 0.0
    %2289 = vmatprep.subr.mxu0 0.0
    %2290 = vmatpush2.msra.mxu0 0.0
    %2291 = vmatprep.subr.mxu0 0.0
    %2292 = vmatpush2.msra.mxu0 0.0
    %2293 = vmatprep.subr.mxu0 0.0
    %2294 = vmatpush2.msra.mxu0 0.0
    %2295 = vmatprep.subr.mxu0 0.0
    %2296 = vmatpush2.msra.mxu0 0.0
    %2297 = vmatprep.mubr.f32.mxu0 0.0
    %2298 = vmatmul.mubr.f32.gmra.mxu0 %v2231
    %v2299 = vpop.f32.mrf.mxu0
    %v2300 = vpop.f32.mrf.mxu0
    %v2301 = vadd.f32 0.0, %v2300
    %2302 = vdwg.mxu0
    %v2303 = vadd.f32 %v2301, %v56
    %s2304 = scalar_lea.vmem %s7, 56
    %2305 = vst [vmem:[%s2304] sm:$0xff] %v2303
    // Predicated region
    $region82: #{_seq2seq_apply.1} parent=1 // pred_check
      _
    $region83: #{_seq2seq_apply.1} parent=1 // pred_check_branch
      %2307 = sbr.rel (0) target = $region85
    $region84: #{_seq2seq_apply.1} parent=1 // pred_region
      _
    $region85: #{_seq2seq_apply.1} parent=1 // pred_fallthru
      _
    // Predicated region
    $region86: #{_seq2seq_apply.1} parent=1 // pred_check
      _
    $region87: #{_seq2seq_apply.1} parent=1 // pred_check_branch
      %2309 = sbr.rel (0) target = $region89
    $region88: #{_seq2seq_apply.1} parent=1 // pred_region
      _
    $region89: #{_seq2seq_apply.1} parent=1 // pred_fallthru
      _
    %2310 = vsyncpa [#allocation3], 1

</llo_original>
